<compile_context>
chip_gen: v7x
topology: tpu7x:2x2x1
jax: 0.10.0
libtpu: 0.0.40
codegen_flags: <defaults>
</compile_context>

<pallas_src>
import jax
import jax.numpy as jnp
import numpy as np
from jax import lax
from jax.experimental import pallas as pl
from jax.experimental.pallas import tpu as pltpu

LANES = 128                 # ratings per chunk (one lane-width of outputs)
MAX_CHUNKS_PER_TILE = 8     # chunks per grid step (one sublane-width of rows)


def _round_up(x, m):
    return (x + m - 1) // m * m


def _recommender_kernel(u_idx_ref, m_idx_ref,    # (1, C, 128) int32, VMEM
                        ue_t_ref, me_t_ref,      # (ea_pad, N_pad) f32, VMEM (transposed, bias-augmented)
                        out_ref):                # (1, C, 128) f32
    n_users_pad = ue_t_ref.shape[1]
    n_movies_pad = me_t_ref.shape[1]
    chunks = out_ref.shape[1]

    # Loop-invariant table loads (tables stay resident; constant index map).
    ue_t = ue_t_ref[...]
    me_t = me_t_ref[...]

    # Static loop over the chunks of this tile. Each chunk is fully batched:
    # two MXU one-hot gathers, one elementwise multiply, one sublane reduction,
    # one lane-dense (1, 128) store. No per-row work remains.
    for c in range(chunks):
        u_idx = u_idx_ref[0, pl.ds(c, 1), :]     # (1, 128) int32
        m_idx = m_idx_ref[0, pl.ds(c, 1), :]

        # One-hot gather on the MXU: onehot[n, r] = (n == idx[r]).
        u_oh = (lax.broadcasted_iota(jnp.int32, (n_users_pad, LANES), 0)
                == u_idx).astype(jnp.float32)                     # (Nu_pad, 128)
        m_oh = (lax.broadcasted_iota(jnp.int32, (n_movies_pad, LANES), 0)
                == m_idx).astype(jnp.float32)                     # (Nm_pad, 128)

        gu = jnp.dot(ue_t, u_oh, preferred_element_type=jnp.float32)  # (ea_pad, 128)
        gm = jnp.dot(me_t, m_oh, preferred_element_type=jnp.float32)  # (ea_pad, 128)

        # Dot product + biases (bias columns are folded into the tables), clamp.
        col = jnp.sum(gu * gm, axis=0, keepdims=True)             # (1, 128) lane-dense
        out_ref[0, pl.ds(c, 1), :] = jnp.clip(col, 0.0, 5.0)


def recommender_forward(user_idx, movie_idx,
                        user_emb, movie_emb,
                        user_bias, movie_bias):
    """clamp(sum(U[u]*M[m], -1) + b_u[u] + b_m[m], 0, 5); returns shape (B,)."""
    B = int(user_idx.shape[0])
    num_users, emb = user_emb.shape
    num_movies, _ = movie_emb.shape
    f32 = jnp.float32

    ea = emb + 2                      # embedding + two bias-folding columns
    ea_pad = _round_up(ea, 8)         # sublane multiple
    nu_pad = _round_up(num_users, LANES)
    nm_pad = _round_up(num_movies, LANES)

    # Transposed, bias-augmented, zero-padded tables (one-time wrapper cost).
    #   user column n:  [u_0..u_{E-1}, 1,   b_u[n], 0...]
    #   movie column n: [m_0..m_{E-1}, b_m[n], 1,   0...]
    # so sum over the augmented axis of (u * m) == u.m + b_m + b_u.
    user_aug_t = jnp.zeros((ea_pad, nu_pad), f32)
    user_aug_t = user_aug_t.at[:emb, :num_users].set(user_emb.T.astype(f32))
    user_aug_t = user_aug_t.at[emb, :num_users].set(1.0)
    user_aug_t = user_aug_t.at[emb + 1, :num_users].set(user_bias.reshape(-1).astype(f32))

    movie_aug_t = jnp.zeros((ea_pad, nm_pad), f32)
    movie_aug_t = movie_aug_t.at[:emb, :num_movies].set(movie_emb.T.astype(f32))
    movie_aug_t = movie_aug_t.at[emb, :num_movies].set(movie_bias.reshape(-1).astype(f32))
    movie_aug_t = movie_aug_t.at[emb + 1, :num_movies].set(1.0)

    # Clip untrusted ids (nn.Embedding would raise; padded table columns are zero,
    # so even unclipped ids < N_pad would just produce a 0-clamped rating).
    u_idx = jnp.clip(user_idx.astype(jnp.int32), 0, num_users - 1)
    m_idx = jnp.clip(movie_idx.astype(jnp.int32), 0, num_movies - 1)

    # Tile sizing: 128-rating chunks, up to 8 chunks (1024 ratings) per grid step;
    # shrink chunks_per_tile for small batches so the "parallel" grid axis has
    # >= 2 steps (v7x shards it across its two TensorCores).
    n_chunks = -(-B // LANES)
    chunks_per_tile = int(min(MAX_CHUNKS_PER_TILE, max(1, (n_chunks + 1) // 2)))
    n_tiles = -(-n_chunks // chunks_per_tile)
    b_pad = n_tiles * chunks_per_tile * LANES
    if b_pad != B:
        # Padded tail rows gather row 0; computed then dropped below.
        u_idx = jnp.pad(u_idx, (0, b_pad - B))
        m_idx = jnp.pad(m_idx, (0, b_pad - B))
    u_idx = u_idx.reshape(n_tiles, chunks_per_tile, LANES)
    m_idx = m_idx.reshape(n_tiles, chunks_per_tile, LANES)

    # Explicit VMEM budget (tables are double-buffered by default even with a
    # constant index map; plus per-tile index/output blocks and one-hot scratch).
    # 32 MiB is ample here and valid on every generation (v5e default is 16 MiB).
    # TODO(synk): for production-sized tables (esp. v7x's 64 MiB VMEM) single-buffer
    # the resident tables (pipeline_mode=pl.Buffered(1)) and/or keep them in HBM
    # (memory_space=pl.ANY) with a double-buffered DMA row-gather; bf16 tables are
    # a further 2x VMEM lever if the tolerance is relaxed.
    vmem_limit = 32 * 1024 * 1024

    out = pl.pallas_call(
        _recommender_kernel,
        out_shape=jax.ShapeDtypeStruct((n_tiles, chunks_per_tile, LANES), f32),
        grid_spec=pltpu.PrefetchScalarGridSpec(
            num_scalar_prefetch=0,
            grid=(n_tiles,),
            in_specs=[
                pl.BlockSpec((1, chunks_per_tile, LANES), lambda i: (i, 0, 0)),
                pl.BlockSpec((1, chunks_per_tile, LANES), lambda i: (i, 0, 0)),
                # Full (augmented, transposed) tables resident in VMEM; constant
                # index map so they are fetched once and reused by every grid step.
                pl.BlockSpec((ea_pad, nu_pad), lambda i: (0, 0)),
                pl.BlockSpec((ea_pad, nm_pad), lambda i: (0, 0)),
            ],
            out_specs=pl.BlockSpec((1, chunks_per_tile, LANES),
                                   lambda i: (i, 0, 0)),
        ),
        compiler_params=pltpu.CompilerParams(
            dimension_semantics=("parallel",),   # v7x: tiles sharded across both TCs
            vmem_limit_bytes=vmem_limit,
        ),
    )(u_idx, m_idx, user_aug_t, movie_aug_t)

    # out[i, c, l] = rating of batch row (i*chunks_per_tile + c)*128 + l,
    # i.e. already batch order after a flat reshape.
    return out.reshape(-1)[:B]


if __name__ == "__main__":
    # Small, deterministic synthetic configuration. batch is deliberately NOT a
    # multiple of the tile so padding and a multi-step grid are both exercised.
    num_users, num_movies, embedding_size = 300, 500, 32
    batch = 1200

    key = jax.random.PRNGKey(0)
    k_ue, k_me, k_ub, k_mb, k_ui, k_mi = jax.random.split(key, 6)

    # nn.Embedding default init: N(0, 1)
    user_emb = jax.random.normal(k_ue, (num_users, embedding_size), jnp.float32)
    movie_emb = jax.random.normal(k_me, (num_movies, embedding_size), jnp.float32)
    user_bias = jax.random.normal(k_ub, (num_users,), jnp.float32)
    movie_bias = jax.random.normal(k_mb, (num_movies,), jnp.float32)

    user_idx = jax.random.randint(k_ui, (batch,), 0, num_users, jnp.int32)
    movie_idx = jax.random.randint(k_mi, (batch,), 0, num_movies, jnp.int32)

    rating = recommender_forward(user_idx, movie_idx,
                                 user_emb, movie_emb,
                                 user_bias, movie_bias)
    rating = jax.block_until_ready(rating)

    # Pure-JAX reference of the PyTorch forward.
    ref = jnp.clip(
        jnp.sum(user_emb[user_idx] * movie_emb[movie_idx], axis=1)
        + user_bias[user_idx] + movie_bias[movie_idx],
        0.0, 5.0)

    np.testing.assert_allclose(np.asarray(rating), np.asarray(ref),
                               rtol=1e-5, atol=1e-5)
    print("KERNEL_OK")
</pallas_src>

<mosaic_0001>
module attributes {stable_mosaic.version = 11 : i64} {
  func.func @_recommender_kernel(%arg0: i32, %arg1: memref<1x5x128xi32, #tpu.memory_space<vmem>>, %arg2: memref<1x5x128xi32, #tpu.memory_space<vmem>>, %arg3: memref<40x384xf32, #tpu.memory_space<vmem>>, %arg4: memref<40x512xf32, #tpu.memory_space<vmem>>, %arg5: memref<1x5x128xf32, #tpu.memory_space<vmem>>) attributes {dimension_semantics = [#tpu.dimension_semantics<parallel>], iteration_bounds = array<i64: 2>, scalar_prefetch = 0 : i64, scratch_operands = 0 : i64, tpu.core_type = #tpu.core_type<tc>, window_params = [{transform_indices = @transform_0, window_bounds = array<i64: 1, 5, 128>}, {transform_indices = @transform_1, window_bounds = array<i64: 1, 5, 128>}, {pipeline_mode = #tpu.pipeline_mode<synchronous>, transform_indices = @transform_2, window_bounds = array<i64: 40, 384>}, {pipeline_mode = #tpu.pipeline_mode<synchronous>, transform_indices = @transform_3, window_bounds = array<i64: 40, 512>}, {transform_indices = @transform_4, window_bounds = array<i64: 1, 5, 128>}]} {
    %c0 = arith.constant 0 : index
    %c0_0 = arith.constant 0 : index
    %0 = vector.load %arg3[%c0, %c0_0] : memref<40x384xf32, #tpu.memory_space<vmem>>, vector<40x384xf32>
    %c0_1 = arith.constant 0 : index
    %c0_2 = arith.constant 0 : index
    %1 = vector.load %arg4[%c0_1, %c0_2] : memref<40x512xf32, #tpu.memory_space<vmem>>, vector<40x512xf32>
    %c0_3 = arith.constant 0 : index
    %c0_4 = arith.constant 0 : index
    %c0_5 = arith.constant 0 : index
    %2 = vector.load %arg1[%c0_3, %c0_4, %c0_5] : memref<1x5x128xi32, #tpu.memory_space<vmem>>, vector<1x1x128xi32>
    %3 = vector.shape_cast %2 : vector<1x1x128xi32> to vector<1x128xi32>
    %c0_6 = arith.constant 0 : index
    %c0_7 = arith.constant 0 : index
    %c0_8 = arith.constant 0 : index
    %4 = vector.load %arg2[%c0_6, %c0_7, %c0_8] : memref<1x5x128xi32, #tpu.memory_space<vmem>>, vector<1x1x128xi32>
    %5 = vector.shape_cast %4 : vector<1x1x128xi32> to vector<1x128xi32>
    %6 = tpu.iota {dimensions = array<i32: 0>} : vector<384x128xi32>
    %7 = vector.broadcast %3 : vector<1x128xi32> to vector<384x128xi32>
    %8 = arith.cmpi eq, %6, %7 : vector<384x128xi32>
    %9 = arith.extui %8 : vector<384x128xi1> to vector<384x128xi32>
    %10 = arith.sitofp %9 : vector<384x128xi32> to vector<384x128xf32>
    %11 = tpu.iota {dimensions = array<i32: 0>} : vector<512x128xi32>
    %12 = vector.broadcast %5 : vector<1x128xi32> to vector<512x128xi32>
    %13 = arith.cmpi eq, %11, %12 : vector<512x128xi32>
    %14 = arith.extui %13 : vector<512x128xi1> to vector<512x128xi32>
    %15 = arith.sitofp %14 : vector<512x128xi32> to vector<512x128xf32>
    %cst = arith.constant dense<0.000000e+00> : vector<40x128xf32>
    %16 = tpu.matmul %0, %10, %cst {dimension_numbers = #tpu.dot_dimension_numbers<[1], [0], [0], [1], [0, 0, 1, 1], [], []>} : vector<40x384xf32>, vector<384x128xf32>, vector<40x128xf32> -> vector<40x128xf32>
    %cst_9 = arith.constant dense<0.000000e+00> : vector<40x128xf32>
    %17 = tpu.matmul %1, %15, %cst_9 {dimension_numbers = #tpu.dot_dimension_numbers<[1], [0], [0], [1], [0, 0, 1, 1], [], []>} : vector<40x512xf32>, vector<512x128xf32>, vector<40x128xf32> -> vector<40x128xf32>
    %18 = arith.mulf %16, %17 : vector<40x128xf32>
    %cst_10 = arith.constant dense<0.000000e+00> : vector<128xf32>
    %19 = vector.multi_reduction <add>, %18, %cst_10 [0] : vector<40x128xf32> to vector<128xf32>
    %20 = vector.shape_cast %19 : vector<128xf32> to vector<1x128xf32>
    %cst_11 = arith.constant 0.000000e+00 : f32
    %cst_12 = arith.constant 5.000000e+00 : f32
    %21 = vector.broadcast %cst_11 : f32 to vector<1x128xf32>
    %22 = arith.maximumf %21, %20 : vector<1x128xf32>
    %23 = vector.broadcast %cst_12 : f32 to vector<1x128xf32>
    %24 = arith.minimumf %23, %22 : vector<1x128xf32>
    %c0_13 = arith.constant 0 : index
    %c0_14 = arith.constant 0 : index
    %c0_15 = arith.constant 0 : index
    %25 = vector.load %arg5[%c0_13, %c0_14, %c0_15] : memref<1x5x128xf32, #tpu.memory_space<vmem>>, vector<1x1x128xf32>
    %26 = vector.shape_cast %25 : vector<1x1x128xf32> to vector<1x128xf32>
    %27 = vector.shape_cast %24 : vector<1x128xf32> to vector<1x1x128xf32>
    tpu.vector_store %arg5[%c0_13, %c0_14, %c0_15], %27 {strides = array<i32>} : memref<1x5x128xf32, #tpu.memory_space<vmem>>, vector<1x1x128xf32>,
    %c0_16 = arith.constant 0 : index
    %c1 = arith.constant 1 : index
    %c0_17 = arith.constant 0 : index
    %28 = vector.load %arg1[%c0_16, %c1, %c0_17] : memref<1x5x128xi32, #tpu.memory_space<vmem>>, vector<1x1x128xi32>
    %29 = vector.shape_cast %28 : vector<1x1x128xi32> to vector<1x128xi32>
    %c0_18 = arith.constant 0 : index
    %c1_19 = arith.constant 1 : index
    %c0_20 = arith.constant 0 : index
    %30 = vector.load %arg2[%c0_18, %c1_19, %c0_20] : memref<1x5x128xi32, #tpu.memory_space<vmem>>, vector<1x1x128xi32>
    %31 = vector.shape_cast %30 : vector<1x1x128xi32> to vector<1x128xi32>
    %32 = tpu.iota {dimensions = array<i32: 0>} : vector<384x128xi32>
    %33 = vector.broadcast %29 : vector<1x128xi32> to vector<384x128xi32>
    %34 = arith.cmpi eq, %32, %33 : vector<384x128xi32>
    %35 = arith.extui %34 : vector<384x128xi1> to vector<384x128xi32>
    %36 = arith.sitofp %35 : vector<384x128xi32> to vector<384x128xf32>
    %37 = tpu.iota {dimensions = array<i32: 0>} : vector<512x128xi32>
    %38 = vector.broadcast %31 : vector<1x128xi32> to vector<512x128xi32>
    %39 = arith.cmpi eq, %37, %38 : vector<512x128xi32>
    %40 = arith.extui %39 : vector<512x128xi1> to vector<512x128xi32>
    %41 = arith.sitofp %40 : vector<512x128xi32> to vector<512x128xf32>
    %cst_21 = arith.constant dense<0.000000e+00> : vector<40x128xf32>
    %42 = tpu.matmul %0, %36, %cst_21 {dimension_numbers = #tpu.dot_dimension_numbers<[1], [0], [0], [1], [0, 0, 1, 1], [], []>} : vector<40x384xf32>, vector<384x128xf32>, vector<40x128xf32> -> vector<40x128xf32>
    %cst_22 = arith.constant dense<0.000000e+00> : vector<40x128xf32>
    %43 = tpu.matmul %1, %41, %cst_22 {dimension_numbers = #tpu.dot_dimension_numbers<[1], [0], [0], [1], [0, 0, 1, 1], [], []>} : vector<40x512xf32>, vector<512x128xf32>, vector<40x128xf32> -> vector<40x128xf32>
    %44 = arith.mulf %42, %43 : vector<40x128xf32>
    %cst_23 = arith.constant dense<0.000000e+00> : vector<128xf32>
    %45 = vector.multi_reduction <add>, %44, %cst_23 [0] : vector<40x128xf32> to vector<128xf32>
    %46 = vector.shape_cast %45 : vector<128xf32> to vector<1x128xf32>
    %cst_24 = arith.constant 0.000000e+00 : f32
    %cst_25 = arith.constant 5.000000e+00 : f32
    %47 = vector.broadcast %cst_24 : f32 to vector<1x128xf32>
    %48 = arith.maximumf %47, %46 : vector<1x128xf32>
    %49 = vector.broadcast %cst_25 : f32 to vector<1x128xf32>
    %50 = arith.minimumf %49, %48 : vector<1x128xf32>
    %c0_26 = arith.constant 0 : index
    %c1_27 = arith.constant 1 : index
    %c0_28 = arith.constant 0 : index
    %51 = vector.load %arg5[%c0_26, %c1_27, %c0_28] : memref<1x5x128xf32, #tpu.memory_space<vmem>>, vector<1x1x128xf32>
    %52 = vector.shape_cast %51 : vector<1x1x128xf32> to vector<1x128xf32>
    %53 = vector.shape_cast %50 : vector<1x128xf32> to vector<1x1x128xf32>
    tpu.vector_store %arg5[%c0_26, %c1_27, %c0_28], %53 {strides = array<i32>} : memref<1x5x128xf32, #tpu.memory_space<vmem>>, vector<1x1x128xf32>,
    %c0_29 = arith.constant 0 : index
    %c2 = arith.constant 2 : index
    %c0_30 = arith.constant 0 : index
    %54 = vector.load %arg1[%c0_29, %c2, %c0_30] : memref<1x5x128xi32, #tpu.memory_space<vmem>>, vector<1x1x128xi32>
    %55 = vector.shape_cast %54 : vector<1x1x128xi32> to vector<1x128xi32>
    %c0_31 = arith.constant 0 : index
    %c2_32 = arith.constant 2 : index
    %c0_33 = arith.constant 0 : index
    %56 = vector.load %arg2[%c0_31, %c2_32, %c0_33] : memref<1x5x128xi32, #tpu.memory_space<vmem>>, vector<1x1x128xi32>
    %57 = vector.shape_cast %56 : vector<1x1x128xi32> to vector<1x128xi32>
    %58 = tpu.iota {dimensions = array<i32: 0>} : vector<384x128xi32>
    %59 = vector.broadcast %55 : vector<1x128xi32> to vector<384x128xi32>
    %60 = arith.cmpi eq, %58, %59 : vector<384x128xi32>
    %61 = arith.extui %60 : vector<384x128xi1> to vector<384x128xi32>
    %62 = arith.sitofp %61 : vector<384x128xi32> to vector<384x128xf32>
    %63 = tpu.iota {dimensions = array<i32: 0>} : vector<512x128xi32>
    %64 = vector.broadcast %57 : vector<1x128xi32> to vector<512x128xi32>
    %65 = arith.cmpi eq, %63, %64 : vector<512x128xi32>
    %66 = arith.extui %65 : vector<512x128xi1> to vector<512x128xi32>
    %67 = arith.sitofp %66 : vector<512x128xi32> to vector<512x128xf32>
    %cst_34 = arith.constant dense<0.000000e+00> : vector<40x128xf32>
    %68 = tpu.matmul %0, %62, %cst_34 {dimension_numbers = #tpu.dot_dimension_numbers<[1], [0], [0], [1], [0, 0, 1, 1], [], []>} : vector<40x384xf32>, vector<384x128xf32>, vector<40x128xf32> -> vector<40x128xf32>
    %cst_35 = arith.constant dense<0.000000e+00> : vector<40x128xf32>
    %69 = tpu.matmul %1, %67, %cst_35 {dimension_numbers = #tpu.dot_dimension_numbers<[1], [0], [0], [1], [0, 0, 1, 1], [], []>} : vector<40x512xf32>, vector<512x128xf32>, vector<40x128xf32> -> vector<40x128xf32>
    %70 = arith.mulf %68, %69 : vector<40x128xf32>
    %cst_36 = arith.constant dense<0.000000e+00> : vector<128xf32>
    %71 = vector.multi_reduction <add>, %70, %cst_36 [0] : vector<40x128xf32> to vector<128xf32>
    %72 = vector.shape_cast %71 : vector<128xf32> to vector<1x128xf32>
    %cst_37 = arith.constant 0.000000e+00 : f32
    %cst_38 = arith.constant 5.000000e+00 : f32
    %73 = vector.broadcast %cst_37 : f32 to vector<1x128xf32>
    %74 = arith.maximumf %73, %72 : vector<1x128xf32>
    %75 = vector.broadcast %cst_38 : f32 to vector<1x128xf32>
    %76 = arith.minimumf %75, %74 : vector<1x128xf32>
    %c0_39 = arith.constant 0 : index
    %c2_40 = arith.constant 2 : index
    %c0_41 = arith.constant 0 : index
    %77 = vector.load %arg5[%c0_39, %c2_40, %c0_41] : memref<1x5x128xf32, #tpu.memory_space<vmem>>, vector<1x1x128xf32>
    %78 = vector.shape_cast %77 : vector<1x1x128xf32> to vector<1x128xf32>
    %79 = vector.shape_cast %76 : vector<1x128xf32> to vector<1x1x128xf32>
    tpu.vector_store %arg5[%c0_39, %c2_40, %c0_41], %79 {strides = array<i32>} : memref<1x5x128xf32, #tpu.memory_space<vmem>>, vector<1x1x128xf32>,
    %c0_42 = arith.constant 0 : index
    %c3 = arith.constant 3 : index
    %c0_43 = arith.constant 0 : index
    %80 = vector.load %arg1[%c0_42, %c3, %c0_43] : memref<1x5x128xi32, #tpu.memory_space<vmem>>, vector<1x1x128xi32>
    %81 = vector.shape_cast %80 : vector<1x1x128xi32> to vector<1x128xi32>
    %c0_44 = arith.constant 0 : index
    %c3_45 = arith.constant 3 : index
    %c0_46 = arith.constant 0 : index
    %82 = vector.load %arg2[%c0_44, %c3_45, %c0_46] : memref<1x5x128xi32, #tpu.memory_space<vmem>>, vector<1x1x128xi32>
    %83 = vector.shape_cast %82 : vector<1x1x128xi32> to vector<1x128xi32>
    %84 = tpu.iota {dimensions = array<i32: 0>} : vector<384x128xi32>
    %85 = vector.broadcast %81 : vector<1x128xi32> to vector<384x128xi32>
    %86 = arith.cmpi eq, %84, %85 : vector<384x128xi32>
    %87 = arith.extui %86 : vector<384x128xi1> to vector<384x128xi32>
    %88 = arith.sitofp %87 : vector<384x128xi32> to vector<384x128xf32>
    %89 = tpu.iota {dimensions = array<i32: 0>} : vector<512x128xi32>
    %90 = vector.broadcast %83 : vector<1x128xi32> to vector<512x128xi32>
    %91 = arith.cmpi eq, %89, %90 : vector<512x128xi32>
    %92 = arith.extui %91 : vector<512x128xi1> to vector<512x128xi32>
    %93 = arith.sitofp %92 : vector<512x128xi32> to vector<512x128xf32>
    %cst_47 = arith.constant dense<0.000000e+00> : vector<40x128xf32>
    %94 = tpu.matmul %0, %88, %cst_47 {dimension_numbers = #tpu.dot_dimension_numbers<[1], [0], [0], [1], [0, 0, 1, 1], [], []>} : vector<40x384xf32>, vector<384x128xf32>, vector<40x128xf32> -> vector<40x128xf32>
    %cst_48 = arith.constant dense<0.000000e+00> : vector<40x128xf32>
    %95 = tpu.matmul %1, %93, %cst_48 {dimension_numbers = #tpu.dot_dimension_numbers<[1], [0], [0], [1], [0, 0, 1, 1], [], []>} : vector<40x512xf32>, vector<512x128xf32>, vector<40x128xf32> -> vector<40x128xf32>
    %96 = arith.mulf %94, %95 : vector<40x128xf32>
    %cst_49 = arith.constant dense<0.000000e+00> : vector<128xf32>
    %97 = vector.multi_reduction <add>, %96, %cst_49 [0] : vector<40x128xf32> to vector<128xf32>
    %98 = vector.shape_cast %97 : vector<128xf32> to vector<1x128xf32>
    %cst_50 = arith.constant 0.000000e+00 : f32
    %cst_51 = arith.constant 5.000000e+00 : f32
    %99 = vector.broadcast %cst_50 : f32 to vector<1x128xf32>
    %100 = arith.maximumf %99, %98 : vector<1x128xf32>
    %101 = vector.broadcast %cst_51 : f32 to vector<1x128xf32>
    %102 = arith.minimumf %101, %100 : vector<1x128xf32>
    %c0_52 = arith.constant 0 : index
    %c3_53 = arith.constant 3 : index
    %c0_54 = arith.constant 0 : index
    %103 = vector.load %arg5[%c0_52, %c3_53, %c0_54] : memref<1x5x128xf32, #tpu.memory_space<vmem>>, vector<1x1x128xf32>
    %104 = vector.shape_cast %103 : vector<1x1x128xf32> to vector<1x128xf32>
    %105 = vector.shape_cast %102 : vector<1x128xf32> to vector<1x1x128xf32>
    tpu.vector_store %arg5[%c0_52, %c3_53, %c0_54], %105 {strides = array<i32>} : memref<1x5x128xf32, #tpu.memory_space<vmem>>, vector<1x1x128xf32>,
    %c0_55 = arith.constant 0 : index
    %c4 = arith.constant 4 : index
    %c0_56 = arith.constant 0 : index
    %106 = vector.load %arg1[%c0_55, %c4, %c0_56] : memref<1x5x128xi32, #tpu.memory_space<vmem>>, vector<1x1x128xi32>
    %107 = vector.shape_cast %106 : vector<1x1x128xi32> to vector<1x128xi32>
    %c0_57 = arith.constant 0 : index
    %c4_58 = arith.constant 4 : index
    %c0_59 = arith.constant 0 : index
    %108 = vector.load %arg2[%c0_57, %c4_58, %c0_59] : memref<1x5x128xi32, #tpu.memory_space<vmem>>, vector<1x1x128xi32>
    %109 = vector.shape_cast %108 : vector<1x1x128xi32> to vector<1x128xi32>
    %110 = tpu.iota {dimensions = array<i32: 0>} : vector<384x128xi32>
    %111 = vector.broadcast %107 : vector<1x128xi32> to vector<384x128xi32>
    %112 = arith.cmpi eq, %110, %111 : vector<384x128xi32>
    %113 = arith.extui %112 : vector<384x128xi1> to vector<384x128xi32>
    %114 = arith.sitofp %113 : vector<384x128xi32> to vector<384x128xf32>
    %115 = tpu.iota {dimensions = array<i32: 0>} : vector<512x128xi32>
    %116 = vector.broadcast %109 : vector<1x128xi32> to vector<512x128xi32>
    %117 = arith.cmpi eq, %115, %116 : vector<512x128xi32>
    %118 = arith.extui %117 : vector<512x128xi1> to vector<512x128xi32>
    %119 = arith.sitofp %118 : vector<512x128xi32> to vector<512x128xf32>
    %cst_60 = arith.constant dense<0.000000e+00> : vector<40x128xf32>
    %120 = tpu.matmul %0, %114, %cst_60 {dimension_numbers = #tpu.dot_dimension_numbers<[1], [0], [0], [1], [0, 0, 1, 1], [], []>} : vector<40x384xf32>, vector<384x128xf32>, vector<40x128xf32> -> vector<40x128xf32>
    %cst_61 = arith.constant dense<0.000000e+00> : vector<40x128xf32>
    %121 = tpu.matmul %1, %119, %cst_61 {dimension_numbers = #tpu.dot_dimension_numbers<[1], [0], [0], [1], [0, 0, 1, 1], [], []>} : vector<40x512xf32>, vector<512x128xf32>, vector<40x128xf32> -> vector<40x128xf32>
    %122 = arith.mulf %120, %121 : vector<40x128xf32>
    %cst_62 = arith.constant dense<0.000000e+00> : vector<128xf32>
    %123 = vector.multi_reduction <add>, %122, %cst_62 [0] : vector<40x128xf32> to vector<128xf32>
    %124 = vector.shape_cast %123 : vector<128xf32> to vector<1x128xf32>
    %cst_63 = arith.constant 0.000000e+00 : f32
    %cst_64 = arith.constant 5.000000e+00 : f32
    %125 = vector.broadcast %cst_63 : f32 to vector<1x128xf32>
    %126 = arith.maximumf %125, %124 : vector<1x128xf32>
    %127 = vector.broadcast %cst_64 : f32 to vector<1x128xf32>
    %128 = arith.minimumf %127, %126 : vector<1x128xf32>
    %c0_65 = arith.constant 0 : index
    %c4_66 = arith.constant 4 : index
    %c0_67 = arith.constant 0 : index
    %129 = vector.load %arg5[%c0_65, %c4_66, %c0_67] : memref<1x5x128xf32, #tpu.memory_space<vmem>>, vector<1x1x128xf32>
    %130 = vector.shape_cast %129 : vector<1x1x128xf32> to vector<1x128xf32>
    %131 = vector.shape_cast %128 : vector<1x128xf32> to vector<1x1x128xf32>
    tpu.vector_store %arg5[%c0_65, %c4_66, %c0_67], %131 {strides = array<i32>} : memref<1x5x128xf32, #tpu.memory_space<vmem>>, vector<1x1x128xf32>,
    return
  }
  func.func @transform_0(%arg0: i32) -> (i32, i32, i32) {
    %c0_i32 = arith.constant 0 : i32
    %c0_i32_0 = arith.constant 0 : i32
    %c0_i32_1 = arith.constant 0 : i32
    return %arg0, %c0_i32, %c0_i32_0 : i32, i32, i32
  }
  func.func @transform_1(%arg0: i32) -> (i32, i32, i32) {
    %c0_i32 = arith.constant 0 : i32
    %c0_i32_0 = arith.constant 0 : i32
    %c0_i32_1 = arith.constant 0 : i32
    return %arg0, %c0_i32, %c0_i32_0 : i32, i32, i32
  }
  func.func @transform_2(%arg0: i32) -> (i32, i32) {
    %c0_i32 = arith.constant 0 : i32
    %c0_i32_0 = arith.constant 0 : i32
    %c0_i32_1 = arith.constant 0 : i32
    return %c0_i32, %c0_i32_0 : i32, i32
  }
  func.func @transform_3(%arg0: i32) -> (i32, i32) {
    %c0_i32 = arith.constant 0 : i32
    %c0_i32_0 = arith.constant 0 : i32
    %c0_i32_1 = arith.constant 0 : i32
    return %c0_i32, %c0_i32_0 : i32, i32
  }
  func.func @transform_4(%arg0: i32) -> (i32, i32, i32) {
    %c0_i32 = arith.constant 0 : i32
    %c0_i32_0 = arith.constant 0 : i32
    %c0_i32_1 = arith.constant 0 : i32
    return %arg0, %c0_i32, %c0_i32_0 : i32, i32, i32
  }
}

</mosaic_0001>

<llo_original>
// kernel: tpu_custom_call.1
$region0: #{tpu_custom_call.1}
  #allocation0 [shape = 'u32[]', space=smem, size = 0x4, offset = 0x4, fixed_abs, tag = 'smem constant byte address 0x4 - core index']
  #allocation1 [shape = 'u32[144,128]{1,0:T(1,128)}', space=vmem, size = 0x12000, scoped, tag = 'internal scratch']
  %s0 = inlined_call_operand.vmem [shape: s32[2,5,128], index: 0, kind: input, shape index: {}]
  %s1 = inlined_call_operand.vmem [shape: s32[2,5,128], index: 1, kind: input, shape index: {}]
  %s2 = inlined_call_operand.hbm [shape: f32[40,384], index: 2, kind: input, shape index: {}]
  %s3 = inlined_call_operand.hbm [shape: f32[40,512], index: 3, kind: input, shape index: {}]
  %s4 = inlined_call_operand.vmem [shape: f32[2,5,128], index: 4, kind: output, shape index: {}]
  %s5 = sld [smem:[#allocation0]]
  $region57: #{tpu_custom_call.1} parent=0
    _
  %s7 = ssub.s32 1, %s5
  %s8 = scalar_select 0, %s7, %s5
  $region1: #{tpu_custom_call.1} parent=0
    #allocation2 [shape = 'u8[61440]{0}', space=vmem, size = 0xf000, scoped, tag = 'input window, operand 2, single buffered']
    #allocation3 [shape = 's32[2]{0}', space=sflag, size = 0x8, scoped, tag = 'scoped memory for tpu_custom_call.1']
    #allocation4 [shape = 'u8[81920]{0}', space=vmem, size = 0x14000, scoped, tag = 'input window, operand 3, single buffered']
    #allocation5 [shape = 's32[1]{0}', space=sflag, size = 0x4, scoped, tag = 'scoped memory for tpu_custom_call.1']
    %9 = vsyncpa [#allocation3], 0
    %10 = vsyncpa [#allocation5], 0
    loop: start=0, step=1, limit=4
    $region2: #{tpu_custom_call.1} parent=1 // loop_pre_header
      _
    $region3: #{tpu_custom_call.1} parent=1 // loop_header
      %s12 = sphi 0, %s16
      %p13 = scmp.ge.s32.totalorder %s12, 4
      %s22 = sphi 0, %s24
      %s25 = sphi 0, %s22
      %s26 = sphi 0, %s25
      %s42 = sphi 0, %s26
      %s48 = sphi 0, %s50
      %s51 = sphi 0, %s48
      %s52 = sphi 0, %s51
      %s68 = sphi 0, %s52
      %s72 = sphi 0, %s72
      %s74 = sphi 0, %s72
      %s75 = sphi 0, %s74
      %s89 = sphi 0, %s75
      %s93 = sphi 0, %s93
      %s95 = sphi 0, %s93
      %s96 = sphi 0, %s95
      %s110 = sphi 0, %s96
      %s116 = sphi 0, %s118
      %s119 = sphi 0, %s116
      %s120 = sphi 0, %s119
      %s136 = sphi 0, %s120
    $region4: #{tpu_custom_call.1} parent=1 // loop_header_branch
      %15 = sbr.rel (%p13) target = $region8
    $region5: #{tpu_custom_call.1} parent=1 // loop_body
      %s17 = ssub.s32 %s12, 1
      %s18 = ssub.s32 %s12, 2
      %s19 = sadd.s32 %s12, 1
      %s20 = ssub.s32 %s12, %s19
      %p21 = scmp.eq.s32.totalorder %s20, 0
      %s23 = sadd.s32 %s22, 1
      %s24 = scalar_select %p21, %s22, %s23
      %p27 = pneg %p21
      %p28 = scmp.eq.s32.totalorder %s12, 1
      %p29 = por %p27, %p28
      %p30 = scmp.ne.s32.totalorder %s22, %s25
      %p31 = scmp.eq.s32.totalorder %s12, 0
      %p32 = por %p30, %p31
      %p33 = scmp.ne.s32.totalorder %s22, %s25
      %p34 = scmp.eq.s32.totalorder %s17, 1
      %p35 = por %p33, %p34
      %p36 = scmp.ne.s32.totalorder %s25, %s26
      %p37 = scmp.eq.s32.totalorder %s17, 0
      %p38 = por %p36, %p37
      %p39 = scmp.ne.s32.totalorder %s25, %s26
      %p40 = scmp.eq.s32.totalorder %s18, 1
      %p41 = por %p39, %p40
      %p43 = scmp.ne.s32.totalorder %s26, %s42
      %p44 = scmp.eq.s32.totalorder %s18, 0
      %p45 = por %p43, %p44
      %s46 = ssub.s32 %s12, %s19
      %p47 = scmp.eq.s32.totalorder %s46, 0
      %s49 = sadd.s32 %s48, 1
      %s50 = scalar_select %p47, %s48, %s49
      %p53 = pneg %p47
      %p54 = scmp.eq.s32.totalorder %s12, 1
      %p55 = por %p53, %p54
      %p56 = scmp.ne.s32.totalorder %s48, %s51
      %p57 = scmp.eq.s32.totalorder %s12, 0
      %p58 = por %p56, %p57
      %p59 = scmp.ne.s32.totalorder %s48, %s51
      %p60 = scmp.eq.s32.totalorder %s17, 1
      %p61 = por %p59, %p60
      %p62 = scmp.ne.s32.totalorder %s51, %s52
      %p63 = scmp.eq.s32.totalorder %s17, 0
      %p64 = por %p62, %p63
      %p65 = scmp.ne.s32.totalorder %s51, %s52
      %p66 = scmp.eq.s32.totalorder %s18, 1
      %p67 = por %p65, %p66
      %p69 = scmp.ne.s32.totalorder %s52, %s68
      %p70 = scmp.eq.s32.totalorder %s18, 0
      %p71 = por %p69, %p70
      %s73 = sadd.s32 %s72, 1
      %p76 = scmp.eq.s32.totalorder %s12, 1
      %p77 = scmp.ne.s32.totalorder %s72, %s74
      %p78 = scmp.eq.s32.totalorder %s12, 0
      %p79 = por %p77, %p78
      %p80 = scmp.ne.s32.totalorder %s72, %s74
      %p81 = scmp.eq.s32.totalorder %s17, 1
      %p82 = por %p80, %p81
      %p83 = scmp.ne.s32.totalorder %s74, %s75
      %p84 = scmp.eq.s32.totalorder %s17, 0
      %p85 = por %p83, %p84
      %p86 = scmp.ne.s32.totalorder %s74, %s75
      %p87 = scmp.eq.s32.totalorder %s18, 1
      %p88 = por %p86, %p87
      %p90 = scmp.ne.s32.totalorder %s75, %s89
      %p91 = scmp.eq.s32.totalorder %s18, 0
      %p92 = por %p90, %p91
      %s94 = sadd.s32 %s93, 1
      %p97 = scmp.eq.s32.totalorder %s12, 1
      %p98 = scmp.ne.s32.totalorder %s93, %s95
      %p99 = scmp.eq.s32.totalorder %s12, 0
      %p100 = por %p98, %p99
      %p101 = scmp.ne.s32.totalorder %s93, %s95
      %p102 = scmp.eq.s32.totalorder %s17, 1
      %p103 = por %p101, %p102
      %p104 = scmp.ne.s32.totalorder %s95, %s96
      %p105 = scmp.eq.s32.totalorder %s17, 0
      %p106 = por %p104, %p105
      %p107 = scmp.ne.s32.totalorder %s95, %s96
      %p108 = scmp.eq.s32.totalorder %s18, 1
      %p109 = por %p107, %p108
      %p111 = scmp.ne.s32.totalorder %s96, %s110
      %p112 = scmp.eq.s32.totalorder %s18, 0
      %p113 = por %p111, %p112
      %s114 = ssub.s32 %s12, %s19
      %p115 = scmp.eq.s32.totalorder %s114, 0
      %s117 = sadd.s32 %s116, 1
      %s118 = scalar_select %p115, %s116, %s117
      %p121 = pneg %p115
      %p122 = scmp.eq.s32.totalorder %s12, 1
      %p123 = por %p121, %p122
      %p124 = scmp.ne.s32.totalorder %s116, %s119
      %p125 = scmp.eq.s32.totalorder %s12, 0
      %p126 = por %p124, %p125
      %p127 = scmp.ne.s32.totalorder %s116, %s119
      %p128 = scmp.eq.s32.totalorder %s17, 1
      %p129 = por %p127, %p128
      %p130 = scmp.ne.s32.totalorder %s119, %s120
      %p131 = scmp.eq.s32.totalorder %s17, 0
      %p132 = por %p130, %p131
      %p133 = scmp.ne.s32.totalorder %s119, %s120
      %p134 = scmp.eq.s32.totalorder %s18, 1
      %p135 = por %p133, %p134
      %p137 = scmp.ne.s32.totalorder %s120, %s136
      %p138 = scmp.eq.s32.totalorder %s18, 0
      %p139 = por %p137, %p138
      %p140 = scmp.le.s32.totalorder 1, %s12
      %p141 = scmp.lt.s32.totalorder %s12, 3
      %p142 = pnand %p140, %p141
      %p143 = pneg %p142
      // Predicated region
      $region9: #{tpu_custom_call.1} parent=5 // pred_check
        _
      $region10: #{tpu_custom_call.1} parent=5 // pred_check_branch
        %145 = sbr.rel (%p142) target = $region12
      $region11: #{tpu_custom_call.1} parent=5 // pred_region
        %s146 = ssub.s32 %s12, 1
        // Predicated region
        $region13: #{tpu_custom_call.1} parent=11 // pred_check
          %p147 = pneg %p85
        $region14: #{tpu_custom_call.1} parent=11 // pred_check_branch
          %149 = sbr.rel (%p147) target = $region16
        $region15: #{tpu_custom_call.1} parent=11 // pred_region
          %s151 = ssub.s32 1920, 1920
          %152 = vsyncadd [#allocation3], %s151
          %s153 = sshll.u32 [#allocation2], 4
          %s154 = int_to_ptr.vmem [resolvable:$true] %s153
          %159 = dma.hbm_to_vmem [thread:$0]  %s2, 1920, %s154, [#allocation3], 384, 384, 24
        $region16: #{tpu_custom_call.1} parent=11 // pred_fallthru
          _
        // Predicated region
        $region17: #{tpu_custom_call.1} parent=11 // pred_check
          %p160 = pneg %p106
        $region18: #{tpu_custom_call.1} parent=11 // pred_check_branch
          %162 = sbr.rel (%p160) target = $region20
        $region19: #{tpu_custom_call.1} parent=11 // pred_region
          %s164 = ssub.s32 2560, 2560
          %165 = vsyncadd [#allocation5], %s164
          %s166 = sshll.u32 [#allocation4], 4
          %s167 = int_to_ptr.vmem [resolvable:$true] %s166
          %172 = dma.hbm_to_vmem [thread:$0]  %s3, 2560, %s167, [#allocation5], 512, 512, 32
        $region20: #{tpu_custom_call.1} parent=11 // pred_fallthru
          _
      $region12: #{tpu_custom_call.1} parent=5 // pred_fallthru
        _
      %p173 = scmp.lt.s32.totalorder %s12, 2
      // Predicated region
      $region21: #{tpu_custom_call.1} parent=5 // pred_check
        %p174 = pneg %p173
      $region22: #{tpu_custom_call.1} parent=5 // pred_check_branch
        %176 = sbr.rel (%p174) target = $region24
      $region23: #{tpu_custom_call.1} parent=5 // pred_region
        // Predicated region
        $region25: #{tpu_custom_call.1} parent=23 // pred_check
          %p177 = pneg %p32
        $region26: #{tpu_custom_call.1} parent=23 // pred_check_branch
          %179 = sbr.rel (%p177) target = $region28
        $region27: #{tpu_custom_call.1} parent=23 // pred_region
          %p180 = scmp.lt.s32.totalorder %s12, 1
          %s181 = scalar_select %p180, %s12, 1
          %s182 = smul.addr %s181, 8
          %s183 = scalar_lea.vmem %s0, %s182
        $region28: #{tpu_custom_call.1} parent=23 // pred_fallthru
          _
        // Predicated region
        $region29: #{tpu_custom_call.1} parent=23 // pred_check
          %p184 = pneg %p58
        $region30: #{tpu_custom_call.1} parent=23 // pred_check_branch
          %186 = sbr.rel (%p184) target = $region32
        $region31: #{tpu_custom_call.1} parent=23 // pred_region
          %p187 = scmp.lt.s32.totalorder %s12, 1
          %s188 = scalar_select %p187, %s12, 1
          %s189 = smul.addr %s188, 8
          %s190 = scalar_lea.vmem %s1, %s189
        $region32: #{tpu_custom_call.1} parent=23 // pred_fallthru
          _
      $region24: #{tpu_custom_call.1} parent=5 // pred_fallthru
        _
      %p191 = scmp.le.s32.totalorder 1, %s12
      %p192 = scmp.lt.s32.totalorder %s12, 3
      %p193 = pnand %p191, %p192
      %p194 = pneg %p193
      // Predicated region
      $region33: #{tpu_custom_call.1} parent=5 // pred_check
        _
      $region34: #{tpu_custom_call.1} parent=5 // pred_check_branch
        %196 = sbr.rel (%p193) target = $region36
      $region35: #{tpu_custom_call.1} parent=5 // pred_region
        %s197 = ssub.s32 %s12, 1
        // Predicated region
        $region37: #{tpu_custom_call.1} parent=35 // pred_check
          %p198 = pneg %p85
        $region38: #{tpu_custom_call.1} parent=35 // pred_check_branch
          %200 = sbr.rel (%p198) target = $region40
        $region39: #{tpu_custom_call.1} parent=35 // pred_region
          %201 = dma.done [#allocation3], 1920
        $region40: #{tpu_custom_call.1} parent=35 // pred_fallthru
          _
        // Predicated region
        $region41: #{tpu_custom_call.1} parent=35 // pred_check
          %p202 = pneg %p106
        $region42: #{tpu_custom_call.1} parent=35 // pred_check_branch
          %204 = sbr.rel (%p202) target = $region44
        $region43: #{tpu_custom_call.1} parent=35 // pred_region
          %205 = dma.done [#allocation5], 2560
        $region44: #{tpu_custom_call.1} parent=35 // pred_fallthru
          _
        %p206 = scmp.lt.s32.totalorder %s17, 1
        %s207 = scalar_select %p206, %s17, 1
        %s208 = smul.addr %s207, 8
        %s209 = scalar_lea.vmem %s0, %s208
        %p210 = pneg %p38
        %p211 = pneg %p35
        %p212 = scmp.lt.s32.totalorder %s17, 1
        %s213 = scalar_select %p212, %s17, 1
        %s214 = smul.addr %s213, 8
        %s215 = scalar_lea.vmem %s1, %s214
        %p216 = pneg %p64
        %p217 = pneg %p61
        %p218 = pneg %p85
        %p219 = pneg %p82
        %p220 = pneg %p106
        %p221 = pneg %p103
        %p222 = pneg %p132
        %p223 = pneg %p129
        %p224 = scmp.lt.s32.totalorder %s17, 1
        %s225 = scalar_select %p224, %s17, 1
        %s226 = smul.addr %s225, 8
        %s227 = scalar_lea.vmem %s4, %s226
        %p228 = scmp.lt.s32.totalorder %s17, 1
        %s229 = scalar_select %p228, %s17, 1
        %s230 = smul.addr %s229, 8
        %s231 = scalar_lea.vmem %s0, %s230
        %p232 = scmp.lt.s32.totalorder %s17, 1
        %s233 = scalar_select %p232, %s17, 1
        %s234 = smul.addr %s233, 8
        %s235 = scalar_lea.vmem %s1, %s234
        %p236 = scmp.lt.s32.totalorder %s17, 1
        %s237 = scalar_select %p236, %s17, 1
        %s238 = smul.addr %s237, 8
        %s239 = scalar_lea.vmem %s4, %s238
        %v240 = vld [vmem:[#allocation2] sm:$0xff]
        %v241 = vld [vmem:[#allocation2 + $0x8] sm:$0xff]
        %v242 = vld [vmem:[#allocation2 + $0x10] sm:$0xff]
        %v243 = vld [vmem:[#allocation2 + $0x18] sm:$0xff]
        %v244 = vld [vmem:[#allocation2 + $0x20] sm:$0xff]
        %v245 = vld [vmem:[#allocation2 + $0x28] sm:$0xff]
        %v246 = vld [vmem:[#allocation2 + $0x30] sm:$0xff]
        %v247 = vld [vmem:[#allocation2 + $0x38] sm:$0xff]
        %v248 = vld [vmem:[#allocation2 + $0x40] sm:$0xff]
        %v249 = vld [vmem:[#allocation2 + $0x48] sm:$0xff]
        %v250 = vld [vmem:[#allocation2 + $0x50] sm:$0xff]
        %v251 = vld [vmem:[#allocation2 + $0x58] sm:$0xff]
        %v252 = vld [vmem:[#allocation2 + $0x60] sm:$0xff]
        %v253 = vld [vmem:[#allocation2 + $0x68] sm:$0xff]
        %v254 = vld [vmem:[#allocation2 + $0x70] sm:$0xff]
        %v255 = vld [vmem:[#allocation4] sm:$0xff]
        %v256 = vld [vmem:[#allocation4 + $0x8] sm:$0xff]
        %v257 = vld [vmem:[#allocation4 + $0x10] sm:$0xff]
        %v258 = vld [vmem:[#allocation4 + $0x18] sm:$0xff]
        %v259 = vld [vmem:[#allocation4 + $0x20] sm:$0xff]
        %v260 = vld [vmem:[#allocation4 + $0x28] sm:$0xff]
        %v261 = vld [vmem:[#allocation4 + $0x30] sm:$0xff]
        %v262 = vld [vmem:[#allocation4 + $0x38] sm:$0xff]
        %v263 = vld [vmem:[#allocation4 + $0x40] sm:$0xff]
        %v264 = vld [vmem:[#allocation4 + $0x48] sm:$0xff]
        %v265 = vld [vmem:[#allocation4 + $0x50] sm:$0xff]
        %v266 = vld [vmem:[#allocation4 + $0x58] sm:$0xff]
        %v267 = vld [vmem:[#allocation4 + $0x60] sm:$0xff]
        %v268 = vld [vmem:[#allocation4 + $0x68] sm:$0xff]
        %v269 = vld [vmem:[#allocation4 + $0x70] sm:$0xff]
        %v270 = vld [vmem:[#allocation4 + $0x78] sm:$0xff]
        %v271 = vld [vmem:[#allocation4 + $0x80] sm:$0xff]
        %v272 = vld [vmem:[#allocation4 + $0x88] sm:$0xff]
        %v273 = vld [vmem:[#allocation4 + $0x90] sm:$0xff]
        %v274 = vld [vmem:[#allocation4 + $0x98] sm:$0xff]
        %v275 = vld [vmem:[%s231] sm:$0x1]
        %v276 = vld [vmem:[%s235] sm:$0x1]
        %v277 = vlaneseq
        %v278 = vshrl.u32 %v277, 7
        %v279 = vadd.s32 %v278, 8
        %v280 = vadd.s32 %v278, 16
        %v281 = vadd.s32 %v278, 24
        %v282 = vadd.s32 %v278, 32
        %v283 = vadd.s32 %v278, 40
        %v284 = vadd.s32 %v278, 48
        %v285 = vadd.s32 %v278, 56
        %v286 = vadd.s32 %v278, 64
        %v287 = vadd.s32 %v278, 72
        %v288 = vadd.s32 %v278, 80
        %v289 = vadd.s32 %v278, 88
        %v290 = vadd.s32 %v278, 96
        %v291 = vadd.s32 %v278, 104
        %v292 = vadd.s32 %v278, 112
        %v293 = vadd.s32 %v278, 120
        %v294 = vadd.s32 %v278, 128
        %v295 = vadd.s32 %v278, 136
        %v296 = vadd.s32 %v278, 144
        %v297 = vadd.s32 %v278, 152
        %v298 = vadd.s32 %v278, 160
        %v299 = vadd.s32 %v278, 168
        %v300 = vadd.s32 %v278, 176
        %v301 = vadd.s32 %v278, 184
        %v302 = vadd.s32 %v278, 192
        %v303 = vadd.s32 %v278, 200
        %v304 = vadd.s32 %v278, 208
        %v305 = vadd.s32 %v278, 216
        %v306 = vadd.s32 %v278, 224
        %v307 = vadd.s32 %v278, 232
        %v308 = vadd.s32 %v278, 240
        %v309 = vadd.s32 %v278, 248
        %v310 = vadd.s32 %v278, 256
        %v311 = vadd.s32 %v278, 264
        %v312 = vadd.s32 %v278, 272
        %v313 = vadd.s32 %v278, 280
        %v314 = vadd.s32 %v278, 288
        %v315 = vadd.s32 %v278, 296
        %v316 = vadd.s32 %v278, 304
        %v317 = vadd.s32 %v278, 312
        %v318 = vadd.s32 %v278, 320
        %v319 = vadd.s32 %v278, 328
        %v320 = vadd.s32 %v278, 336
        %v321 = vadd.s32 %v278, 344
        %v322 = vadd.s32 %v278, 352
        %v323 = vadd.s32 %v278, 360
        %v324 = vadd.s32 %v278, 368
        %v325 = vadd.s32 %v278, 376
        %v326 = vlaneseq
        %v327 = vshrl.u32 %v326, 7
        %v328 = vsub.s32 0, %v327
        %v329 = vrot.slane %v275, %v328
        %vm330 = vcmp.eq.s32.totalorder %v278, %v329
        %vm331 = vcmp.eq.s32.totalorder %v279, %v329
        %vm332 = vcmp.eq.s32.totalorder %v280, %v329
        %vm333 = vcmp.eq.s32.totalorder %v281, %v329
        %vm334 = vcmp.eq.s32.totalorder %v282, %v329
        %vm335 = vcmp.eq.s32.totalorder %v283, %v329
        %vm336 = vcmp.eq.s32.totalorder %v284, %v329
        %vm337 = vcmp.eq.s32.totalorder %v285, %v329
        %vm338 = vcmp.eq.s32.totalorder %v286, %v329
        %vm339 = vcmp.eq.s32.totalorder %v287, %v329
        %vm340 = vcmp.eq.s32.totalorder %v288, %v329
        %vm341 = vcmp.eq.s32.totalorder %v289, %v329
        %vm342 = vcmp.eq.s32.totalorder %v290, %v329
        %vm343 = vcmp.eq.s32.totalorder %v291, %v329
        %vm344 = vcmp.eq.s32.totalorder %v292, %v329
        %vm345 = vcmp.eq.s32.totalorder %v293, %v329
        %vm346 = vcmp.eq.s32.totalorder %v294, %v329
        %vm347 = vcmp.eq.s32.totalorder %v295, %v329
        %vm348 = vcmp.eq.s32.totalorder %v296, %v329
        %vm349 = vcmp.eq.s32.totalorder %v297, %v329
        %vm350 = vcmp.eq.s32.totalorder %v298, %v329
        %vm351 = vcmp.eq.s32.totalorder %v299, %v329
        %vm352 = vcmp.eq.s32.totalorder %v300, %v329
        %vm353 = vcmp.eq.s32.totalorder %v301, %v329
        %vm354 = vcmp.eq.s32.totalorder %v302, %v329
        %vm355 = vcmp.eq.s32.totalorder %v303, %v329
        %vm356 = vcmp.eq.s32.totalorder %v304, %v329
        %vm357 = vcmp.eq.s32.totalorder %v305, %v329
        %vm358 = vcmp.eq.s32.totalorder %v306, %v329
        %vm359 = vcmp.eq.s32.totalorder %v307, %v329
        %vm360 = vcmp.eq.s32.totalorder %v308, %v329
        %vm361 = vcmp.eq.s32.totalorder %v309, %v329
        %vm362 = vcmp.eq.s32.totalorder %v310, %v329
        %vm363 = vcmp.eq.s32.totalorder %v311, %v329
        %vm364 = vcmp.eq.s32.totalorder %v312, %v329
        %vm365 = vcmp.eq.s32.totalorder %v313, %v329
        %vm366 = vcmp.eq.s32.totalorder %v314, %v329
        %vm367 = vcmp.eq.s32.totalorder %v315, %v329
        %vm368 = vcmp.eq.s32.totalorder %v316, %v329
        %vm369 = vcmp.eq.s32.totalorder %v317, %v329
        %vm370 = vcmp.eq.s32.totalorder %v318, %v329
        %vm371 = vcmp.eq.s32.totalorder %v319, %v329
        %vm372 = vcmp.eq.s32.totalorder %v320, %v329
        %vm373 = vcmp.eq.s32.totalorder %v321, %v329
        %vm374 = vcmp.eq.s32.totalorder %v322, %v329
        %vm375 = vcmp.eq.s32.totalorder %v323, %v329
        %vm376 = vcmp.eq.s32.totalorder %v324, %v329
        %vm377 = vcmp.eq.s32.totalorder %v325, %v329
        %v378 = vsel %vm330, 1, 0
        %v379 = vsel %vm331, 1, 0
        %v380 = vsel %vm332, 1, 0
        %v381 = vsel %vm333, 1, 0
        %v382 = vsel %vm334, 1, 0
        %v383 = vsel %vm335, 1, 0
        %v384 = vsel %vm336, 1, 0
        %v385 = vsel %vm337, 1, 0
        %v386 = vsel %vm338, 1, 0
        %v387 = vsel %vm339, 1, 0
        %v388 = vsel %vm340, 1, 0
        %v389 = vsel %vm341, 1, 0
        %v390 = vsel %vm342, 1, 0
        %v391 = vsel %vm343, 1, 0
        %v392 = vsel %vm344, 1, 0
        %v393 = vsel %vm345, 1, 0
        %v394 = vsel %vm346, 1, 0
        %v395 = vsel %vm347, 1, 0
        %v396 = vsel %vm348, 1, 0
        %v397 = vsel %vm349, 1, 0
        %v398 = vsel %vm350, 1, 0
        %v399 = vsel %vm351, 1, 0
        %v400 = vsel %vm352, 1, 0
        %v401 = vsel %vm353, 1, 0
        %v402 = vsel %vm354, 1, 0
        %v403 = vsel %vm355, 1, 0
        %v404 = vsel %vm356, 1, 0
        %v405 = vsel %vm357, 1, 0
        %v406 = vsel %vm358, 1, 0
        %v407 = vsel %vm359, 1, 0
        %v408 = vsel %vm360, 1, 0
        %v409 = vsel %vm361, 1, 0
        %v410 = vsel %vm362, 1, 0
        %v411 = vsel %vm363, 1, 0
        %v412 = vsel %vm364, 1, 0
        %v413 = vsel %vm365, 1, 0
        %v414 = vsel %vm366, 1, 0
        %v415 = vsel %vm367, 1, 0
        %v416 = vsel %vm368, 1, 0
        %v417 = vsel %vm369, 1, 0
        %v418 = vsel %vm370, 1, 0
        %v419 = vsel %vm371, 1, 0
        %v420 = vsel %vm372, 1, 0
        %v421 = vsel %vm373, 1, 0
        %v422 = vsel %vm374, 1, 0
        %v423 = vsel %vm375, 1, 0
        %v424 = vsel %vm376, 1, 0
        %v425 = vsel %vm377, 1, 0
        %v426 = vcvt.s32.f32 %v378
        %v427 = vcvt.s32.f32 %v379
        %v428 = vcvt.s32.f32 %v380
        %v429 = vcvt.s32.f32 %v381
        %v430 = vcvt.s32.f32 %v382
        %v431 = vcvt.s32.f32 %v383
        %v432 = vcvt.s32.f32 %v384
        %v433 = vcvt.s32.f32 %v385
        %v434 = vcvt.s32.f32 %v386
        %v435 = vcvt.s32.f32 %v387
        %v436 = vcvt.s32.f32 %v388
        %v437 = vcvt.s32.f32 %v389
        %v438 = vcvt.s32.f32 %v390
        %v439 = vcvt.s32.f32 %v391
        %v440 = vcvt.s32.f32 %v392
        %v441 = vcvt.s32.f32 %v393
        %v442 = vcvt.s32.f32 %v394
        %v443 = vcvt.s32.f32 %v395
        %v444 = vcvt.s32.f32 %v396
        %v445 = vcvt.s32.f32 %v397
        %v446 = vcvt.s32.f32 %v398
        %v447 = vcvt.s32.f32 %v399
        %v448 = vcvt.s32.f32 %v400
        %v449 = vcvt.s32.f32 %v401
        %v450 = vcvt.s32.f32 %v402
        %v451 = vcvt.s32.f32 %v403
        %v452 = vcvt.s32.f32 %v404
        %v453 = vcvt.s32.f32 %v405
        %v454 = vcvt.s32.f32 %v406
        %v455 = vcvt.s32.f32 %v407
        %v456 = vcvt.s32.f32 %v408
        %v457 = vcvt.s32.f32 %v409
        %v458 = vcvt.s32.f32 %v410
        %v459 = vcvt.s32.f32 %v411
        %v460 = vcvt.s32.f32 %v412
        %v461 = vcvt.s32.f32 %v413
        %v462 = vcvt.s32.f32 %v414
        %v463 = vcvt.s32.f32 %v415
        %v464 = vcvt.s32.f32 %v416
        %v465 = vcvt.s32.f32 %v417
        %v466 = vcvt.s32.f32 %v418
        %v467 = vcvt.s32.f32 %v419
        %v468 = vcvt.s32.f32 %v420
        %v469 = vcvt.s32.f32 %v421
        %v470 = vcvt.s32.f32 %v422
        %v471 = vcvt.s32.f32 %v423
        %v472 = vcvt.s32.f32 %v424
        %v473 = vcvt.s32.f32 %v425
        %v474 = vadd.s32 %v278, 384
        %v475 = vadd.s32 %v278, 392
        %v476 = vadd.s32 %v278, 400
        %v477 = vadd.s32 %v278, 408
        %v478 = vadd.s32 %v278, 416
        %v479 = vadd.s32 %v278, 424
        %v480 = vadd.s32 %v278, 432
        %v481 = vadd.s32 %v278, 440
        %v482 = vadd.s32 %v278, 448
        %v483 = vadd.s32 %v278, 456
        %v484 = vadd.s32 %v278, 464
        %v485 = vadd.s32 %v278, 472
        %v486 = vadd.s32 %v278, 480
        %v487 = vadd.s32 %v278, 488
        %v488 = vadd.s32 %v278, 496
        %v489 = vadd.s32 %v278, 504
        %v490 = vlaneseq
        %v491 = vshrl.u32 %v490, 7
        %v492 = vsub.s32 0, %v491
        %v493 = vrot.slane %v276, %v492
        %vm494 = vcmp.eq.s32.totalorder %v278, %v493
        %vm495 = vcmp.eq.s32.totalorder %v279, %v493
        %vm496 = vcmp.eq.s32.totalorder %v280, %v493
        %vm497 = vcmp.eq.s32.totalorder %v281, %v493
        %vm498 = vcmp.eq.s32.totalorder %v282, %v493
        %vm499 = vcmp.eq.s32.totalorder %v283, %v493
        %vm500 = vcmp.eq.s32.totalorder %v284, %v493
        %vm501 = vcmp.eq.s32.totalorder %v285, %v493
        %vm502 = vcmp.eq.s32.totalorder %v286, %v493
        %vm503 = vcmp.eq.s32.totalorder %v287, %v493
        %vm504 = vcmp.eq.s32.totalorder %v288, %v493
        %vm505 = vcmp.eq.s32.totalorder %v289, %v493
        %vm506 = vcmp.eq.s32.totalorder %v290, %v493
        %vm507 = vcmp.eq.s32.totalorder %v291, %v493
        %vm508 = vcmp.eq.s32.totalorder %v292, %v493
        %vm509 = vcmp.eq.s32.totalorder %v293, %v493
        %vm510 = vcmp.eq.s32.totalorder %v294, %v493
        %vm511 = vcmp.eq.s32.totalorder %v295, %v493
        %vm512 = vcmp.eq.s32.totalorder %v296, %v493
        %vm513 = vcmp.eq.s32.totalorder %v297, %v493
        %vm514 = vcmp.eq.s32.totalorder %v298, %v493
        %vm515 = vcmp.eq.s32.totalorder %v299, %v493
        %vm516 = vcmp.eq.s32.totalorder %v300, %v493
        %vm517 = vcmp.eq.s32.totalorder %v301, %v493
        %vm518 = vcmp.eq.s32.totalorder %v302, %v493
        %vm519 = vcmp.eq.s32.totalorder %v303, %v493
        %vm520 = vcmp.eq.s32.totalorder %v304, %v493
        %vm521 = vcmp.eq.s32.totalorder %v305, %v493
        %vm522 = vcmp.eq.s32.totalorder %v306, %v493
        %vm523 = vcmp.eq.s32.totalorder %v307, %v493
        %vm524 = vcmp.eq.s32.totalorder %v308, %v493
        %vm525 = vcmp.eq.s32.totalorder %v309, %v493
        %vm526 = vcmp.eq.s32.totalorder %v310, %v493
        %vm527 = vcmp.eq.s32.totalorder %v311, %v493
        %vm528 = vcmp.eq.s32.totalorder %v312, %v493
        %vm529 = vcmp.eq.s32.totalorder %v313, %v493
        %vm530 = vcmp.eq.s32.totalorder %v314, %v493
        %vm531 = vcmp.eq.s32.totalorder %v315, %v493
        %vm532 = vcmp.eq.s32.totalorder %v316, %v493
        %vm533 = vcmp.eq.s32.totalorder %v317, %v493
        %vm534 = vcmp.eq.s32.totalorder %v318, %v493
        %vm535 = vcmp.eq.s32.totalorder %v319, %v493
        %vm536 = vcmp.eq.s32.totalorder %v320, %v493
        %vm537 = vcmp.eq.s32.totalorder %v321, %v493
        %vm538 = vcmp.eq.s32.totalorder %v322, %v493
        %vm539 = vcmp.eq.s32.totalorder %v323, %v493
        %vm540 = vcmp.eq.s32.totalorder %v324, %v493
        %vm541 = vcmp.eq.s32.totalorder %v325, %v493
        %vm542 = vcmp.eq.s32.totalorder %v474, %v493
        %vm543 = vcmp.eq.s32.totalorder %v475, %v493
        %vm544 = vcmp.eq.s32.totalorder %v476, %v493
        %vm545 = vcmp.eq.s32.totalorder %v477, %v493
        %vm546 = vcmp.eq.s32.totalorder %v478, %v493
        %vm547 = vcmp.eq.s32.totalorder %v479, %v493
        %vm548 = vcmp.eq.s32.totalorder %v480, %v493
        %vm549 = vcmp.eq.s32.totalorder %v481, %v493
        %vm550 = vcmp.eq.s32.totalorder %v482, %v493
        %vm551 = vcmp.eq.s32.totalorder %v483, %v493
        %vm552 = vcmp.eq.s32.totalorder %v484, %v493
        %vm553 = vcmp.eq.s32.totalorder %v485, %v493
        %vm554 = vcmp.eq.s32.totalorder %v486, %v493
        %vm555 = vcmp.eq.s32.totalorder %v487, %v493
        %vm556 = vcmp.eq.s32.totalorder %v488, %v493
        %vm557 = vcmp.eq.s32.totalorder %v489, %v493
        %v558 = vsel %vm494, 1, 0
        %v559 = vsel %vm495, 1, 0
        %v560 = vsel %vm496, 1, 0
        %v561 = vsel %vm497, 1, 0
        %v562 = vsel %vm498, 1, 0
        %v563 = vsel %vm499, 1, 0
        %v564 = vsel %vm500, 1, 0
        %v565 = vsel %vm501, 1, 0
        %v566 = vsel %vm502, 1, 0
        %v567 = vsel %vm503, 1, 0
        %v568 = vsel %vm504, 1, 0
        %v569 = vsel %vm505, 1, 0
        %v570 = vsel %vm506, 1, 0
        %v571 = vsel %vm507, 1, 0
        %v572 = vsel %vm508, 1, 0
        %v573 = vsel %vm509, 1, 0
        %v574 = vsel %vm510, 1, 0
        %v575 = vsel %vm511, 1, 0
        %v576 = vsel %vm512, 1, 0
        %v577 = vsel %vm513, 1, 0
        %v578 = vsel %vm514, 1, 0
        %v579 = vsel %vm515, 1, 0
        %v580 = vsel %vm516, 1, 0
        %v581 = vsel %vm517, 1, 0
        %v582 = vsel %vm518, 1, 0
        %v583 = vsel %vm519, 1, 0
        %v584 = vsel %vm520, 1, 0
        %v585 = vsel %vm521, 1, 0
        %v586 = vsel %vm522, 1, 0
        %v587 = vsel %vm523, 1, 0
        %v588 = vsel %vm524, 1, 0
        %v589 = vsel %vm525, 1, 0
        %v590 = vsel %vm526, 1, 0
        %v591 = vsel %vm527, 1, 0
        %v592 = vsel %vm528, 1, 0
        %v593 = vsel %vm529, 1, 0
        %v594 = vsel %vm530, 1, 0
        %v595 = vsel %vm531, 1, 0
        %v596 = vsel %vm532, 1, 0
        %v597 = vsel %vm533, 1, 0
        %v598 = vsel %vm534, 1, 0
        %v599 = vsel %vm535, 1, 0
        %v600 = vsel %vm536, 1, 0
        %v601 = vsel %vm537, 1, 0
        %v602 = vsel %vm538, 1, 0
        %v603 = vsel %vm539, 1, 0
        %v604 = vsel %vm540, 1, 0
        %v605 = vsel %vm541, 1, 0
        %v606 = vsel %vm542, 1, 0
        %v607 = vsel %vm543, 1, 0
        %v608 = vsel %vm544, 1, 0
        %v609 = vsel %vm545, 1, 0
        %v610 = vsel %vm546, 1, 0
        %v611 = vsel %vm547, 1, 0
        %v612 = vsel %vm548, 1, 0
        %v613 = vsel %vm549, 1, 0
        %v614 = vsel %vm550, 1, 0
        %v615 = vsel %vm551, 1, 0
        %v616 = vsel %vm552, 1, 0
        %v617 = vsel %vm553, 1, 0
        %v618 = vsel %vm554, 1, 0
        %v619 = vsel %vm555, 1, 0
        %v620 = vsel %vm556, 1, 0
        %v621 = vsel %vm557, 1, 0
        %v622 = vcvt.s32.f32 %v558
        %v623 = vcvt.s32.f32 %v559
        %v624 = vcvt.s32.f32 %v560
        %v625 = vcvt.s32.f32 %v561
        %v626 = vcvt.s32.f32 %v562
        %v627 = vcvt.s32.f32 %v563
        %v628 = vcvt.s32.f32 %v564
        %v629 = vcvt.s32.f32 %v565
        %v630 = vcvt.s32.f32 %v566
        %v631 = vcvt.s32.f32 %v567
        %v632 = vcvt.s32.f32 %v568
        %v633 = vcvt.s32.f32 %v569
        %v634 = vcvt.s32.f32 %v570
        %v635 = vcvt.s32.f32 %v571
        %v636 = vcvt.s32.f32 %v572
        %v637 = vcvt.s32.f32 %v573
        %v638 = vcvt.s32.f32 %v574
        %v639 = vcvt.s32.f32 %v575
        %v640 = vcvt.s32.f32 %v576
        %v641 = vcvt.s32.f32 %v577
        %v642 = vcvt.s32.f32 %v578
        %v643 = vcvt.s32.f32 %v579
        %v644 = vcvt.s32.f32 %v580
        %v645 = vcvt.s32.f32 %v581
        %v646 = vcvt.s32.f32 %v582
        %v647 = vcvt.s32.f32 %v583
        %v648 = vcvt.s32.f32 %v584
        %v649 = vcvt.s32.f32 %v585
        %v650 = vcvt.s32.f32 %v586
        %v651 = vcvt.s32.f32 %v587
        %v652 = vcvt.s32.f32 %v588
        %v653 = vcvt.s32.f32 %v589
        %v654 = vcvt.s32.f32 %v590
        %v655 = vcvt.s32.f32 %v591
        %v656 = vcvt.s32.f32 %v592
        %v657 = vcvt.s32.f32 %v593
        %v658 = vcvt.s32.f32 %v594
        %v659 = vcvt.s32.f32 %v595
        %v660 = vcvt.s32.f32 %v596
        %v661 = vcvt.s32.f32 %v597
        %v662 = vcvt.s32.f32 %v598
        %v663 = vcvt.s32.f32 %v599
        %v664 = vcvt.s32.f32 %v600
        %v665 = vcvt.s32.f32 %v601
        %v666 = vcvt.s32.f32 %v602
        %v667 = vcvt.s32.f32 %v603
        %v668 = vcvt.s32.f32 %v604
        %v669 = vcvt.s32.f32 %v605
        %v670 = vcvt.s32.f32 %v606
        %v671 = vcvt.s32.f32 %v607
        %v672 = vcvt.s32.f32 %v608
        %v673 = vcvt.s32.f32 %v609
        %v674 = vcvt.s32.f32 %v610
        %v675 = vcvt.s32.f32 %v611
        %v676 = vcvt.s32.f32 %v612
        %v677 = vcvt.s32.f32 %v613
        %v678 = vcvt.s32.f32 %v614
        %v679 = vcvt.s32.f32 %v615
        %v680 = vcvt.s32.f32 %v616
        %v681 = vcvt.s32.f32 %v617
        %v682 = vcvt.s32.f32 %v618
        %v683 = vcvt.s32.f32 %v619
        %v684 = vcvt.s32.f32 %v620
        %v685 = vcvt.s32.f32 %v621
        %686 = vmatprep.subr.mxu0 0.0
        %687 = vmatpush1.msra.mxu0 %v426
        %688 = vmatprep.subr.mxu0 0.0
        %689 = vmatpush1.msra.mxu0 %v427
        %690 = vmatprep.subr.mxu0 0.0
        %691 = vmatpush1.msra.mxu0 %v428
        %692 = vmatprep.subr.mxu0 0.0
        %693 = vmatpush1.msra.mxu0 %v429
        %694 = vmatprep.subr.mxu0 0.0
        %695 = vmatpush1.msra.mxu0 %v430
        %696 = vmatprep.subr.mxu0 0.0
        %697 = vmatpush1.msra.mxu0 %v431
        %698 = vmatprep.subr.mxu0 0.0
        %699 = vmatpush1.msra.mxu0 %v432
        %700 = vmatprep.subr.mxu0 0.0
        %701 = vmatpush1.msra.mxu0 %v433
        %702 = vmatprep.subr.mxu0 0.0
        %703 = vmatpush1.msra.mxu0 %v434
        %704 = vmatprep.subr.mxu0 0.0
        %705 = vmatpush1.msra.mxu0 %v435
        %706 = vmatprep.subr.mxu0 0.0
        %707 = vmatpush1.msra.mxu0 %v436
        %708 = vmatprep.subr.mxu0 0.0
        %709 = vmatpush1.msra.mxu0 %v437
        %710 = vmatprep.subr.mxu0 0.0
        %711 = vmatpush1.msra.mxu0 %v438
        %712 = vmatprep.subr.mxu0 0.0
        %713 = vmatpush1.msra.mxu0 %v439
        %714 = vmatprep.subr.mxu0 0.0
        %715 = vmatpush1.msra.mxu0 %v440
        %716 = vmatprep.subr.mxu0 0.0
        %717 = vmatpush1.msra.mxu0 %v441
        %718 = vmatprep.subr.mxu0 0.0
        %719 = vmatpush1.msra.mxu0 %v442
        %720 = vmatprep.subr.mxu0 0.0
        %721 = vmatpush1.msra.mxu0 %v443
        %722 = vmatprep.subr.mxu0 0.0
        %723 = vmatpush1.msra.mxu0 %v444
        %724 = vmatprep.subr.mxu0 0.0
        %725 = vmatpush1.msra.mxu0 %v445
        %726 = vmatprep.subr.mxu0 0.0
        %727 = vmatpush1.msra.mxu0 %v446
        %728 = vmatprep.subr.mxu0 0.0
        %729 = vmatpush1.msra.mxu0 %v447
        %730 = vmatprep.subr.mxu0 0.0
        %731 = vmatpush1.msra.mxu0 %v448
        %732 = vmatprep.subr.mxu0 0.0
        %733 = vmatpush1.msra.mxu0 %v449
        %734 = vmatprep.subr.mxu0 0.0
        %735 = vmatpush1.msra.mxu0 %v450
        %736 = vmatprep.subr.mxu0 0.0
        %737 = vmatpush1.msra.mxu0 %v451
        %738 = vmatprep.subr.mxu0 0.0
        %739 = vmatpush1.msra.mxu0 %v452
        %740 = vmatprep.subr.mxu0 0.0
        %741 = vmatpush1.msra.mxu0 %v453
        %742 = vmatprep.subr.mxu0 0.0
        %743 = vmatpush1.msra.mxu0 %v454
        %744 = vmatprep.subr.mxu0 0.0
        %745 = vmatpush1.msra.mxu0 %v455
        %746 = vmatprep.subr.mxu0 0.0
        %747 = vmatpush1.msra.mxu0 %v456
        %748 = vmatprep.subr.mxu0 0.0
        %749 = vmatpush1.msra.mxu0 %v457
        %750 = vmatprep.mubr.f32.mxu0 %v241
        %751 = vmatmul.mubr.f32.gmra.mrb[0].mxu0 %v240
        %v752 = vpop.f32.mrb[0].mxu0
        %v753 = vadd.f32 0.0, %v752
        %v754 = vpop.f32.mrb[0].mxu0
        %755 = vmatprep.mubr.f32.mxu0 %v244
        %756 = vmatmul.mubr.f32.gmra.mrb[0].mxu0 %v243
        %v757 = vpop.f32.mrb[0].mxu0
        %v758 = vadd.f32 0.0, %v757
        %v759 = vpop.f32.mrb[0].mxu0
        %760 = vmatprep.mubr.f32.mxu0 %v247
        %761 = vmatmul.mubr.f32.gmra.mrb[0].mxu0 %v246
        %v762 = vpop.f32.mrb[0].mxu0
        %v763 = vadd.f32 0.0, %v762
        %v764 = vpop.f32.mrb[0].mxu0
        %765 = vmatprep.mubr.f32.mxu0 %v250
        %766 = vmatmul.mubr.f32.gmra.mrb[0].mxu0 %v249
        %v767 = vpop.f32.mrb[0].mxu0
        %v768 = vadd.f32 0.0, %v767
        %v769 = vpop.f32.mrb[0].mxu0
        %770 = vmatprep.mubr.f32.mxu0 %v253
        %771 = vmatmul.mubr.f32.gmra.mrb[0].mxu0 %v252
        %v772 = vpop.f32.mrb[0].mxu0
        %v773 = vadd.f32 0.0, %v772
        %v774 = vpop.f32.mrb[0].mxu0
        %775 = vdwg.mxu0
        %776 = vmatprep.subr.mxu0 0.0
        %777 = vmatpush1.msra.mxu0 %v458
        %778 = vmatprep.subr.mxu0 0.0
        %779 = vmatpush1.msra.mxu0 %v459
        %780 = vmatprep.subr.mxu0 0.0
        %781 = vmatpush1.msra.mxu0 %v460
        %782 = vmatprep.subr.mxu0 0.0
        %783 = vmatpush1.msra.mxu0 %v461
        %784 = vmatprep.subr.mxu0 0.0
        %785 = vmatpush1.msra.mxu0 %v462
        %786 = vmatprep.subr.mxu0 0.0
        %787 = vmatpush1.msra.mxu0 %v463
        %788 = vmatprep.subr.mxu0 0.0
        %789 = vmatpush1.msra.mxu0 %v464
        %790 = vmatprep.subr.mxu0 0.0
        %791 = vmatpush1.msra.mxu0 %v465
        %792 = vmatprep.subr.mxu0 0.0
        %793 = vmatpush1.msra.mxu0 %v466
        %794 = vmatprep.subr.mxu0 0.0
        %795 = vmatpush1.msra.mxu0 %v467
        %796 = vmatprep.subr.mxu0 0.0
        %797 = vmatpush1.msra.mxu0 %v468
        %798 = vmatprep.subr.mxu0 0.0
        %799 = vmatpush1.msra.mxu0 %v469
        %800 = vmatprep.subr.mxu0 0.0
        %801 = vmatpush1.msra.mxu0 %v470
        %802 = vmatprep.subr.mxu0 0.0
        %803 = vmatpush1.msra.mxu0 %v471
        %804 = vmatprep.subr.mxu0 0.0
        %805 = vmatpush1.msra.mxu0 %v472
        %806 = vmatprep.subr.mxu0 0.0
        %807 = vmatpush1.msra.mxu0 %v473
        %808 = vmatprep.subr.mxu0 0.0
        %809 = vmatpush1.msra.mxu0 0.0
        %810 = vmatprep.subr.mxu0 0.0
        %811 = vmatpush1.msra.mxu0 0.0
        %812 = vmatprep.subr.mxu0 0.0
        %813 = vmatpush1.msra.mxu0 0.0
        %814 = vmatprep.subr.mxu0 0.0
        %815 = vmatpush1.msra.mxu0 0.0
        %816 = vmatprep.subr.mxu0 0.0
        %817 = vmatpush1.msra.mxu0 0.0
        %818 = vmatprep.subr.mxu0 0.0
        %819 = vmatpush1.msra.mxu0 0.0
        %820 = vmatprep.subr.mxu0 0.0
        %821 = vmatpush1.msra.mxu0 0.0
        %822 = vmatprep.subr.mxu0 0.0
        %823 = vmatpush1.msra.mxu0 0.0
        %824 = vmatprep.subr.mxu0 0.0
        %825 = vmatpush1.msra.mxu0 0.0
        %826 = vmatprep.subr.mxu0 0.0
        %827 = vmatpush1.msra.mxu0 0.0
        %828 = vmatprep.subr.mxu0 0.0
        %829 = vmatpush1.msra.mxu0 0.0
        %830 = vmatprep.subr.mxu0 0.0
        %831 = vmatpush1.msra.mxu0 0.0
        %832 = vmatprep.subr.mxu0 0.0
        %833 = vmatpush1.msra.mxu0 0.0
        %834 = vmatprep.subr.mxu0 0.0
        %835 = vmatpush1.msra.mxu0 0.0
        %836 = vmatprep.subr.mxu0 0.0
        %837 = vmatpush1.msra.mxu0 0.0
        %838 = vmatprep.subr.mxu0 0.0
        %839 = vmatpush1.msra.mxu0 0.0
        %840 = vmatprep.mubr.f32.mxu0 0.0
        %841 = vmatmul.mubr.f32.gmra.mrb[0].mxu0 %v242
        %v842 = vpop.f32.mrb[0].mxu0
        %v843 = vadd.f32 %v753, %v842
        %v844 = vpop.f32.mrb[0].mxu0
        %845 = vmatprep.mubr.f32.mxu0 0.0
        %846 = vmatmul.mubr.f32.gmra.mrb[0].mxu0 %v245
        %v847 = vpop.f32.mrb[0].mxu0
        %v848 = vadd.f32 %v758, %v847
        %v849 = vpop.f32.mrb[0].mxu0
        %850 = vmatprep.mubr.f32.mxu0 0.0
        %851 = vmatmul.mubr.f32.gmra.mrb[0].mxu0 %v248
        %v852 = vpop.f32.mrb[0].mxu0
        %v853 = vadd.f32 %v763, %v852
        %v854 = vpop.f32.mrb[0].mxu0
        %855 = vmatprep.mubr.f32.mxu0 0.0
        %856 = vmatmul.mubr.f32.gmra.mrb[0].mxu0 %v251
        %v857 = vpop.f32.mrb[0].mxu0
        %v858 = vadd.f32 %v768, %v857
        %v859 = vpop.f32.mrb[0].mxu0
        %860 = vmatprep.mubr.f32.mxu0 0.0
        %861 = vmatmul.mubr.f32.gmra.mrb[0].mxu0 %v254
        %v862 = vpop.f32.mrb[0].mxu0
        %v863 = vadd.f32 %v773, %v862
        %v864 = vpop.f32.mrb[0].mxu0
        %865 = vdwg.mxu0
        %866 = vmatprep.subr.mxu0 0.0
        %867 = vmatpush1.msra.mxu0 %v622
        %868 = vmatprep.subr.mxu0 0.0
        %869 = vmatpush1.msra.mxu0 %v623
        %870 = vmatprep.subr.mxu0 0.0
        %871 = vmatpush1.msra.mxu0 %v624
        %872 = vmatprep.subr.mxu0 0.0
        %873 = vmatpush1.msra.mxu0 %v625
        %874 = vmatprep.subr.mxu0 0.0
        %875 = vmatpush1.msra.mxu0 %v626
        %876 = vmatprep.subr.mxu0 0.0
        %877 = vmatpush1.msra.mxu0 %v627
        %878 = vmatprep.subr.mxu0 0.0
        %879 = vmatpush1.msra.mxu0 %v628
        %880 = vmatprep.subr.mxu0 0.0
        %881 = vmatpush1.msra.mxu0 %v629
        %882 = vmatprep.subr.mxu0 0.0
        %883 = vmatpush1.msra.mxu0 %v630
        %884 = vmatprep.subr.mxu0 0.0
        %885 = vmatpush1.msra.mxu0 %v631
        %886 = vmatprep.subr.mxu0 0.0
        %887 = vmatpush1.msra.mxu0 %v632
        %888 = vmatprep.subr.mxu0 0.0
        %889 = vmatpush1.msra.mxu0 %v633
        %890 = vmatprep.subr.mxu0 0.0
        %891 = vmatpush1.msra.mxu0 %v634
        %892 = vmatprep.subr.mxu0 0.0
        %893 = vmatpush1.msra.mxu0 %v635
        %894 = vmatprep.subr.mxu0 0.0
        %895 = vmatpush1.msra.mxu0 %v636
        %896 = vmatprep.subr.mxu0 0.0
        %897 = vmatpush1.msra.mxu0 %v637
        %898 = vmatprep.subr.mxu0 0.0
        %899 = vmatpush1.msra.mxu0 %v638
        %900 = vmatprep.subr.mxu0 0.0
        %901 = vmatpush1.msra.mxu0 %v639
        %902 = vmatprep.subr.mxu0 0.0
        %903 = vmatpush1.msra.mxu0 %v640
        %904 = vmatprep.subr.mxu0 0.0
        %905 = vmatpush1.msra.mxu0 %v641
        %906 = vmatprep.subr.mxu0 0.0
        %907 = vmatpush1.msra.mxu0 %v642
        %908 = vmatprep.subr.mxu0 0.0
        %909 = vmatpush1.msra.mxu0 %v643
        %910 = vmatprep.subr.mxu0 0.0
        %911 = vmatpush1.msra.mxu0 %v644
        %912 = vmatprep.subr.mxu0 0.0
        %913 = vmatpush1.msra.mxu0 %v645
        %914 = vmatprep.subr.mxu0 0.0
        %915 = vmatpush1.msra.mxu0 %v646
        %916 = vmatprep.subr.mxu0 0.0
        %917 = vmatpush1.msra.mxu0 %v647
        %918 = vmatprep.subr.mxu0 0.0
        %919 = vmatpush1.msra.mxu0 %v648
        %920 = vmatprep.subr.mxu0 0.0
        %921 = vmatpush1.msra.mxu0 %v649
        %922 = vmatprep.subr.mxu0 0.0
        %923 = vmatpush1.msra.mxu0 %v650
        %924 = vmatprep.subr.mxu0 0.0
        %925 = vmatpush1.msra.mxu0 %v651
        %926 = vmatprep.subr.mxu0 0.0
        %927 = vmatpush1.msra.mxu0 %v652
        %928 = vmatprep.subr.mxu0 0.0
        %929 = vmatpush1.msra.mxu0 %v653
        %930 = vmatprep.mubr.f32.mxu0 %v256
        %931 = vmatmul.mubr.f32.gmra.mrb[0].mxu0 %v255
        %v932 = vpop.f32.mrb[0].mxu0
        %v933 = vadd.f32 0.0, %v932
        %v934 = vpop.f32.mrb[0].mxu0
        %935 = vmatprep.mubr.f32.mxu0 %v260
        %936 = vmatmul.mubr.f32.gmra.mrb[0].mxu0 %v259
        %v937 = vpop.f32.mrb[0].mxu0
        %v938 = vadd.f32 0.0, %v937
        %v939 = vpop.f32.mrb[0].mxu0
        %940 = vmatprep.mubr.f32.mxu0 %v264
        %941 = vmatmul.mubr.f32.gmra.mrb[0].mxu0 %v263
        %v942 = vpop.f32.mrb[0].mxu0
        %v943 = vadd.f32 0.0, %v942
        %v944 = vpop.f32.mrb[0].mxu0
        %945 = vmatprep.mubr.f32.mxu0 %v268
        %946 = vmatmul.mubr.f32.gmra.mrb[0].mxu0 %v267
        %v947 = vpop.f32.mrb[0].mxu0
        %v948 = vadd.f32 0.0, %v947
        %v949 = vpop.f32.mrb[0].mxu0
        %950 = vmatprep.mubr.f32.mxu0 %v272
        %951 = vmatmul.mubr.f32.gmra.mrb[0].mxu0 %v271
        %v952 = vpop.f32.mrb[0].mxu0
        %v953 = vadd.f32 0.0, %v952
        %v954 = vpop.f32.mrb[0].mxu0
        %955 = vdwg.mxu0
        %956 = vmatprep.subr.mxu0 0.0
        %957 = vmatpush1.msra.mxu0 %v654
        %958 = vmatprep.subr.mxu0 0.0
        %959 = vmatpush1.msra.mxu0 %v655
        %960 = vmatprep.subr.mxu0 0.0
        %961 = vmatpush1.msra.mxu0 %v656
        %962 = vmatprep.subr.mxu0 0.0
        %963 = vmatpush1.msra.mxu0 %v657
        %964 = vmatprep.subr.mxu0 0.0
        %965 = vmatpush1.msra.mxu0 %v658
        %966 = vmatprep.subr.mxu0 0.0
        %967 = vmatpush1.msra.mxu0 %v659
        %968 = vmatprep.subr.mxu0 0.0
        %969 = vmatpush1.msra.mxu0 %v660
        %970 = vmatprep.subr.mxu0 0.0
        %971 = vmatpush1.msra.mxu0 %v661
        %972 = vmatprep.subr.mxu0 0.0
        %973 = vmatpush1.msra.mxu0 %v662
        %974 = vmatprep.subr.mxu0 0.0
        %975 = vmatpush1.msra.mxu0 %v663
        %976 = vmatprep.subr.mxu0 0.0
        %977 = vmatpush1.msra.mxu0 %v664
        %978 = vmatprep.subr.mxu0 0.0
        %979 = vmatpush1.msra.mxu0 %v665
        %980 = vmatprep.subr.mxu0 0.0
        %981 = vmatpush1.msra.mxu0 %v666
        %982 = vmatprep.subr.mxu0 0.0
        %983 = vmatpush1.msra.mxu0 %v667
        %984 = vmatprep.subr.mxu0 0.0
        %985 = vmatpush1.msra.mxu0 %v668
        %986 = vmatprep.subr.mxu0 0.0
        %987 = vmatpush1.msra.mxu0 %v669
        %988 = vmatprep.subr.mxu0 0.0
        %989 = vmatpush1.msra.mxu0 %v670
        %990 = vmatprep.subr.mxu0 0.0
        %991 = vmatpush1.msra.mxu0 %v671
        %992 = vmatprep.subr.mxu0 0.0
        %993 = vmatpush1.msra.mxu0 %v672
        %994 = vmatprep.subr.mxu0 0.0
        %995 = vmatpush1.msra.mxu0 %v673
        %996 = vmatprep.subr.mxu0 0.0
        %997 = vmatpush1.msra.mxu0 %v674
        %998 = vmatprep.subr.mxu0 0.0
        %999 = vmatpush1.msra.mxu0 %v675
        %1000 = vmatprep.subr.mxu0 0.0
        %1001 = vmatpush1.msra.mxu0 %v676
        %1002 = vmatprep.subr.mxu0 0.0
        %1003 = vmatpush1.msra.mxu0 %v677
        %1004 = vmatprep.subr.mxu0 0.0
        %1005 = vmatpush1.msra.mxu0 %v678
        %1006 = vmatprep.subr.mxu0 0.0
        %1007 = vmatpush1.msra.mxu0 %v679
        %1008 = vmatprep.subr.mxu0 0.0
        %1009 = vmatpush1.msra.mxu0 %v680
        %1010 = vmatprep.subr.mxu0 0.0
        %1011 = vmatpush1.msra.mxu0 %v681
        %1012 = vmatprep.subr.mxu0 0.0
        %1013 = vmatpush1.msra.mxu0 %v682
        %1014 = vmatprep.subr.mxu0 0.0
        %1015 = vmatpush1.msra.mxu0 %v683
        %1016 = vmatprep.subr.mxu0 0.0
        %1017 = vmatpush1.msra.mxu0 %v684
        %1018 = vmatprep.subr.mxu0 0.0
        %1019 = vmatpush1.msra.mxu0 %v685
        %1020 = vmatprep.mubr.f32.mxu0 %v258
        %1021 = vmatmul.mubr.f32.gmra.mrb[0].mxu0 %v257
        %v1022 = vpop.f32.mrb[0].mxu0
        %v1023 = vadd.f32 %v933, %v1022
        %v1024 = vpop.f32.mrb[0].mxu0
        %1025 = vmatprep.mubr.f32.mxu0 %v262
        %1026 = vmatmul.mubr.f32.gmra.mrb[0].mxu0 %v261
        %v1027 = vpop.f32.mrb[0].mxu0
        %v1028 = vadd.f32 %v938, %v1027
        %v1029 = vpop.f32.mrb[0].mxu0
        %1030 = vmatprep.mubr.f32.mxu0 %v266
        %1031 = vmatmul.mubr.f32.gmra.mrb[0].mxu0 %v265
        %v1032 = vpop.f32.mrb[0].mxu0
        %v1033 = vadd.f32 %v943, %v1032
        %v1034 = vpop.f32.mrb[0].mxu0
        %1035 = vmatprep.mubr.f32.mxu0 %v270
        %1036 = vmatmul.mubr.f32.gmra.mrb[0].mxu0 %v269
        %v1037 = vpop.f32.mrb[0].mxu0
        %v1038 = vadd.f32 %v948, %v1037
        %v1039 = vpop.f32.mrb[0].mxu0
        %1040 = vmatprep.mubr.f32.mxu0 %v274
        %1041 = vmatmul.mubr.f32.gmra.mrb[0].mxu0 %v273
        %v1042 = vpop.f32.mrb[0].mxu0
        %v1043 = vadd.f32 %v953, %v1042
        %v1044 = vpop.f32.mrb[0].mxu0
        %1045 = vdwg.mxu0
        %v1046 = vmul.f32 %v843, %v1023
        %v1047 = vmul.f32 %v848, %v1028
        %v1048 = vmul.f32 %v853, %v1033
        %v1049 = vmul.f32 %v858, %v1038
        %v1050 = vmul.f32 %v863, %v1043
        %v1051 = vadd.f32 %v1046, %v1047
        %v1052 = vadd.f32 %v1051, %v1048
        %v1053 = vadd.f32 %v1052, %v1049
        %v1054 = vadd.f32 %v1053, %v1050
        %v1055 = vrot.slane %v1054, 4
        %v1056 = vadd.f32 %v1054, %v1055
        %v1057 = vrot.slane %v1056, 2
        %v1058 = vadd.f32 %v1056, %v1057
        %v1059 = vrot.slane %v1058, 1
        %v1060 = vadd.f32 %v1058, %v1059
        %v1061 = vmax.f32 %v1060, 0.0
        %v1062 = vmin.f32 %v1061, 5.0
        %1063 = vst [vmem:[%s239] sm:$0x1] %v1062
        %v1064 = vld [vmem:[%s231 + $0x1] sm:$0x1]
        %v1065 = vld [vmem:[%s235 + $0x1] sm:$0x1]
        %v1066 = vlaneseq
        %v1067 = vshrl.u32 %v1066, 7
        %v1068 = vsub.s32 0, %v1067
        %v1069 = vrot.slane %v1064, %v1068
        %vm1070 = vcmp.eq.s32.totalorder %v278, %v1069
        %vm1071 = vcmp.eq.s32.totalorder %v279, %v1069
        %vm1072 = vcmp.eq.s32.totalorder %v280, %v1069
        %vm1073 = vcmp.eq.s32.totalorder %v281, %v1069
        %vm1074 = vcmp.eq.s32.totalorder %v282, %v1069
        %vm1075 = vcmp.eq.s32.totalorder %v283, %v1069
        %vm1076 = vcmp.eq.s32.totalorder %v284, %v1069
        %vm1077 = vcmp.eq.s32.totalorder %v285, %v1069
        %vm1078 = vcmp.eq.s32.totalorder %v286, %v1069
        %vm1079 = vcmp.eq.s32.totalorder %v287, %v1069
        %vm1080 = vcmp.eq.s32.totalorder %v288, %v1069
        %vm1081 = vcmp.eq.s32.totalorder %v289, %v1069
        %vm1082 = vcmp.eq.s32.totalorder %v290, %v1069
        %vm1083 = vcmp.eq.s32.totalorder %v291, %v1069
        %vm1084 = vcmp.eq.s32.totalorder %v292, %v1069
        %vm1085 = vcmp.eq.s32.totalorder %v293, %v1069
        %vm1086 = vcmp.eq.s32.totalorder %v294, %v1069
        %vm1087 = vcmp.eq.s32.totalorder %v295, %v1069
        %vm1088 = vcmp.eq.s32.totalorder %v296, %v1069
        %vm1089 = vcmp.eq.s32.totalorder %v297, %v1069
        %vm1090 = vcmp.eq.s32.totalorder %v298, %v1069
        %vm1091 = vcmp.eq.s32.totalorder %v299, %v1069
        %vm1092 = vcmp.eq.s32.totalorder %v300, %v1069
        %vm1093 = vcmp.eq.s32.totalorder %v301, %v1069
        %vm1094 = vcmp.eq.s32.totalorder %v302, %v1069
        %vm1095 = vcmp.eq.s32.totalorder %v303, %v1069
        %vm1096 = vcmp.eq.s32.totalorder %v304, %v1069
        %vm1097 = vcmp.eq.s32.totalorder %v305, %v1069
        %vm1098 = vcmp.eq.s32.totalorder %v306, %v1069
        %vm1099 = vcmp.eq.s32.totalorder %v307, %v1069
        %vm1100 = vcmp.eq.s32.totalorder %v308, %v1069
        %vm1101 = vcmp.eq.s32.totalorder %v309, %v1069
        %vm1102 = vcmp.eq.s32.totalorder %v310, %v1069
        %vm1103 = vcmp.eq.s32.totalorder %v311, %v1069
        %vm1104 = vcmp.eq.s32.totalorder %v312, %v1069
        %vm1105 = vcmp.eq.s32.totalorder %v313, %v1069
        %vm1106 = vcmp.eq.s32.totalorder %v314, %v1069
        %vm1107 = vcmp.eq.s32.totalorder %v315, %v1069
        %vm1108 = vcmp.eq.s32.totalorder %v316, %v1069
        %vm1109 = vcmp.eq.s32.totalorder %v317, %v1069
        %vm1110 = vcmp.eq.s32.totalorder %v318, %v1069
        %vm1111 = vcmp.eq.s32.totalorder %v319, %v1069
        %vm1112 = vcmp.eq.s32.totalorder %v320, %v1069
        %vm1113 = vcmp.eq.s32.totalorder %v321, %v1069
        %vm1114 = vcmp.eq.s32.totalorder %v322, %v1069
        %vm1115 = vcmp.eq.s32.totalorder %v323, %v1069
        %vm1116 = vcmp.eq.s32.totalorder %v324, %v1069
        %vm1117 = vcmp.eq.s32.totalorder %v325, %v1069
        %v1118 = vsel %vm1070, 1, 0
        %v1119 = vsel %vm1071, 1, 0
        %v1120 = vsel %vm1072, 1, 0
        %v1121 = vsel %vm1073, 1, 0
        %v1122 = vsel %vm1074, 1, 0
        %v1123 = vsel %vm1075, 1, 0
        %v1124 = vsel %vm1076, 1, 0
        %v1125 = vsel %vm1077, 1, 0
        %v1126 = vsel %vm1078, 1, 0
        %v1127 = vsel %vm1079, 1, 0
        %v1128 = vsel %vm1080, 1, 0
        %v1129 = vsel %vm1081, 1, 0
        %v1130 = vsel %vm1082, 1, 0
        %v1131 = vsel %vm1083, 1, 0
        %v1132 = vsel %vm1084, 1, 0
        %v1133 = vsel %vm1085, 1, 0
        %v1134 = vsel %vm1086, 1, 0
        %v1135 = vsel %vm1087, 1, 0
        %v1136 = vsel %vm1088, 1, 0
        %v1137 = vsel %vm1089, 1, 0
        %v1138 = vsel %vm1090, 1, 0
        %v1139 = vsel %vm1091, 1, 0
        %v1140 = vsel %vm1092, 1, 0
        %v1141 = vsel %vm1093, 1, 0
        %v1142 = vsel %vm1094, 1, 0
        %v1143 = vsel %vm1095, 1, 0
        %v1144 = vsel %vm1096, 1, 0
        %v1145 = vsel %vm1097, 1, 0
        %v1146 = vsel %vm1098, 1, 0
        %v1147 = vsel %vm1099, 1, 0
        %v1148 = vsel %vm1100, 1, 0
        %v1149 = vsel %vm1101, 1, 0
        %v1150 = vsel %vm1102, 1, 0
        %v1151 = vsel %vm1103, 1, 0
        %v1152 = vsel %vm1104, 1, 0
        %v1153 = vsel %vm1105, 1, 0
        %v1154 = vsel %vm1106, 1, 0
        %v1155 = vsel %vm1107, 1, 0
        %v1156 = vsel %vm1108, 1, 0
        %v1157 = vsel %vm1109, 1, 0
        %v1158 = vsel %vm1110, 1, 0
        %v1159 = vsel %vm1111, 1, 0
        %v1160 = vsel %vm1112, 1, 0
        %v1161 = vsel %vm1113, 1, 0
        %v1162 = vsel %vm1114, 1, 0
        %v1163 = vsel %vm1115, 1, 0
        %v1164 = vsel %vm1116, 1, 0
        %v1165 = vsel %vm1117, 1, 0
        %v1166 = vcvt.s32.f32 %v1118
        %v1167 = vcvt.s32.f32 %v1119
        %v1168 = vcvt.s32.f32 %v1120
        %v1169 = vcvt.s32.f32 %v1121
        %v1170 = vcvt.s32.f32 %v1122
        %v1171 = vcvt.s32.f32 %v1123
        %v1172 = vcvt.s32.f32 %v1124
        %v1173 = vcvt.s32.f32 %v1125
        %v1174 = vcvt.s32.f32 %v1126
        %v1175 = vcvt.s32.f32 %v1127
        %v1176 = vcvt.s32.f32 %v1128
        %v1177 = vcvt.s32.f32 %v1129
        %v1178 = vcvt.s32.f32 %v1130
        %v1179 = vcvt.s32.f32 %v1131
        %v1180 = vcvt.s32.f32 %v1132
        %v1181 = vcvt.s32.f32 %v1133
        %v1182 = vcvt.s32.f32 %v1134
        %v1183 = vcvt.s32.f32 %v1135
        %v1184 = vcvt.s32.f32 %v1136
        %v1185 = vcvt.s32.f32 %v1137
        %v1186 = vcvt.s32.f32 %v1138
        %v1187 = vcvt.s32.f32 %v1139
        %v1188 = vcvt.s32.f32 %v1140
        %v1189 = vcvt.s32.f32 %v1141
        %v1190 = vcvt.s32.f32 %v1142
        %v1191 = vcvt.s32.f32 %v1143
        %v1192 = vcvt.s32.f32 %v1144
        %v1193 = vcvt.s32.f32 %v1145
        %v1194 = vcvt.s32.f32 %v1146
        %v1195 = vcvt.s32.f32 %v1147
        %v1196 = vcvt.s32.f32 %v1148
        %v1197 = vcvt.s32.f32 %v1149
        %v1198 = vcvt.s32.f32 %v1150
        %v1199 = vcvt.s32.f32 %v1151
        %v1200 = vcvt.s32.f32 %v1152
        %v1201 = vcvt.s32.f32 %v1153
        %v1202 = vcvt.s32.f32 %v1154
        %v1203 = vcvt.s32.f32 %v1155
        %v1204 = vcvt.s32.f32 %v1156
        %v1205 = vcvt.s32.f32 %v1157
        %v1206 = vcvt.s32.f32 %v1158
        %v1207 = vcvt.s32.f32 %v1159
        %v1208 = vcvt.s32.f32 %v1160
        %v1209 = vcvt.s32.f32 %v1161
        %v1210 = vcvt.s32.f32 %v1162
        %v1211 = vcvt.s32.f32 %v1163
        %v1212 = vcvt.s32.f32 %v1164
        %v1213 = vcvt.s32.f32 %v1165
        %v1214 = vlaneseq
        %v1215 = vshrl.u32 %v1214, 7
        %v1216 = vsub.s32 0, %v1215
        %v1217 = vrot.slane %v1065, %v1216
        %vm1218 = vcmp.eq.s32.totalorder %v278, %v1217
        %vm1219 = vcmp.eq.s32.totalorder %v279, %v1217
        %vm1220 = vcmp.eq.s32.totalorder %v280, %v1217
        %vm1221 = vcmp.eq.s32.totalorder %v281, %v1217
        %vm1222 = vcmp.eq.s32.totalorder %v282, %v1217
        %vm1223 = vcmp.eq.s32.totalorder %v283, %v1217
        %vm1224 = vcmp.eq.s32.totalorder %v284, %v1217
        %vm1225 = vcmp.eq.s32.totalorder %v285, %v1217
        %vm1226 = vcmp.eq.s32.totalorder %v286, %v1217
        %vm1227 = vcmp.eq.s32.totalorder %v287, %v1217
        %vm1228 = vcmp.eq.s32.totalorder %v288, %v1217
        %vm1229 = vcmp.eq.s32.totalorder %v289, %v1217
        %vm1230 = vcmp.eq.s32.totalorder %v290, %v1217
        %vm1231 = vcmp.eq.s32.totalorder %v291, %v1217
        %vm1232 = vcmp.eq.s32.totalorder %v292, %v1217
        %vm1233 = vcmp.eq.s32.totalorder %v293, %v1217
        %vm1234 = vcmp.eq.s32.totalorder %v294, %v1217
        %vm1235 = vcmp.eq.s32.totalorder %v295, %v1217
        %vm1236 = vcmp.eq.s32.totalorder %v296, %v1217
        %vm1237 = vcmp.eq.s32.totalorder %v297, %v1217
        %vm1238 = vcmp.eq.s32.totalorder %v298, %v1217
        %vm1239 = vcmp.eq.s32.totalorder %v299, %v1217
        %vm1240 = vcmp.eq.s32.totalorder %v300, %v1217
        %vm1241 = vcmp.eq.s32.totalorder %v301, %v1217
        %vm1242 = vcmp.eq.s32.totalorder %v302, %v1217
        %vm1243 = vcmp.eq.s32.totalorder %v303, %v1217
        %vm1244 = vcmp.eq.s32.totalorder %v304, %v1217
        %vm1245 = vcmp.eq.s32.totalorder %v305, %v1217
        %vm1246 = vcmp.eq.s32.totalorder %v306, %v1217
        %vm1247 = vcmp.eq.s32.totalorder %v307, %v1217
        %vm1248 = vcmp.eq.s32.totalorder %v308, %v1217
        %vm1249 = vcmp.eq.s32.totalorder %v309, %v1217
        %vm1250 = vcmp.eq.s32.totalorder %v310, %v1217
        %vm1251 = vcmp.eq.s32.totalorder %v311, %v1217
        %vm1252 = vcmp.eq.s32.totalorder %v312, %v1217
        %vm1253 = vcmp.eq.s32.totalorder %v313, %v1217
        %vm1254 = vcmp.eq.s32.totalorder %v314, %v1217
        %vm1255 = vcmp.eq.s32.totalorder %v315, %v1217
        %vm1256 = vcmp.eq.s32.totalorder %v316, %v1217
        %vm1257 = vcmp.eq.s32.totalorder %v317, %v1217
        %vm1258 = vcmp.eq.s32.totalorder %v318, %v1217
        %vm1259 = vcmp.eq.s32.totalorder %v319, %v1217
        %vm1260 = vcmp.eq.s32.totalorder %v320, %v1217
        %vm1261 = vcmp.eq.s32.totalorder %v321, %v1217
        %vm1262 = vcmp.eq.s32.totalorder %v322, %v1217
        %vm1263 = vcmp.eq.s32.totalorder %v323, %v1217
        %vm1264 = vcmp.eq.s32.totalorder %v324, %v1217
        %vm1265 = vcmp.eq.s32.totalorder %v325, %v1217
        %vm1266 = vcmp.eq.s32.totalorder %v474, %v1217
        %vm1267 = vcmp.eq.s32.totalorder %v475, %v1217
        %vm1268 = vcmp.eq.s32.totalorder %v476, %v1217
        %vm1269 = vcmp.eq.s32.totalorder %v477, %v1217
        %vm1270 = vcmp.eq.s32.totalorder %v478, %v1217
        %vm1271 = vcmp.eq.s32.totalorder %v479, %v1217
        %vm1272 = vcmp.eq.s32.totalorder %v480, %v1217
        %vm1273 = vcmp.eq.s32.totalorder %v481, %v1217
        %vm1274 = vcmp.eq.s32.totalorder %v482, %v1217
        %vm1275 = vcmp.eq.s32.totalorder %v483, %v1217
        %vm1276 = vcmp.eq.s32.totalorder %v484, %v1217
        %vm1277 = vcmp.eq.s32.totalorder %v485, %v1217
        %vm1278 = vcmp.eq.s32.totalorder %v486, %v1217
        %vm1279 = vcmp.eq.s32.totalorder %v487, %v1217
        %vm1280 = vcmp.eq.s32.totalorder %v488, %v1217
        %vm1281 = vcmp.eq.s32.totalorder %v489, %v1217
        %v1282 = vsel %vm1218, 1, 0
        %v1283 = vsel %vm1219, 1, 0
        %v1284 = vsel %vm1220, 1, 0
        %v1285 = vsel %vm1221, 1, 0
        %v1286 = vsel %vm1222, 1, 0
        %v1287 = vsel %vm1223, 1, 0
        %v1288 = vsel %vm1224, 1, 0
        %v1289 = vsel %vm1225, 1, 0
        %v1290 = vsel %vm1226, 1, 0
        %v1291 = vsel %vm1227, 1, 0
        %v1292 = vsel %vm1228, 1, 0
        %v1293 = vsel %vm1229, 1, 0
        %v1294 = vsel %vm1230, 1, 0
        %v1295 = vsel %vm1231, 1, 0
        %v1296 = vsel %vm1232, 1, 0
        %v1297 = vsel %vm1233, 1, 0
        %v1298 = vsel %vm1234, 1, 0
        %v1299 = vsel %vm1235, 1, 0
        %v1300 = vsel %vm1236, 1, 0
        %v1301 = vsel %vm1237, 1, 0
        %v1302 = vsel %vm1238, 1, 0
        %v1303 = vsel %vm1239, 1, 0
        %v1304 = vsel %vm1240, 1, 0
        %v1305 = vsel %vm1241, 1, 0
        %v1306 = vsel %vm1242, 1, 0
        %v1307 = vsel %vm1243, 1, 0
        %v1308 = vsel %vm1244, 1, 0
        %v1309 = vsel %vm1245, 1, 0
        %v1310 = vsel %vm1246, 1, 0
        %v1311 = vsel %vm1247, 1, 0
        %v1312 = vsel %vm1248, 1, 0
        %v1313 = vsel %vm1249, 1, 0
        %v1314 = vsel %vm1250, 1, 0
        %v1315 = vsel %vm1251, 1, 0
        %v1316 = vsel %vm1252, 1, 0
        %v1317 = vsel %vm1253, 1, 0
        %v1318 = vsel %vm1254, 1, 0
        %v1319 = vsel %vm1255, 1, 0
        %v1320 = vsel %vm1256, 1, 0
        %v1321 = vsel %vm1257, 1, 0
        %v1322 = vsel %vm1258, 1, 0
        %v1323 = vsel %vm1259, 1, 0
        %v1324 = vsel %vm1260, 1, 0
        %v1325 = vsel %vm1261, 1, 0
        %v1326 = vsel %vm1262, 1, 0
        %v1327 = vsel %vm1263, 1, 0
        %v1328 = vsel %vm1264, 1, 0
        %v1329 = vsel %vm1265, 1, 0
        %v1330 = vsel %vm1266, 1, 0
        %v1331 = vsel %vm1267, 1, 0
        %v1332 = vsel %vm1268, 1, 0
        %v1333 = vsel %vm1269, 1, 0
        %v1334 = vsel %vm1270, 1, 0
        %v1335 = vsel %vm1271, 1, 0
        %v1336 = vsel %vm1272, 1, 0
        %v1337 = vsel %vm1273, 1, 0
        %v1338 = vsel %vm1274, 1, 0
        %v1339 = vsel %vm1275, 1, 0
        %v1340 = vsel %vm1276, 1, 0
        %v1341 = vsel %vm1277, 1, 0
        %v1342 = vsel %vm1278, 1, 0
        %v1343 = vsel %vm1279, 1, 0
        %v1344 = vsel %vm1280, 1, 0
        %v1345 = vsel %vm1281, 1, 0
        %v1346 = vcvt.s32.f32 %v1282
        %v1347 = vcvt.s32.f32 %v1283
        %v1348 = vcvt.s32.f32 %v1284
        %v1349 = vcvt.s32.f32 %v1285
        %v1350 = vcvt.s32.f32 %v1286
        %v1351 = vcvt.s32.f32 %v1287
        %v1352 = vcvt.s32.f32 %v1288
        %v1353 = vcvt.s32.f32 %v1289
        %v1354 = vcvt.s32.f32 %v1290
        %v1355 = vcvt.s32.f32 %v1291
        %v1356 = vcvt.s32.f32 %v1292
        %v1357 = vcvt.s32.f32 %v1293
        %v1358 = vcvt.s32.f32 %v1294
        %v1359 = vcvt.s32.f32 %v1295
        %v1360 = vcvt.s32.f32 %v1296
        %v1361 = vcvt.s32.f32 %v1297
        %v1362 = vcvt.s32.f32 %v1298
        %v1363 = vcvt.s32.f32 %v1299
        %v1364 = vcvt.s32.f32 %v1300
        %v1365 = vcvt.s32.f32 %v1301
        %v1366 = vcvt.s32.f32 %v1302
        %v1367 = vcvt.s32.f32 %v1303
        %v1368 = vcvt.s32.f32 %v1304
        %v1369 = vcvt.s32.f32 %v1305
        %v1370 = vcvt.s32.f32 %v1306
        %v1371 = vcvt.s32.f32 %v1307
        %v1372 = vcvt.s32.f32 %v1308
        %v1373 = vcvt.s32.f32 %v1309
        %v1374 = vcvt.s32.f32 %v1310
        %v1375 = vcvt.s32.f32 %v1311
        %v1376 = vcvt.s32.f32 %v1312
        %v1377 = vcvt.s32.f32 %v1313
        %v1378 = vcvt.s32.f32 %v1314
        %v1379 = vcvt.s32.f32 %v1315
        %v1380 = vcvt.s32.f32 %v1316
        %v1381 = vcvt.s32.f32 %v1317
        %v1382 = vcvt.s32.f32 %v1318
        %v1383 = vcvt.s32.f32 %v1319
        %v1384 = vcvt.s32.f32 %v1320
        %v1385 = vcvt.s32.f32 %v1321
        %v1386 = vcvt.s32.f32 %v1322
        %v1387 = vcvt.s32.f32 %v1323
        %v1388 = vcvt.s32.f32 %v1324
        %v1389 = vcvt.s32.f32 %v1325
        %v1390 = vcvt.s32.f32 %v1326
        %v1391 = vcvt.s32.f32 %v1327
        %v1392 = vcvt.s32.f32 %v1328
        %v1393 = vcvt.s32.f32 %v1329
        %v1394 = vcvt.s32.f32 %v1330
        %v1395 = vcvt.s32.f32 %v1331
        %v1396 = vcvt.s32.f32 %v1332
        %v1397 = vcvt.s32.f32 %v1333
        %v1398 = vcvt.s32.f32 %v1334
        %v1399 = vcvt.s32.f32 %v1335
        %v1400 = vcvt.s32.f32 %v1336
        %v1401 = vcvt.s32.f32 %v1337
        %v1402 = vcvt.s32.f32 %v1338
        %v1403 = vcvt.s32.f32 %v1339
        %v1404 = vcvt.s32.f32 %v1340
        %v1405 = vcvt.s32.f32 %v1341
        %v1406 = vcvt.s32.f32 %v1342
        %v1407 = vcvt.s32.f32 %v1343
        %v1408 = vcvt.s32.f32 %v1344
        %v1409 = vcvt.s32.f32 %v1345
        %1410 = vmatprep.subr.mxu0 0.0
        %1411 = vmatpush1.msra.mxu0 %v1166
        %1412 = vmatprep.subr.mxu0 0.0
        %1413 = vmatpush1.msra.mxu0 %v1167
        %1414 = vmatprep.subr.mxu0 0.0
        %1415 = vmatpush1.msra.mxu0 %v1168
        %1416 = vmatprep.subr.mxu0 0.0
        %1417 = vmatpush1.msra.mxu0 %v1169
        %1418 = vmatprep.subr.mxu0 0.0
        %1419 = vmatpush1.msra.mxu0 %v1170
        %1420 = vmatprep.subr.mxu0 0.0
        %1421 = vmatpush1.msra.mxu0 %v1171
        %1422 = vmatprep.subr.mxu0 0.0
        %1423 = vmatpush1.msra.mxu0 %v1172
        %1424 = vmatprep.subr.mxu0 0.0
        %1425 = vmatpush1.msra.mxu0 %v1173
        %1426 = vmatprep.subr.mxu0 0.0
        %1427 = vmatpush1.msra.mxu0 %v1174
        %1428 = vmatprep.subr.mxu0 0.0
        %1429 = vmatpush1.msra.mxu0 %v1175
        %1430 = vmatprep.subr.mxu0 0.0
        %1431 = vmatpush1.msra.mxu0 %v1176
        %1432 = vmatprep.subr.mxu0 0.0
        %1433 = vmatpush1.msra.mxu0 %v1177
        %1434 = vmatprep.subr.mxu0 0.0
        %1435 = vmatpush1.msra.mxu0 %v1178
        %1436 = vmatprep.subr.mxu0 0.0
        %1437 = vmatpush1.msra.mxu0 %v1179
        %1438 = vmatprep.subr.mxu0 0.0
        %1439 = vmatpush1.msra.mxu0 %v1180
        %1440 = vmatprep.subr.mxu0 0.0
        %1441 = vmatpush1.msra.mxu0 %v1181
        %1442 = vmatprep.subr.mxu0 0.0
        %1443 = vmatpush1.msra.mxu0 %v1182
        %1444 = vmatprep.subr.mxu0 0.0
        %1445 = vmatpush1.msra.mxu0 %v1183
        %1446 = vmatprep.subr.mxu0 0.0
        %1447 = vmatpush1.msra.mxu0 %v1184
        %1448 = vmatprep.subr.mxu0 0.0
        %1449 = vmatpush1.msra.mxu0 %v1185
        %1450 = vmatprep.subr.mxu0 0.0
        %1451 = vmatpush1.msra.mxu0 %v1186
        %1452 = vmatprep.subr.mxu0 0.0
        %1453 = vmatpush1.msra.mxu0 %v1187
        %1454 = vmatprep.subr.mxu0 0.0
        %1455 = vmatpush1.msra.mxu0 %v1188
        %1456 = vmatprep.subr.mxu0 0.0
        %1457 = vmatpush1.msra.mxu0 %v1189
        %1458 = vmatprep.subr.mxu0 0.0
        %1459 = vmatpush1.msra.mxu0 %v1190
        %1460 = vmatprep.subr.mxu0 0.0
        %1461 = vmatpush1.msra.mxu0 %v1191
        %1462 = vmatprep.subr.mxu0 0.0
        %1463 = vmatpush1.msra.mxu0 %v1192
        %1464 = vmatprep.subr.mxu0 0.0
        %1465 = vmatpush1.msra.mxu0 %v1193
        %1466 = vmatprep.subr.mxu0 0.0
        %1467 = vmatpush1.msra.mxu0 %v1194
        %1468 = vmatprep.subr.mxu0 0.0
        %1469 = vmatpush1.msra.mxu0 %v1195
        %1470 = vmatprep.subr.mxu0 0.0
        %1471 = vmatpush1.msra.mxu0 %v1196
        %1472 = vmatprep.subr.mxu0 0.0
        %1473 = vmatpush1.msra.mxu0 %v1197
        %1474 = vmatprep.mubr.f32.mxu0 %v241
        %1475 = vmatmul.mubr.f32.gmra.mrb[0].mxu0 %v240
        %v1476 = vpop.f32.mrb[0].mxu0
        %v1477 = vadd.f32 0.0, %v1476
        %v1478 = vpop.f32.mrb[0].mxu0
        %1479 = vmatprep.mubr.f32.mxu0 %v244
        %1480 = vmatmul.mubr.f32.gmra.mrb[0].mxu0 %v243
        %v1481 = vpop.f32.mrb[0].mxu0
        %v1482 = vadd.f32 0.0, %v1481
        %v1483 = vpop.f32.mrb[0].mxu0
        %1484 = vmatprep.mubr.f32.mxu0 %v247
        %1485 = vmatmul.mubr.f32.gmra.mrb[0].mxu0 %v246
        %v1486 = vpop.f32.mrb[0].mxu0
        %v1487 = vadd.f32 0.0, %v1486
        %v1488 = vpop.f32.mrb[0].mxu0
        %1489 = vmatprep.mubr.f32.mxu0 %v250
        %1490 = vmatmul.mubr.f32.gmra.mrb[0].mxu0 %v249
        %v1491 = vpop.f32.mrb[0].mxu0
        %v1492 = vadd.f32 0.0, %v1491
        %v1493 = vpop.f32.mrb[0].mxu0
        %1494 = vmatprep.mubr.f32.mxu0 %v253
        %1495 = vmatmul.mubr.f32.gmra.mrb[0].mxu0 %v252
        %v1496 = vpop.f32.mrb[0].mxu0
        %v1497 = vadd.f32 0.0, %v1496
        %v1498 = vpop.f32.mrb[0].mxu0
        %1499 = vdwg.mxu0
        %1500 = vmatprep.subr.mxu0 0.0
        %1501 = vmatpush1.msra.mxu0 %v1198
        %1502 = vmatprep.subr.mxu0 0.0
        %1503 = vmatpush1.msra.mxu0 %v1199
        %1504 = vmatprep.subr.mxu0 0.0
        %1505 = vmatpush1.msra.mxu0 %v1200
        %1506 = vmatprep.subr.mxu0 0.0
        %1507 = vmatpush1.msra.mxu0 %v1201
        %1508 = vmatprep.subr.mxu0 0.0
        %1509 = vmatpush1.msra.mxu0 %v1202
        %1510 = vmatprep.subr.mxu0 0.0
        %1511 = vmatpush1.msra.mxu0 %v1203
        %1512 = vmatprep.subr.mxu0 0.0
        %1513 = vmatpush1.msra.mxu0 %v1204
        %1514 = vmatprep.subr.mxu0 0.0
        %1515 = vmatpush1.msra.mxu0 %v1205
        %1516 = vmatprep.subr.mxu0 0.0
        %1517 = vmatpush1.msra.mxu0 %v1206
        %1518 = vmatprep.subr.mxu0 0.0
        %1519 = vmatpush1.msra.mxu0 %v1207
        %1520 = vmatprep.subr.mxu0 0.0
        %1521 = vmatpush1.msra.mxu0 %v1208
        %1522 = vmatprep.subr.mxu0 0.0
        %1523 = vmatpush1.msra.mxu0 %v1209
        %1524 = vmatprep.subr.mxu0 0.0
        %1525 = vmatpush1.msra.mxu0 %v1210
        %1526 = vmatprep.subr.mxu0 0.0
        %1527 = vmatpush1.msra.mxu0 %v1211
        %1528 = vmatprep.subr.mxu0 0.0
        %1529 = vmatpush1.msra.mxu0 %v1212
        %1530 = vmatprep.subr.mxu0 0.0
        %1531 = vmatpush1.msra.mxu0 %v1213
        %1532 = vmatprep.subr.mxu0 0.0
        %1533 = vmatpush1.msra.mxu0 0.0
        %1534 = vmatprep.subr.mxu0 0.0
        %1535 = vmatpush1.msra.mxu0 0.0
        %1536 = vmatprep.subr.mxu0 0.0
        %1537 = vmatpush1.msra.mxu0 0.0
        %1538 = vmatprep.subr.mxu0 0.0
        %1539 = vmatpush1.msra.mxu0 0.0
        %1540 = vmatprep.subr.mxu0 0.0
        %1541 = vmatpush1.msra.mxu0 0.0
        %1542 = vmatprep.subr.mxu0 0.0
        %1543 = vmatpush1.msra.mxu0 0.0
        %1544 = vmatprep.subr.mxu0 0.0
        %1545 = vmatpush1.msra.mxu0 0.0
        %1546 = vmatprep.subr.mxu0 0.0
        %1547 = vmatpush1.msra.mxu0 0.0
        %1548 = vmatprep.subr.mxu0 0.0
        %1549 = vmatpush1.msra.mxu0 0.0
        %1550 = vmatprep.subr.mxu0 0.0
        %1551 = vmatpush1.msra.mxu0 0.0
        %1552 = vmatprep.subr.mxu0 0.0
        %1553 = vmatpush1.msra.mxu0 0.0
        %1554 = vmatprep.subr.mxu0 0.0
        %1555 = vmatpush1.msra.mxu0 0.0
        %1556 = vmatprep.subr.mxu0 0.0
        %1557 = vmatpush1.msra.mxu0 0.0
        %1558 = vmatprep.subr.mxu0 0.0
        %1559 = vmatpush1.msra.mxu0 0.0
        %1560 = vmatprep.subr.mxu0 0.0
        %1561 = vmatpush1.msra.mxu0 0.0
        %1562 = vmatprep.subr.mxu0 0.0
        %1563 = vmatpush1.msra.mxu0 0.0
        %1564 = vmatprep.mubr.f32.mxu0 0.0
        %1565 = vmatmul.mubr.f32.gmra.mrb[0].mxu0 %v242
        %v1566 = vpop.f32.mrb[0].mxu0
        %v1567 = vadd.f32 %v1477, %v1566
        %v1568 = vpop.f32.mrb[0].mxu0
        %1569 = vmatprep.mubr.f32.mxu0 0.0
        %1570 = vmatmul.mubr.f32.gmra.mrb[0].mxu0 %v245
        %v1571 = vpop.f32.mrb[0].mxu0
        %v1572 = vadd.f32 %v1482, %v1571
        %v1573 = vpop.f32.mrb[0].mxu0
        %1574 = vmatprep.mubr.f32.mxu0 0.0
        %1575 = vmatmul.mubr.f32.gmra.mrb[0].mxu0 %v248
        %v1576 = vpop.f32.mrb[0].mxu0
        %v1577 = vadd.f32 %v1487, %v1576
        %v1578 = vpop.f32.mrb[0].mxu0
        %1579 = vmatprep.mubr.f32.mxu0 0.0
        %1580 = vmatmul.mubr.f32.gmra.mrb[0].mxu0 %v251
        %v1581 = vpop.f32.mrb[0].mxu0
        %v1582 = vadd.f32 %v1492, %v1581
        %v1583 = vpop.f32.mrb[0].mxu0
        %1584 = vmatprep.mubr.f32.mxu0 0.0
        %1585 = vmatmul.mubr.f32.gmra.mrb[0].mxu0 %v254
        %v1586 = vpop.f32.mrb[0].mxu0
        %v1587 = vadd.f32 %v1497, %v1586
        %v1588 = vpop.f32.mrb[0].mxu0
        %1589 = vdwg.mxu0
        %1590 = vmatprep.subr.mxu0 0.0
        %1591 = vmatpush1.msra.mxu0 %v1346
        %1592 = vmatprep.subr.mxu0 0.0
        %1593 = vmatpush1.msra.mxu0 %v1347
        %1594 = vmatprep.subr.mxu0 0.0
        %1595 = vmatpush1.msra.mxu0 %v1348
        %1596 = vmatprep.subr.mxu0 0.0
        %1597 = vmatpush1.msra.mxu0 %v1349
        %1598 = vmatprep.subr.mxu0 0.0
        %1599 = vmatpush1.msra.mxu0 %v1350
        %1600 = vmatprep.subr.mxu0 0.0
        %1601 = vmatpush1.msra.mxu0 %v1351
        %1602 = vmatprep.subr.mxu0 0.0
        %1603 = vmatpush1.msra.mxu0 %v1352
        %1604 = vmatprep.subr.mxu0 0.0
        %1605 = vmatpush1.msra.mxu0 %v1353
        %1606 = vmatprep.subr.mxu0 0.0
        %1607 = vmatpush1.msra.mxu0 %v1354
        %1608 = vmatprep.subr.mxu0 0.0
        %1609 = vmatpush1.msra.mxu0 %v1355
        %1610 = vmatprep.subr.mxu0 0.0
        %1611 = vmatpush1.msra.mxu0 %v1356
        %1612 = vmatprep.subr.mxu0 0.0
        %1613 = vmatpush1.msra.mxu0 %v1357
        %1614 = vmatprep.subr.mxu0 0.0
        %1615 = vmatpush1.msra.mxu0 %v1358
        %1616 = vmatprep.subr.mxu0 0.0
        %1617 = vmatpush1.msra.mxu0 %v1359
        %1618 = vmatprep.subr.mxu0 0.0
        %1619 = vmatpush1.msra.mxu0 %v1360
        %1620 = vmatprep.subr.mxu0 0.0
        %1621 = vmatpush1.msra.mxu0 %v1361
        %1622 = vmatprep.subr.mxu0 0.0
        %1623 = vmatpush1.msra.mxu0 %v1362
        %1624 = vmatprep.subr.mxu0 0.0
        %1625 = vmatpush1.msra.mxu0 %v1363
        %1626 = vmatprep.subr.mxu0 0.0
        %1627 = vmatpush1.msra.mxu0 %v1364
        %1628 = vmatprep.subr.mxu0 0.0
        %1629 = vmatpush1.msra.mxu0 %v1365
        %1630 = vmatprep.subr.mxu0 0.0
        %1631 = vmatpush1.msra.mxu0 %v1366
        %1632 = vmatprep.subr.mxu0 0.0
        %1633 = vmatpush1.msra.mxu0 %v1367
        %1634 = vmatprep.subr.mxu0 0.0
        %1635 = vmatpush1.msra.mxu0 %v1368
        %1636 = vmatprep.subr.mxu0 0.0
        %1637 = vmatpush1.msra.mxu0 %v1369
        %1638 = vmatprep.subr.mxu0 0.0
        %1639 = vmatpush1.msra.mxu0 %v1370
        %1640 = vmatprep.subr.mxu0 0.0
        %1641 = vmatpush1.msra.mxu0 %v1371
        %1642 = vmatprep.subr.mxu0 0.0
        %1643 = vmatpush1.msra.mxu0 %v1372
        %1644 = vmatprep.subr.mxu0 0.0
        %1645 = vmatpush1.msra.mxu0 %v1373
        %1646 = vmatprep.subr.mxu0 0.0
        %1647 = vmatpush1.msra.mxu0 %v1374
        %1648 = vmatprep.subr.mxu0 0.0
        %1649 = vmatpush1.msra.mxu0 %v1375
        %1650 = vmatprep.subr.mxu0 0.0
        %1651 = vmatpush1.msra.mxu0 %v1376
        %1652 = vmatprep.subr.mxu0 0.0
        %1653 = vmatpush1.msra.mxu0 %v1377
        %1654 = vmatprep.mubr.f32.mxu0 %v256
        %1655 = vmatmul.mubr.f32.gmra.mrb[0].mxu0 %v255
        %v1656 = vpop.f32.mrb[0].mxu0
        %v1657 = vadd.f32 0.0, %v1656
        %v1658 = vpop.f32.mrb[0].mxu0
        %1659 = vmatprep.mubr.f32.mxu0 %v260
        %1660 = vmatmul.mubr.f32.gmra.mrb[0].mxu0 %v259
        %v1661 = vpop.f32.mrb[0].mxu0
        %v1662 = vadd.f32 0.0, %v1661
        %v1663 = vpop.f32.mrb[0].mxu0
        %1664 = vmatprep.mubr.f32.mxu0 %v264
        %1665 = vmatmul.mubr.f32.gmra.mrb[0].mxu0 %v263
        %v1666 = vpop.f32.mrb[0].mxu0
        %v1667 = vadd.f32 0.0, %v1666
        %v1668 = vpop.f32.mrb[0].mxu0
        %1669 = vmatprep.mubr.f32.mxu0 %v268
        %1670 = vmatmul.mubr.f32.gmra.mrb[0].mxu0 %v267
        %v1671 = vpop.f32.mrb[0].mxu0
        %v1672 = vadd.f32 0.0, %v1671
        %v1673 = vpop.f32.mrb[0].mxu0
        %1674 = vmatprep.mubr.f32.mxu0 %v272
        %1675 = vmatmul.mubr.f32.gmra.mrb[0].mxu0 %v271
        %v1676 = vpop.f32.mrb[0].mxu0
        %v1677 = vadd.f32 0.0, %v1676
        %v1678 = vpop.f32.mrb[0].mxu0
        %1679 = vdwg.mxu0
        %1680 = vmatprep.subr.mxu0 0.0
        %1681 = vmatpush1.msra.mxu0 %v1378
        %1682 = vmatprep.subr.mxu0 0.0
        %1683 = vmatpush1.msra.mxu0 %v1379
        %1684 = vmatprep.subr.mxu0 0.0
        %1685 = vmatpush1.msra.mxu0 %v1380
        %1686 = vmatprep.subr.mxu0 0.0
        %1687 = vmatpush1.msra.mxu0 %v1381
        %1688 = vmatprep.subr.mxu0 0.0
        %1689 = vmatpush1.msra.mxu0 %v1382
        %1690 = vmatprep.subr.mxu0 0.0
        %1691 = vmatpush1.msra.mxu0 %v1383
        %1692 = vmatprep.subr.mxu0 0.0
        %1693 = vmatpush1.msra.mxu0 %v1384
        %1694 = vmatprep.subr.mxu0 0.0
        %1695 = vmatpush1.msra.mxu0 %v1385
        %1696 = vmatprep.subr.mxu0 0.0
        %1697 = vmatpush1.msra.mxu0 %v1386
        %1698 = vmatprep.subr.mxu0 0.0
        %1699 = vmatpush1.msra.mxu0 %v1387
        %1700 = vmatprep.subr.mxu0 0.0
        %1701 = vmatpush1.msra.mxu0 %v1388
        %1702 = vmatprep.subr.mxu0 0.0
        %1703 = vmatpush1.msra.mxu0 %v1389
        %1704 = vmatprep.subr.mxu0 0.0
        %1705 = vmatpush1.msra.mxu0 %v1390
        %1706 = vmatprep.subr.mxu0 0.0
        %1707 = vmatpush1.msra.mxu0 %v1391
        %1708 = vmatprep.subr.mxu0 0.0
        %1709 = vmatpush1.msra.mxu0 %v1392
        %1710 = vmatprep.subr.mxu0 0.0
        %1711 = vmatpush1.msra.mxu0 %v1393
        %1712 = vmatprep.subr.mxu0 0.0
        %1713 = vmatpush1.msra.mxu0 %v1394
        %1714 = vmatprep.subr.mxu0 0.0
        %1715 = vmatpush1.msra.mxu0 %v1395
        %1716 = vmatprep.subr.mxu0 0.0
        %1717 = vmatpush1.msra.mxu0 %v1396
        %1718 = vmatprep.subr.mxu0 0.0
        %1719 = vmatpush1.msra.mxu0 %v1397
        %1720 = vmatprep.subr.mxu0 0.0
        %1721 = vmatpush1.msra.mxu0 %v1398
        %1722 = vmatprep.subr.mxu0 0.0
        %1723 = vmatpush1.msra.mxu0 %v1399
        %1724 = vmatprep.subr.mxu0 0.0
        %1725 = vmatpush1.msra.mxu0 %v1400
        %1726 = vmatprep.subr.mxu0 0.0
        %1727 = vmatpush1.msra.mxu0 %v1401
        %1728 = vmatprep.subr.mxu0 0.0
        %1729 = vmatpush1.msra.mxu0 %v1402
        %1730 = vmatprep.subr.mxu0 0.0
        %1731 = vmatpush1.msra.mxu0 %v1403
        %1732 = vmatprep.subr.mxu0 0.0
        %1733 = vmatpush1.msra.mxu0 %v1404
        %1734 = vmatprep.subr.mxu0 0.0
        %1735 = vmatpush1.msra.mxu0 %v1405
        %1736 = vmatprep.subr.mxu0 0.0
        %1737 = vmatpush1.msra.mxu0 %v1406
        %1738 = vmatprep.subr.mxu0 0.0
        %1739 = vmatpush1.msra.mxu0 %v1407
        %1740 = vmatprep.subr.mxu0 0.0
        %1741 = vmatpush1.msra.mxu0 %v1408
        %1742 = vmatprep.subr.mxu0 0.0
        %1743 = vmatpush1.msra.mxu0 %v1409
        %1744 = vmatprep.mubr.f32.mxu0 %v258
        %1745 = vmatmul.mubr.f32.gmra.mrb[0].mxu0 %v257
        %v1746 = vpop.f32.mrb[0].mxu0
        %v1747 = vadd.f32 %v1657, %v1746
        %v1748 = vpop.f32.mrb[0].mxu0
        %1749 = vmatprep.mubr.f32.mxu0 %v262
        %1750 = vmatmul.mubr.f32.gmra.mrb[0].mxu0 %v261
        %v1751 = vpop.f32.mrb[0].mxu0
        %v1752 = vadd.f32 %v1662, %v1751
        %v1753 = vpop.f32.mrb[0].mxu0
        %1754 = vmatprep.mubr.f32.mxu0 %v266
        %1755 = vmatmul.mubr.f32.gmra.mrb[0].mxu0 %v265
        %v1756 = vpop.f32.mrb[0].mxu0
        %v1757 = vadd.f32 %v1667, %v1756
        %v1758 = vpop.f32.mrb[0].mxu0
        %1759 = vmatprep.mubr.f32.mxu0 %v270
        %1760 = vmatmul.mubr.f32.gmra.mrb[0].mxu0 %v269
        %v1761 = vpop.f32.mrb[0].mxu0
        %v1762 = vadd.f32 %v1672, %v1761
        %v1763 = vpop.f32.mrb[0].mxu0
        %1764 = vmatprep.mubr.f32.mxu0 %v274
        %1765 = vmatmul.mubr.f32.gmra.mrb[0].mxu0 %v273
        %v1766 = vpop.f32.mrb[0].mxu0
        %v1767 = vadd.f32 %v1677, %v1766
        %v1768 = vpop.f32.mrb[0].mxu0
        %1769 = vdwg.mxu0
        %v1770 = vmul.f32 %v1567, %v1747
        %v1771 = vmul.f32 %v1572, %v1752
        %v1772 = vmul.f32 %v1577, %v1757
        %v1773 = vmul.f32 %v1582, %v1762
        %v1774 = vmul.f32 %v1587, %v1767
        %v1775 = vadd.f32 %v1770, %v1771
        %v1776 = vadd.f32 %v1775, %v1772
        %v1777 = vadd.f32 %v1776, %v1773
        %v1778 = vadd.f32 %v1777, %v1774
        %v1779 = vrot.slane %v1778, 4
        %v1780 = vadd.f32 %v1778, %v1779
        %v1781 = vrot.slane %v1780, 2
        %v1782 = vadd.f32 %v1780, %v1781
        %v1783 = vrot.slane %v1782, 1
        %v1784 = vadd.f32 %v1782, %v1783
        %v1785 = vmax.f32 %v1784, 0.0
        %v1786 = vmin.f32 %v1785, 5.0
        %1787 = vst [vmem:[%s239 + $0x1] sm:$0x1] %v1786
        %v1788 = vld [vmem:[%s231 + $0x2] sm:$0x1]
        %v1789 = vld [vmem:[%s235 + $0x2] sm:$0x1]
        %v1790 = vlaneseq
        %v1791 = vshrl.u32 %v1790, 7
        %v1792 = vsub.s32 0, %v1791
        %v1793 = vrot.slane %v1788, %v1792
        %vm1794 = vcmp.eq.s32.totalorder %v278, %v1793
        %vm1795 = vcmp.eq.s32.totalorder %v279, %v1793
        %vm1796 = vcmp.eq.s32.totalorder %v280, %v1793
        %vm1797 = vcmp.eq.s32.totalorder %v281, %v1793
        %vm1798 = vcmp.eq.s32.totalorder %v282, %v1793
        %vm1799 = vcmp.eq.s32.totalorder %v283, %v1793
        %vm1800 = vcmp.eq.s32.totalorder %v284, %v1793
        %vm1801 = vcmp.eq.s32.totalorder %v285, %v1793
        %vm1802 = vcmp.eq.s32.totalorder %v286, %v1793
        %vm1803 = vcmp.eq.s32.totalorder %v287, %v1793
        %vm1804 = vcmp.eq.s32.totalorder %v288, %v1793
        %vm1805 = vcmp.eq.s32.totalorder %v289, %v1793
        %vm1806 = vcmp.eq.s32.totalorder %v290, %v1793
        %vm1807 = vcmp.eq.s32.totalorder %v291, %v1793
        %vm1808 = vcmp.eq.s32.totalorder %v292, %v1793
        %vm1809 = vcmp.eq.s32.totalorder %v293, %v1793
        %vm1810 = vcmp.eq.s32.totalorder %v294, %v1793
        %vm1811 = vcmp.eq.s32.totalorder %v295, %v1793
        %vm1812 = vcmp.eq.s32.totalorder %v296, %v1793
        %vm1813 = vcmp.eq.s32.totalorder %v297, %v1793
        %vm1814 = vcmp.eq.s32.totalorder %v298, %v1793
        %vm1815 = vcmp.eq.s32.totalorder %v299, %v1793
        %vm1816 = vcmp.eq.s32.totalorder %v300, %v1793
        %vm1817 = vcmp.eq.s32.totalorder %v301, %v1793
        %vm1818 = vcmp.eq.s32.totalorder %v302, %v1793
        %vm1819 = vcmp.eq.s32.totalorder %v303, %v1793
        %vm1820 = vcmp.eq.s32.totalorder %v304, %v1793
        %vm1821 = vcmp.eq.s32.totalorder %v305, %v1793
        %vm1822 = vcmp.eq.s32.totalorder %v306, %v1793
        %vm1823 = vcmp.eq.s32.totalorder %v307, %v1793
        %vm1824 = vcmp.eq.s32.totalorder %v308, %v1793
        %vm1825 = vcmp.eq.s32.totalorder %v309, %v1793
        %vm1826 = vcmp.eq.s32.totalorder %v310, %v1793
        %vm1827 = vcmp.eq.s32.totalorder %v311, %v1793
        %vm1828 = vcmp.eq.s32.totalorder %v312, %v1793
        %vm1829 = vcmp.eq.s32.totalorder %v313, %v1793
        %vm1830 = vcmp.eq.s32.totalorder %v314, %v1793
        %vm1831 = vcmp.eq.s32.totalorder %v315, %v1793
        %vm1832 = vcmp.eq.s32.totalorder %v316, %v1793
        %vm1833 = vcmp.eq.s32.totalorder %v317, %v1793
        %vm1834 = vcmp.eq.s32.totalorder %v318, %v1793
        %vm1835 = vcmp.eq.s32.totalorder %v319, %v1793
        %vm1836 = vcmp.eq.s32.totalorder %v320, %v1793
        %vm1837 = vcmp.eq.s32.totalorder %v321, %v1793
        %vm1838 = vcmp.eq.s32.totalorder %v322, %v1793
        %vm1839 = vcmp.eq.s32.totalorder %v323, %v1793
        %vm1840 = vcmp.eq.s32.totalorder %v324, %v1793
        %vm1841 = vcmp.eq.s32.totalorder %v325, %v1793
        %v1842 = vsel %vm1794, 1, 0
        %v1843 = vsel %vm1795, 1, 0
        %v1844 = vsel %vm1796, 1, 0
        %v1845 = vsel %vm1797, 1, 0
        %v1846 = vsel %vm1798, 1, 0
        %v1847 = vsel %vm1799, 1, 0
        %v1848 = vsel %vm1800, 1, 0
        %v1849 = vsel %vm1801, 1, 0
        %v1850 = vsel %vm1802, 1, 0
        %v1851 = vsel %vm1803, 1, 0
        %v1852 = vsel %vm1804, 1, 0
        %v1853 = vsel %vm1805, 1, 0
        %v1854 = vsel %vm1806, 1, 0
        %v1855 = vsel %vm1807, 1, 0
        %v1856 = vsel %vm1808, 1, 0
        %v1857 = vsel %vm1809, 1, 0
        %v1858 = vsel %vm1810, 1, 0
        %v1859 = vsel %vm1811, 1, 0
        %v1860 = vsel %vm1812, 1, 0
        %v1861 = vsel %vm1813, 1, 0
        %v1862 = vsel %vm1814, 1, 0
        %v1863 = vsel %vm1815, 1, 0
        %v1864 = vsel %vm1816, 1, 0
        %v1865 = vsel %vm1817, 1, 0
        %v1866 = vsel %vm1818, 1, 0
        %v1867 = vsel %vm1819, 1, 0
        %v1868 = vsel %vm1820, 1, 0
        %v1869 = vsel %vm1821, 1, 0
        %v1870 = vsel %vm1822, 1, 0
        %v1871 = vsel %vm1823, 1, 0
        %v1872 = vsel %vm1824, 1, 0
        %v1873 = vsel %vm1825, 1, 0
        %v1874 = vsel %vm1826, 1, 0
        %v1875 = vsel %vm1827, 1, 0
        %v1876 = vsel %vm1828, 1, 0
        %v1877 = vsel %vm1829, 1, 0
        %v1878 = vsel %vm1830, 1, 0
        %v1879 = vsel %vm1831, 1, 0
        %v1880 = vsel %vm1832, 1, 0
        %v1881 = vsel %vm1833, 1, 0
        %v1882 = vsel %vm1834, 1, 0
        %v1883 = vsel %vm1835, 1, 0
        %v1884 = vsel %vm1836, 1, 0
        %v1885 = vsel %vm1837, 1, 0
        %v1886 = vsel %vm1838, 1, 0
        %v1887 = vsel %vm1839, 1, 0
        %v1888 = vsel %vm1840, 1, 0
        %v1889 = vsel %vm1841, 1, 0
        %v1890 = vcvt.s32.f32 %v1842
        %v1891 = vcvt.s32.f32 %v1843
        %v1892 = vcvt.s32.f32 %v1844
        %v1893 = vcvt.s32.f32 %v1845
        %v1894 = vcvt.s32.f32 %v1846
        %v1895 = vcvt.s32.f32 %v1847
        %v1896 = vcvt.s32.f32 %v1848
        %v1897 = vcvt.s32.f32 %v1849
        %v1898 = vcvt.s32.f32 %v1850
        %v1899 = vcvt.s32.f32 %v1851
        %v1900 = vcvt.s32.f32 %v1852
        %v1901 = vcvt.s32.f32 %v1853
        %v1902 = vcvt.s32.f32 %v1854
        %v1903 = vcvt.s32.f32 %v1855
        %v1904 = vcvt.s32.f32 %v1856
        %v1905 = vcvt.s32.f32 %v1857
        %v1906 = vcvt.s32.f32 %v1858
        %v1907 = vcvt.s32.f32 %v1859
        %v1908 = vcvt.s32.f32 %v1860
        %v1909 = vcvt.s32.f32 %v1861
        %v1910 = vcvt.s32.f32 %v1862
        %v1911 = vcvt.s32.f32 %v1863
        %v1912 = vcvt.s32.f32 %v1864
        %v1913 = vcvt.s32.f32 %v1865
        %v1914 = vcvt.s32.f32 %v1866
        %v1915 = vcvt.s32.f32 %v1867
        %v1916 = vcvt.s32.f32 %v1868
        %v1917 = vcvt.s32.f32 %v1869
        %v1918 = vcvt.s32.f32 %v1870
        %v1919 = vcvt.s32.f32 %v1871
        %v1920 = vcvt.s32.f32 %v1872
        %v1921 = vcvt.s32.f32 %v1873
        %v1922 = vcvt.s32.f32 %v1874
        %v1923 = vcvt.s32.f32 %v1875
        %v1924 = vcvt.s32.f32 %v1876
        %v1925 = vcvt.s32.f32 %v1877
        %v1926 = vcvt.s32.f32 %v1878
        %v1927 = vcvt.s32.f32 %v1879
        %v1928 = vcvt.s32.f32 %v1880
        %v1929 = vcvt.s32.f32 %v1881
        %v1930 = vcvt.s32.f32 %v1882
        %v1931 = vcvt.s32.f32 %v1883
        %v1932 = vcvt.s32.f32 %v1884
        %v1933 = vcvt.s32.f32 %v1885
        %v1934 = vcvt.s32.f32 %v1886
        %v1935 = vcvt.s32.f32 %v1887
        %v1936 = vcvt.s32.f32 %v1888
        %v1937 = vcvt.s32.f32 %v1889
        %v1938 = vlaneseq
        %v1939 = vshrl.u32 %v1938, 7
        %v1940 = vsub.s32 0, %v1939
        %v1941 = vrot.slane %v1789, %v1940
        %vm1942 = vcmp.eq.s32.totalorder %v278, %v1941
        %vm1943 = vcmp.eq.s32.totalorder %v279, %v1941
        %vm1944 = vcmp.eq.s32.totalorder %v280, %v1941
        %vm1945 = vcmp.eq.s32.totalorder %v281, %v1941
        %vm1946 = vcmp.eq.s32.totalorder %v282, %v1941
        %vm1947 = vcmp.eq.s32.totalorder %v283, %v1941
        %vm1948 = vcmp.eq.s32.totalorder %v284, %v1941
        %vm1949 = vcmp.eq.s32.totalorder %v285, %v1941
        %vm1950 = vcmp.eq.s32.totalorder %v286, %v1941
        %vm1951 = vcmp.eq.s32.totalorder %v287, %v1941
        %vm1952 = vcmp.eq.s32.totalorder %v288, %v1941
        %vm1953 = vcmp.eq.s32.totalorder %v289, %v1941
        %vm1954 = vcmp.eq.s32.totalorder %v290, %v1941
        %vm1955 = vcmp.eq.s32.totalorder %v291, %v1941
        %vm1956 = vcmp.eq.s32.totalorder %v292, %v1941
        %vm1957 = vcmp.eq.s32.totalorder %v293, %v1941
        %vm1958 = vcmp.eq.s32.totalorder %v294, %v1941
        %vm1959 = vcmp.eq.s32.totalorder %v295, %v1941
        %vm1960 = vcmp.eq.s32.totalorder %v296, %v1941
        %vm1961 = vcmp.eq.s32.totalorder %v297, %v1941
        %vm1962 = vcmp.eq.s32.totalorder %v298, %v1941
        %vm1963 = vcmp.eq.s32.totalorder %v299, %v1941
        %vm1964 = vcmp.eq.s32.totalorder %v300, %v1941
        %vm1965 = vcmp.eq.s32.totalorder %v301, %v1941
        %vm1966 = vcmp.eq.s32.totalorder %v302, %v1941
        %vm1967 = vcmp.eq.s32.totalorder %v303, %v1941
        %vm1968 = vcmp.eq.s32.totalorder %v304, %v1941
        %vm1969 = vcmp.eq.s32.totalorder %v305, %v1941
        %vm1970 = vcmp.eq.s32.totalorder %v306, %v1941
        %vm1971 = vcmp.eq.s32.totalorder %v307, %v1941
        %vm1972 = vcmp.eq.s32.totalorder %v308, %v1941
        %vm1973 = vcmp.eq.s32.totalorder %v309, %v1941
        %vm1974 = vcmp.eq.s32.totalorder %v310, %v1941
        %vm1975 = vcmp.eq.s32.totalorder %v311, %v1941
        %vm1976 = vcmp.eq.s32.totalorder %v312, %v1941
        %vm1977 = vcmp.eq.s32.totalorder %v313, %v1941
        %vm1978 = vcmp.eq.s32.totalorder %v314, %v1941
        %vm1979 = vcmp.eq.s32.totalorder %v315, %v1941
        %vm1980 = vcmp.eq.s32.totalorder %v316, %v1941
        %vm1981 = vcmp.eq.s32.totalorder %v317, %v1941
        %vm1982 = vcmp.eq.s32.totalorder %v318, %v1941
        %vm1983 = vcmp.eq.s32.totalorder %v319, %v1941
        %vm1984 = vcmp.eq.s32.totalorder %v320, %v1941
        %vm1985 = vcmp.eq.s32.totalorder %v321, %v1941
        %vm1986 = vcmp.eq.s32.totalorder %v322, %v1941
        %vm1987 = vcmp.eq.s32.totalorder %v323, %v1941
        %vm1988 = vcmp.eq.s32.totalorder %v324, %v1941
        %vm1989 = vcmp.eq.s32.totalorder %v325, %v1941
        %vm1990 = vcmp.eq.s32.totalorder %v474, %v1941
        %vm1991 = vcmp.eq.s32.totalorder %v475, %v1941
        %vm1992 = vcmp.eq.s32.totalorder %v476, %v1941
        %vm1993 = vcmp.eq.s32.totalorder %v477, %v1941
        %vm1994 = vcmp.eq.s32.totalorder %v478, %v1941
        %vm1995 = vcmp.eq.s32.totalorder %v479, %v1941
        %vm1996 = vcmp.eq.s32.totalorder %v480, %v1941
        %vm1997 = vcmp.eq.s32.totalorder %v481, %v1941
        %vm1998 = vcmp.eq.s32.totalorder %v482, %v1941
        %vm1999 = vcmp.eq.s32.totalorder %v483, %v1941
        %vm2000 = vcmp.eq.s32.totalorder %v484, %v1941
        %vm2001 = vcmp.eq.s32.totalorder %v485, %v1941
        %vm2002 = vcmp.eq.s32.totalorder %v486, %v1941
        %vm2003 = vcmp.eq.s32.totalorder %v487, %v1941
        %vm2004 = vcmp.eq.s32.totalorder %v488, %v1941
        %vm2005 = vcmp.eq.s32.totalorder %v489, %v1941
        %v2006 = vsel %vm1942, 1, 0
        %v2007 = vsel %vm1943, 1, 0
        %v2008 = vsel %vm1944, 1, 0
        %v2009 = vsel %vm1945, 1, 0
        %v2010 = vsel %vm1946, 1, 0
        %v2011 = vsel %vm1947, 1, 0
        %v2012 = vsel %vm1948, 1, 0
        %v2013 = vsel %vm1949, 1, 0
        %v2014 = vsel %vm1950, 1, 0
        %v2015 = vsel %vm1951, 1, 0
        %v2016 = vsel %vm1952, 1, 0
        %v2017 = vsel %vm1953, 1, 0
        %v2018 = vsel %vm1954, 1, 0
        %v2019 = vsel %vm1955, 1, 0
        %v2020 = vsel %vm1956, 1, 0
        %v2021 = vsel %vm1957, 1, 0
        %v2022 = vsel %vm1958, 1, 0
        %v2023 = vsel %vm1959, 1, 0
        %v2024 = vsel %vm1960, 1, 0
        %v2025 = vsel %vm1961, 1, 0
        %v2026 = vsel %vm1962, 1, 0
        %v2027 = vsel %vm1963, 1, 0
        %v2028 = vsel %vm1964, 1, 0
        %v2029 = vsel %vm1965, 1, 0
        %v2030 = vsel %vm1966, 1, 0
        %v2031 = vsel %vm1967, 1, 0
        %v2032 = vsel %vm1968, 1, 0
        %v2033 = vsel %vm1969, 1, 0
        %v2034 = vsel %vm1970, 1, 0
        %v2035 = vsel %vm1971, 1, 0
        %v2036 = vsel %vm1972, 1, 0
        %v2037 = vsel %vm1973, 1, 0
        %v2038 = vsel %vm1974, 1, 0
        %v2039 = vsel %vm1975, 1, 0
        %v2040 = vsel %vm1976, 1, 0
        %v2041 = vsel %vm1977, 1, 0
        %v2042 = vsel %vm1978, 1, 0
        %v2043 = vsel %vm1979, 1, 0
        %v2044 = vsel %vm1980, 1, 0
        %v2045 = vsel %vm1981, 1, 0
        %v2046 = vsel %vm1982, 1, 0
        %v2047 = vsel %vm1983, 1, 0
        %v2048 = vsel %vm1984, 1, 0
        %v2049 = vsel %vm1985, 1, 0
        %v2050 = vsel %vm1986, 1, 0
        %v2051 = vsel %vm1987, 1, 0
        %v2052 = vsel %vm1988, 1, 0
        %v2053 = vsel %vm1989, 1, 0
        %v2054 = vsel %vm1990, 1, 0
        %v2055 = vsel %vm1991, 1, 0
        %v2056 = vsel %vm1992, 1, 0
        %v2057 = vsel %vm1993, 1, 0
        %v2058 = vsel %vm1994, 1, 0
        %v2059 = vsel %vm1995, 1, 0
        %v2060 = vsel %vm1996, 1, 0
        %v2061 = vsel %vm1997, 1, 0
        %v2062 = vsel %vm1998, 1, 0
        %v2063 = vsel %vm1999, 1, 0
        %v2064 = vsel %vm2000, 1, 0
        %v2065 = vsel %vm2001, 1, 0
        %v2066 = vsel %vm2002, 1, 0
        %v2067 = vsel %vm2003, 1, 0
        %v2068 = vsel %vm2004, 1, 0
        %v2069 = vsel %vm2005, 1, 0
        %v2070 = vcvt.s32.f32 %v2006
        %v2071 = vcvt.s32.f32 %v2007
        %v2072 = vcvt.s32.f32 %v2008
        %v2073 = vcvt.s32.f32 %v2009
        %v2074 = vcvt.s32.f32 %v2010
        %v2075 = vcvt.s32.f32 %v2011
        %v2076 = vcvt.s32.f32 %v2012
        %v2077 = vcvt.s32.f32 %v2013
        %v2078 = vcvt.s32.f32 %v2014
        %v2079 = vcvt.s32.f32 %v2015
        %v2080 = vcvt.s32.f32 %v2016
        %v2081 = vcvt.s32.f32 %v2017
        %v2082 = vcvt.s32.f32 %v2018
        %v2083 = vcvt.s32.f32 %v2019
        %v2084 = vcvt.s32.f32 %v2020
        %v2085 = vcvt.s32.f32 %v2021
        %v2086 = vcvt.s32.f32 %v2022
        %v2087 = vcvt.s32.f32 %v2023
        %v2088 = vcvt.s32.f32 %v2024
        %v2089 = vcvt.s32.f32 %v2025
        %v2090 = vcvt.s32.f32 %v2026
        %v2091 = vcvt.s32.f32 %v2027
        %v2092 = vcvt.s32.f32 %v2028
        %v2093 = vcvt.s32.f32 %v2029
        %v2094 = vcvt.s32.f32 %v2030
        %v2095 = vcvt.s32.f32 %v2031
        %v2096 = vcvt.s32.f32 %v2032
        %v2097 = vcvt.s32.f32 %v2033
        %v2098 = vcvt.s32.f32 %v2034
        %v2099 = vcvt.s32.f32 %v2035
        %v2100 = vcvt.s32.f32 %v2036
        %v2101 = vcvt.s32.f32 %v2037
        %v2102 = vcvt.s32.f32 %v2038
        %v2103 = vcvt.s32.f32 %v2039
        %v2104 = vcvt.s32.f32 %v2040
        %v2105 = vcvt.s32.f32 %v2041
        %v2106 = vcvt.s32.f32 %v2042
        %v2107 = vcvt.s32.f32 %v2043
        %v2108 = vcvt.s32.f32 %v2044
        %v2109 = vcvt.s32.f32 %v2045
        %v2110 = vcvt.s32.f32 %v2046
        %v2111 = vcvt.s32.f32 %v2047
        %v2112 = vcvt.s32.f32 %v2048
        %v2113 = vcvt.s32.f32 %v2049
        %v2114 = vcvt.s32.f32 %v2050
        %v2115 = vcvt.s32.f32 %v2051
        %v2116 = vcvt.s32.f32 %v2052
        %v2117 = vcvt.s32.f32 %v2053
        %v2118 = vcvt.s32.f32 %v2054
        %v2119 = vcvt.s32.f32 %v2055
        %v2120 = vcvt.s32.f32 %v2056
        %v2121 = vcvt.s32.f32 %v2057
        %v2122 = vcvt.s32.f32 %v2058
        %v2123 = vcvt.s32.f32 %v2059
        %v2124 = vcvt.s32.f32 %v2060
        %v2125 = vcvt.s32.f32 %v2061
        %v2126 = vcvt.s32.f32 %v2062
        %v2127 = vcvt.s32.f32 %v2063
        %v2128 = vcvt.s32.f32 %v2064
        %v2129 = vcvt.s32.f32 %v2065
        %v2130 = vcvt.s32.f32 %v2066
        %v2131 = vcvt.s32.f32 %v2067
        %v2132 = vcvt.s32.f32 %v2068
        %v2133 = vcvt.s32.f32 %v2069
        %2134 = vmatprep.subr.mxu0 0.0
        %2135 = vmatpush1.msra.mxu0 %v1890
        %2136 = vmatprep.subr.mxu0 0.0
        %2137 = vmatpush1.msra.mxu0 %v1891
        %2138 = vmatprep.subr.mxu0 0.0
        %2139 = vmatpush1.msra.mxu0 %v1892
        %2140 = vmatprep.subr.mxu0 0.0
        %2141 = vmatpush1.msra.mxu0 %v1893
        %2142 = vmatprep.subr.mxu0 0.0
        %2143 = vmatpush1.msra.mxu0 %v1894
        %2144 = vmatprep.subr.mxu0 0.0
        %2145 = vmatpush1.msra.mxu0 %v1895
        %2146 = vmatprep.subr.mxu0 0.0
        %2147 = vmatpush1.msra.mxu0 %v1896
        %2148 = vmatprep.subr.mxu0 0.0
        %2149 = vmatpush1.msra.mxu0 %v1897
        %2150 = vmatprep.subr.mxu0 0.0
        %2151 = vmatpush1.msra.mxu0 %v1898
        %2152 = vmatprep.subr.mxu0 0.0
        %2153 = vmatpush1.msra.mxu0 %v1899
        %2154 = vmatprep.subr.mxu0 0.0
        %2155 = vmatpush1.msra.mxu0 %v1900
        %2156 = vmatprep.subr.mxu0 0.0
        %2157 = vmatpush1.msra.mxu0 %v1901
        %2158 = vmatprep.subr.mxu0 0.0
        %2159 = vmatpush1.msra.mxu0 %v1902
        %2160 = vmatprep.subr.mxu0 0.0
        %2161 = vmatpush1.msra.mxu0 %v1903
        %2162 = vmatprep.subr.mxu0 0.0
        %2163 = vmatpush1.msra.mxu0 %v1904
        %2164 = vmatprep.subr.mxu0 0.0
        %2165 = vmatpush1.msra.mxu0 %v1905
        %2166 = vmatprep.subr.mxu0 0.0
        %2167 = vmatpush1.msra.mxu0 %v1906
        %2168 = vmatprep.subr.mxu0 0.0
        %2169 = vmatpush1.msra.mxu0 %v1907
        %2170 = vmatprep.subr.mxu0 0.0
        %2171 = vmatpush1.msra.mxu0 %v1908
        %2172 = vmatprep.subr.mxu0 0.0
        %2173 = vmatpush1.msra.mxu0 %v1909
        %2174 = vmatprep.subr.mxu0 0.0
        %2175 = vmatpush1.msra.mxu0 %v1910
        %2176 = vmatprep.subr.mxu0 0.0
        %2177 = vmatpush1.msra.mxu0 %v1911
        %2178 = vmatprep.subr.mxu0 0.0
        %2179 = vmatpush1.msra.mxu0 %v1912
        %2180 = vmatprep.subr.mxu0 0.0
        %2181 = vmatpush1.msra.mxu0 %v1913
        %2182 = vmatprep.subr.mxu0 0.0
        %2183 = vmatpush1.msra.mxu0 %v1914
        %2184 = vmatprep.subr.mxu0 0.0
        %2185 = vmatpush1.msra.mxu0 %v1915
        %2186 = vmatprep.subr.mxu0 0.0
        %2187 = vmatpush1.msra.mxu0 %v1916
        %2188 = vmatprep.subr.mxu0 0.0
        %2189 = vmatpush1.msra.mxu0 %v1917
        %2190 = vmatprep.subr.mxu0 0.0
        %2191 = vmatpush1.msra.mxu0 %v1918
        %2192 = vmatprep.subr.mxu0 0.0
        %2193 = vmatpush1.msra.mxu0 %v1919
        %2194 = vmatprep.subr.mxu0 0.0
        %2195 = vmatpush1.msra.mxu0 %v1920
        %2196 = vmatprep.subr.mxu0 0.0
        %2197 = vmatpush1.msra.mxu0 %v1921
        %2198 = vmatprep.mubr.f32.mxu0 %v241
        %2199 = vmatmul.mubr.f32.gmra.mrb[0].mxu0 %v240
        %v2200 = vpop.f32.mrb[0].mxu0
        %v2201 = vadd.f32 0.0, %v2200
        %v2202 = vpop.f32.mrb[0].mxu0
        %2203 = vmatprep.mubr.f32.mxu0 %v244
        %2204 = vmatmul.mubr.f32.gmra.mrb[0].mxu0 %v243
        %v2205 = vpop.f32.mrb[0].mxu0
        %v2206 = vadd.f32 0.0, %v2205
        %v2207 = vpop.f32.mrb[0].mxu0
        %2208 = vmatprep.mubr.f32.mxu0 %v247
        %2209 = vmatmul.mubr.f32.gmra.mrb[0].mxu0 %v246
        %v2210 = vpop.f32.mrb[0].mxu0
        %v2211 = vadd.f32 0.0, %v2210
        %v2212 = vpop.f32.mrb[0].mxu0
        %2213 = vmatprep.mubr.f32.mxu0 %v250
        %2214 = vmatmul.mubr.f32.gmra.mrb[0].mxu0 %v249
        %v2215 = vpop.f32.mrb[0].mxu0
        %v2216 = vadd.f32 0.0, %v2215
        %v2217 = vpop.f32.mrb[0].mxu0
        %2218 = vmatprep.mubr.f32.mxu0 %v253
        %2219 = vmatmul.mubr.f32.gmra.mrb[0].mxu0 %v252
        %v2220 = vpop.f32.mrb[0].mxu0
        %v2221 = vadd.f32 0.0, %v2220
        %v2222 = vpop.f32.mrb[0].mxu0
        %2223 = vdwg.mxu0
        %2224 = vmatprep.subr.mxu0 0.0
        %2225 = vmatpush1.msra.mxu0 %v1922
        %2226 = vmatprep.subr.mxu0 0.0
        %2227 = vmatpush1.msra.mxu0 %v1923
        %2228 = vmatprep.subr.mxu0 0.0
        %2229 = vmatpush1.msra.mxu0 %v1924
        %2230 = vmatprep.subr.mxu0 0.0
        %2231 = vmatpush1.msra.mxu0 %v1925
        %2232 = vmatprep.subr.mxu0 0.0
        %2233 = vmatpush1.msra.mxu0 %v1926
        %2234 = vmatprep.subr.mxu0 0.0
        %2235 = vmatpush1.msra.mxu0 %v1927
        %2236 = vmatprep.subr.mxu0 0.0
        %2237 = vmatpush1.msra.mxu0 %v1928
        %2238 = vmatprep.subr.mxu0 0.0
        %2239 = vmatpush1.msra.mxu0 %v1929
        %2240 = vmatprep.subr.mxu0 0.0
        %2241 = vmatpush1.msra.mxu0 %v1930
        %2242 = vmatprep.subr.mxu0 0.0
        %2243 = vmatpush1.msra.mxu0 %v1931
        %2244 = vmatprep.subr.mxu0 0.0
        %2245 = vmatpush1.msra.mxu0 %v1932
        %2246 = vmatprep.subr.mxu0 0.0
        %2247 = vmatpush1.msra.mxu0 %v1933
        %2248 = vmatprep.subr.mxu0 0.0
        %2249 = vmatpush1.msra.mxu0 %v1934
        %2250 = vmatprep.subr.mxu0 0.0
        %2251 = vmatpush1.msra.mxu0 %v1935
        %2252 = vmatprep.subr.mxu0 0.0
        %2253 = vmatpush1.msra.mxu0 %v1936
        %2254 = vmatprep.subr.mxu0 0.0
        %2255 = vmatpush1.msra.mxu0 %v1937
        %2256 = vmatprep.subr.mxu0 0.0
        %2257 = vmatpush1.msra.mxu0 0.0
        %2258 = vmatprep.subr.mxu0 0.0
        %2259 = vmatpush1.msra.mxu0 0.0
        %2260 = vmatprep.subr.mxu0 0.0
        %2261 = vmatpush1.msra.mxu0 0.0
        %2262 = vmatprep.subr.mxu0 0.0
        %2263 = vmatpush1.msra.mxu0 0.0
        %2264 = vmatprep.subr.mxu0 0.0
        %2265 = vmatpush1.msra.mxu0 0.0
        %2266 = vmatprep.subr.mxu0 0.0
        %2267 = vmatpush1.msra.mxu0 0.0
        %2268 = vmatprep.subr.mxu0 0.0
        %2269 = vmatpush1.msra.mxu0 0.0
        %2270 = vmatprep.subr.mxu0 0.0
        %2271 = vmatpush1.msra.mxu0 0.0
        %2272 = vmatprep.subr.mxu0 0.0
        %2273 = vmatpush1.msra.mxu0 0.0
        %2274 = vmatprep.subr.mxu0 0.0
        %2275 = vmatpush1.msra.mxu0 0.0
        %2276 = vmatprep.subr.mxu0 0.0
        %2277 = vmatpush1.msra.mxu0 0.0
        %2278 = vmatprep.subr.mxu0 0.0
        %2279 = vmatpush1.msra.mxu0 0.0
        %2280 = vmatprep.subr.mxu0 0.0
        %2281 = vmatpush1.msra.mxu0 0.0
        %2282 = vmatprep.subr.mxu0 0.0
        %2283 = vmatpush1.msra.mxu0 0.0
        %2284 = vmatprep.subr.mxu0 0.0
        %2285 = vmatpush1.msra.mxu0 0.0
        %2286 = vmatprep.subr.mxu0 0.0
        %2287 = vmatpush1.msra.mxu0 0.0
        %2288 = vmatprep.mubr.f32.mxu0 0.0
        %2289 = vmatmul.mubr.f32.gmra.mrb[0].mxu0 %v242
        %v2290 = vpop.f32.mrb[0].mxu0
        %v2291 = vadd.f32 %v2201, %v2290
        %v2292 = vpop.f32.mrb[0].mxu0
        %2293 = vmatprep.mubr.f32.mxu0 0.0
        %2294 = vmatmul.mubr.f32.gmra.mrb[0].mxu0 %v245
        %v2295 = vpop.f32.mrb[0].mxu0
        %v2296 = vadd.f32 %v2206, %v2295
        %v2297 = vpop.f32.mrb[0].mxu0
        %2298 = vmatprep.mubr.f32.mxu0 0.0
        %2299 = vmatmul.mubr.f32.gmra.mrb[0].mxu0 %v248
        %v2300 = vpop.f32.mrb[0].mxu0
        %v2301 = vadd.f32 %v2211, %v2300
        %v2302 = vpop.f32.mrb[0].mxu0
        %2303 = vmatprep.mubr.f32.mxu0 0.0
        %2304 = vmatmul.mubr.f32.gmra.mrb[0].mxu0 %v251
        %v2305 = vpop.f32.mrb[0].mxu0
        %v2306 = vadd.f32 %v2216, %v2305
        %v2307 = vpop.f32.mrb[0].mxu0
        %2308 = vmatprep.mubr.f32.mxu0 0.0
        %2309 = vmatmul.mubr.f32.gmra.mrb[0].mxu0 %v254
        %v2310 = vpop.f32.mrb[0].mxu0
        %v2311 = vadd.f32 %v2221, %v2310
        %v2312 = vpop.f32.mrb[0].mxu0
        %2313 = vdwg.mxu0
        %2314 = vmatprep.subr.mxu0 0.0
        %2315 = vmatpush1.msra.mxu0 %v2070
        %2316 = vmatprep.subr.mxu0 0.0
        %2317 = vmatpush1.msra.mxu0 %v2071
        %2318 = vmatprep.subr.mxu0 0.0
        %2319 = vmatpush1.msra.mxu0 %v2072
        %2320 = vmatprep.subr.mxu0 0.0
        %2321 = vmatpush1.msra.mxu0 %v2073
        %2322 = vmatprep.subr.mxu0 0.0
        %2323 = vmatpush1.msra.mxu0 %v2074
        %2324 = vmatprep.subr.mxu0 0.0
        %2325 = vmatpush1.msra.mxu0 %v2075
        %2326 = vmatprep.subr.mxu0 0.0
        %2327 = vmatpush1.msra.mxu0 %v2076
        %2328 = vmatprep.subr.mxu0 0.0
        %2329 = vmatpush1.msra.mxu0 %v2077
        %2330 = vmatprep.subr.mxu0 0.0
        %2331 = vmatpush1.msra.mxu0 %v2078
        %2332 = vmatprep.subr.mxu0 0.0
        %2333 = vmatpush1.msra.mxu0 %v2079
        %2334 = vmatprep.subr.mxu0 0.0
        %2335 = vmatpush1.msra.mxu0 %v2080
        %2336 = vmatprep.subr.mxu0 0.0
        %2337 = vmatpush1.msra.mxu0 %v2081
        %2338 = vmatprep.subr.mxu0 0.0
        %2339 = vmatpush1.msra.mxu0 %v2082
        %2340 = vmatprep.subr.mxu0 0.0
        %2341 = vmatpush1.msra.mxu0 %v2083
        %2342 = vmatprep.subr.mxu0 0.0
        %2343 = vmatpush1.msra.mxu0 %v2084
        %2344 = vmatprep.subr.mxu0 0.0
        %2345 = vmatpush1.msra.mxu0 %v2085
        %2346 = vmatprep.subr.mxu0 0.0
        %2347 = vmatpush1.msra.mxu0 %v2086
        %2348 = vmatprep.subr.mxu0 0.0
        %2349 = vmatpush1.msra.mxu0 %v2087
        %2350 = vmatprep.subr.mxu0 0.0
        %2351 = vmatpush1.msra.mxu0 %v2088
        %2352 = vmatprep.subr.mxu0 0.0
        %2353 = vmatpush1.msra.mxu0 %v2089
        %2354 = vmatprep.subr.mxu0 0.0
        %2355 = vmatpush1.msra.mxu0 %v2090
        %2356 = vmatprep.subr.mxu0 0.0
        %2357 = vmatpush1.msra.mxu0 %v2091
        %2358 = vmatprep.subr.mxu0 0.0
        %2359 = vmatpush1.msra.mxu0 %v2092
        %2360 = vmatprep.subr.mxu0 0.0
        %2361 = vmatpush1.msra.mxu0 %v2093
        %2362 = vmatprep.subr.mxu0 0.0
        %2363 = vmatpush1.msra.mxu0 %v2094
        %2364 = vmatprep.subr.mxu0 0.0
        %2365 = vmatpush1.msra.mxu0 %v2095
        %2366 = vmatprep.subr.mxu0 0.0
        %2367 = vmatpush1.msra.mxu0 %v2096
        %2368 = vmatprep.subr.mxu0 0.0
        %2369 = vmatpush1.msra.mxu0 %v2097
        %2370 = vmatprep.subr.mxu0 0.0
        %2371 = vmatpush1.msra.mxu0 %v2098
        %2372 = vmatprep.subr.mxu0 0.0
        %2373 = vmatpush1.msra.mxu0 %v2099
        %2374 = vmatprep.subr.mxu0 0.0
        %2375 = vmatpush1.msra.mxu0 %v2100
        %2376 = vmatprep.subr.mxu0 0.0
        %2377 = vmatpush1.msra.mxu0 %v2101
        %2378 = vmatprep.mubr.f32.mxu0 %v256
        %2379 = vmatmul.mubr.f32.gmra.mrb[0].mxu0 %v255
        %v2380 = vpop.f32.mrb[0].mxu0
        %v2381 = vadd.f32 0.0, %v2380
        %v2382 = vpop.f32.mrb[0].mxu0
        %2383 = vmatprep.mubr.f32.mxu0 %v260
        %2384 = vmatmul.mubr.f32.gmra.mrb[0].mxu0 %v259
        %v2385 = vpop.f32.mrb[0].mxu0
        %v2386 = vadd.f32 0.0, %v2385
        %v2387 = vpop.f32.mrb[0].mxu0
        %2388 = vmatprep.mubr.f32.mxu0 %v264
        %2389 = vmatmul.mubr.f32.gmra.mrb[0].mxu0 %v263
        %v2390 = vpop.f32.mrb[0].mxu0
        %v2391 = vadd.f32 0.0, %v2390
        %v2392 = vpop.f32.mrb[0].mxu0
        %2393 = vmatprep.mubr.f32.mxu0 %v268
        %2394 = vmatmul.mubr.f32.gmra.mrb[0].mxu0 %v267
        %v2395 = vpop.f32.mrb[0].mxu0
        %v2396 = vadd.f32 0.0, %v2395
        %v2397 = vpop.f32.mrb[0].mxu0
        %2398 = vmatprep.mubr.f32.mxu0 %v272
        %2399 = vmatmul.mubr.f32.gmra.mrb[0].mxu0 %v271
        %v2400 = vpop.f32.mrb[0].mxu0
        %v2401 = vadd.f32 0.0, %v2400
        %v2402 = vpop.f32.mrb[0].mxu0
        %2403 = vdwg.mxu0
        %2404 = vmatprep.subr.mxu0 0.0
        %2405 = vmatpush1.msra.mxu0 %v2102
        %2406 = vmatprep.subr.mxu0 0.0
        %2407 = vmatpush1.msra.mxu0 %v2103
        %2408 = vmatprep.subr.mxu0 0.0
        %2409 = vmatpush1.msra.mxu0 %v2104
        %2410 = vmatprep.subr.mxu0 0.0
        %2411 = vmatpush1.msra.mxu0 %v2105
        %2412 = vmatprep.subr.mxu0 0.0
        %2413 = vmatpush1.msra.mxu0 %v2106
        %2414 = vmatprep.subr.mxu0 0.0
        %2415 = vmatpush1.msra.mxu0 %v2107
        %2416 = vmatprep.subr.mxu0 0.0
        %2417 = vmatpush1.msra.mxu0 %v2108
        %2418 = vmatprep.subr.mxu0 0.0
        %2419 = vmatpush1.msra.mxu0 %v2109
        %2420 = vmatprep.subr.mxu0 0.0
        %2421 = vmatpush1.msra.mxu0 %v2110
        %2422 = vmatprep.subr.mxu0 0.0
        %2423 = vmatpush1.msra.mxu0 %v2111
        %2424 = vmatprep.subr.mxu0 0.0
        %2425 = vmatpush1.msra.mxu0 %v2112
        %2426 = vmatprep.subr.mxu0 0.0
        %2427 = vmatpush1.msra.mxu0 %v2113
        %2428 = vmatprep.subr.mxu0 0.0
        %2429 = vmatpush1.msra.mxu0 %v2114
        %2430 = vmatprep.subr.mxu0 0.0
        %2431 = vmatpush1.msra.mxu0 %v2115
        %2432 = vmatprep.subr.mxu0 0.0
        %2433 = vmatpush1.msra.mxu0 %v2116
        %2434 = vmatprep.subr.mxu0 0.0
        %2435 = vmatpush1.msra.mxu0 %v2117
        %2436 = vmatprep.subr.mxu0 0.0
        %2437 = vmatpush1.msra.mxu0 %v2118
        %2438 = vmatprep.subr.mxu0 0.0
        %2439 = vmatpush1.msra.mxu0 %v2119
        %2440 = vmatprep.subr.mxu0 0.0
        %2441 = vmatpush1.msra.mxu0 %v2120
        %2442 = vmatprep.subr.mxu0 0.0
        %2443 = vmatpush1.msra.mxu0 %v2121
        %2444 = vmatprep.subr.mxu0 0.0
        %2445 = vmatpush1.msra.mxu0 %v2122
        %2446 = vmatprep.subr.mxu0 0.0
        %2447 = vmatpush1.msra.mxu0 %v2123
        %2448 = vmatprep.subr.mxu0 0.0
        %2449 = vmatpush1.msra.mxu0 %v2124
        %2450 = vmatprep.subr.mxu0 0.0
        %2451 = vmatpush1.msra.mxu0 %v2125
        %2452 = vmatprep.subr.mxu0 0.0
        %2453 = vmatpush1.msra.mxu0 %v2126
        %2454 = vmatprep.subr.mxu0 0.0
        %2455 = vmatpush1.msra.mxu0 %v2127
        %2456 = vmatprep.subr.mxu0 0.0
        %2457 = vmatpush1.msra.mxu0 %v2128
        %2458 = vmatprep.subr.mxu0 0.0
        %2459 = vmatpush1.msra.mxu0 %v2129
        %2460 = vmatprep.subr.mxu0 0.0
        %2461 = vmatpush1.msra.mxu0 %v2130
        %2462 = vmatprep.subr.mxu0 0.0
        %2463 = vmatpush1.msra.mxu0 %v2131
        %2464 = vmatprep.subr.mxu0 0.0
        %2465 = vmatpush1.msra.mxu0 %v2132
        %2466 = vmatprep.subr.mxu0 0.0
        %2467 = vmatpush1.msra.mxu0 %v2133
        %2468 = vmatprep.mubr.f32.mxu0 %v258
        %2469 = vmatmul.mubr.f32.gmra.mrb[0].mxu0 %v257
        %v2470 = vpop.f32.mrb[0].mxu0
        %v2471 = vadd.f32 %v2381, %v2470
        %v2472 = vpop.f32.mrb[0].mxu0
        %2473 = vmatprep.mubr.f32.mxu0 %v262
        %2474 = vmatmul.mubr.f32.gmra.mrb[0].mxu0 %v261
        %v2475 = vpop.f32.mrb[0].mxu0
        %v2476 = vadd.f32 %v2386, %v2475
        %v2477 = vpop.f32.mrb[0].mxu0
        %2478 = vmatprep.mubr.f32.mxu0 %v266
        %2479 = vmatmul.mubr.f32.gmra.mrb[0].mxu0 %v265
        %v2480 = vpop.f32.mrb[0].mxu0
        %v2481 = vadd.f32 %v2391, %v2480
        %v2482 = vpop.f32.mrb[0].mxu0
        %2483 = vmatprep.mubr.f32.mxu0 %v270
        %2484 = vmatmul.mubr.f32.gmra.mrb[0].mxu0 %v269
        %v2485 = vpop.f32.mrb[0].mxu0
        %v2486 = vadd.f32 %v2396, %v2485
        %v2487 = vpop.f32.mrb[0].mxu0
        %2488 = vmatprep.mubr.f32.mxu0 %v274
        %2489 = vmatmul.mubr.f32.gmra.mrb[0].mxu0 %v273
        %v2490 = vpop.f32.mrb[0].mxu0
        %v2491 = vadd.f32 %v2401, %v2490
        %v2492 = vpop.f32.mrb[0].mxu0
        %2493 = vdwg.mxu0
        %v2494 = vmul.f32 %v2291, %v2471
        %v2495 = vmul.f32 %v2296, %v2476
        %v2496 = vmul.f32 %v2301, %v2481
        %v2497 = vmul.f32 %v2306, %v2486
        %v2498 = vmul.f32 %v2311, %v2491
        %v2499 = vadd.f32 %v2494, %v2495
        %v2500 = vadd.f32 %v2499, %v2496
        %v2501 = vadd.f32 %v2500, %v2497
        %v2502 = vadd.f32 %v2501, %v2498
        %v2503 = vrot.slane %v2502, 4
        %v2504 = vadd.f32 %v2502, %v2503
        %v2505 = vrot.slane %v2504, 2
        %v2506 = vadd.f32 %v2504, %v2505
        %v2507 = vrot.slane %v2506, 1
        %v2508 = vadd.f32 %v2506, %v2507
        %v2509 = vmax.f32 %v2508, 0.0
        %v2510 = vmin.f32 %v2509, 5.0
        %2511 = vst [vmem:[%s239 + $0x2] sm:$0x1] %v2510
        %v2512 = vld [vmem:[%s231 + $0x3] sm:$0x1]
        %v2513 = vld [vmem:[%s235 + $0x3] sm:$0x1]
        %v2514 = vlaneseq
        %v2515 = vshrl.u32 %v2514, 7
        %v2516 = vsub.s32 0, %v2515
        %v2517 = vrot.slane %v2512, %v2516
        %vm2518 = vcmp.eq.s32.totalorder %v278, %v2517
        %vm2519 = vcmp.eq.s32.totalorder %v279, %v2517
        %vm2520 = vcmp.eq.s32.totalorder %v280, %v2517
        %vm2521 = vcmp.eq.s32.totalorder %v281, %v2517
        %vm2522 = vcmp.eq.s32.totalorder %v282, %v2517
        %vm2523 = vcmp.eq.s32.totalorder %v283, %v2517
        %vm2524 = vcmp.eq.s32.totalorder %v284, %v2517
        %vm2525 = vcmp.eq.s32.totalorder %v285, %v2517
        %vm2526 = vcmp.eq.s32.totalorder %v286, %v2517
        %vm2527 = vcmp.eq.s32.totalorder %v287, %v2517
        %vm2528 = vcmp.eq.s32.totalorder %v288, %v2517
        %vm2529 = vcmp.eq.s32.totalorder %v289, %v2517
        %vm2530 = vcmp.eq.s32.totalorder %v290, %v2517
        %vm2531 = vcmp.eq.s32.totalorder %v291, %v2517
        %vm2532 = vcmp.eq.s32.totalorder %v292, %v2517
        %vm2533 = vcmp.eq.s32.totalorder %v293, %v2517
        %vm2534 = vcmp.eq.s32.totalorder %v294, %v2517
        %vm2535 = vcmp.eq.s32.totalorder %v295, %v2517
        %vm2536 = vcmp.eq.s32.totalorder %v296, %v2517
        %vm2537 = vcmp.eq.s32.totalorder %v297, %v2517
        %vm2538 = vcmp.eq.s32.totalorder %v298, %v2517
        %vm2539 = vcmp.eq.s32.totalorder %v299, %v2517
        %vm2540 = vcmp.eq.s32.totalorder %v300, %v2517
        %vm2541 = vcmp.eq.s32.totalorder %v301, %v2517
        %vm2542 = vcmp.eq.s32.totalorder %v302, %v2517
        %vm2543 = vcmp.eq.s32.totalorder %v303, %v2517
        %vm2544 = vcmp.eq.s32.totalorder %v304, %v2517
        %vm2545 = vcmp.eq.s32.totalorder %v305, %v2517
        %vm2546 = vcmp.eq.s32.totalorder %v306, %v2517
        %vm2547 = vcmp.eq.s32.totalorder %v307, %v2517
        %vm2548 = vcmp.eq.s32.totalorder %v308, %v2517
        %vm2549 = vcmp.eq.s32.totalorder %v309, %v2517
        %vm2550 = vcmp.eq.s32.totalorder %v310, %v2517
        %vm2551 = vcmp.eq.s32.totalorder %v311, %v2517
        %vm2552 = vcmp.eq.s32.totalorder %v312, %v2517
        %vm2553 = vcmp.eq.s32.totalorder %v313, %v2517
        %vm2554 = vcmp.eq.s32.totalorder %v314, %v2517
        %vm2555 = vcmp.eq.s32.totalorder %v315, %v2517
        %vm2556 = vcmp.eq.s32.totalorder %v316, %v2517
        %vm2557 = vcmp.eq.s32.totalorder %v317, %v2517
        %vm2558 = vcmp.eq.s32.totalorder %v318, %v2517
        %vm2559 = vcmp.eq.s32.totalorder %v319, %v2517
        %vm2560 = vcmp.eq.s32.totalorder %v320, %v2517
        %vm2561 = vcmp.eq.s32.totalorder %v321, %v2517
        %vm2562 = vcmp.eq.s32.totalorder %v322, %v2517
        %vm2563 = vcmp.eq.s32.totalorder %v323, %v2517
        %vm2564 = vcmp.eq.s32.totalorder %v324, %v2517
        %vm2565 = vcmp.eq.s32.totalorder %v325, %v2517
        %v2566 = vsel %vm2518, 1, 0
        %v2567 = vsel %vm2519, 1, 0
        %v2568 = vsel %vm2520, 1, 0
        %v2569 = vsel %vm2521, 1, 0
        %v2570 = vsel %vm2522, 1, 0
        %v2571 = vsel %vm2523, 1, 0
        %v2572 = vsel %vm2524, 1, 0
        %v2573 = vsel %vm2525, 1, 0
        %v2574 = vsel %vm2526, 1, 0
        %v2575 = vsel %vm2527, 1, 0
        %v2576 = vsel %vm2528, 1, 0
        %v2577 = vsel %vm2529, 1, 0
        %v2578 = vsel %vm2530, 1, 0
        %v2579 = vsel %vm2531, 1, 0
        %v2580 = vsel %vm2532, 1, 0
        %v2581 = vsel %vm2533, 1, 0
        %v2582 = vsel %vm2534, 1, 0
        %v2583 = vsel %vm2535, 1, 0
        %v2584 = vsel %vm2536, 1, 0
        %v2585 = vsel %vm2537, 1, 0
        %v2586 = vsel %vm2538, 1, 0
        %v2587 = vsel %vm2539, 1, 0
        %v2588 = vsel %vm2540, 1, 0
        %v2589 = vsel %vm2541, 1, 0
        %v2590 = vsel %vm2542, 1, 0
        %v2591 = vsel %vm2543, 1, 0
        %v2592 = vsel %vm2544, 1, 0
        %v2593 = vsel %vm2545, 1, 0
        %v2594 = vsel %vm2546, 1, 0
        %v2595 = vsel %vm2547, 1, 0
        %v2596 = vsel %vm2548, 1, 0
        %v2597 = vsel %vm2549, 1, 0
        %v2598 = vsel %vm2550, 1, 0
        %v2599 = vsel %vm2551, 1, 0
        %v2600 = vsel %vm2552, 1, 0
        %v2601 = vsel %vm2553, 1, 0
        %v2602 = vsel %vm2554, 1, 0
        %v2603 = vsel %vm2555, 1, 0
        %v2604 = vsel %vm2556, 1, 0
        %v2605 = vsel %vm2557, 1, 0
        %v2606 = vsel %vm2558, 1, 0
        %v2607 = vsel %vm2559, 1, 0
        %v2608 = vsel %vm2560, 1, 0
        %v2609 = vsel %vm2561, 1, 0
        %v2610 = vsel %vm2562, 1, 0
        %v2611 = vsel %vm2563, 1, 0
        %v2612 = vsel %vm2564, 1, 0
        %v2613 = vsel %vm2565, 1, 0
        %v2614 = vcvt.s32.f32 %v2566
        %v2615 = vcvt.s32.f32 %v2567
        %v2616 = vcvt.s32.f32 %v2568
        %v2617 = vcvt.s32.f32 %v2569
        %v2618 = vcvt.s32.f32 %v2570
        %v2619 = vcvt.s32.f32 %v2571
        %v2620 = vcvt.s32.f32 %v2572
        %v2621 = vcvt.s32.f32 %v2573
        %v2622 = vcvt.s32.f32 %v2574
        %v2623 = vcvt.s32.f32 %v2575
        %v2624 = vcvt.s32.f32 %v2576
        %v2625 = vcvt.s32.f32 %v2577
        %v2626 = vcvt.s32.f32 %v2578
        %v2627 = vcvt.s32.f32 %v2579
        %v2628 = vcvt.s32.f32 %v2580
        %v2629 = vcvt.s32.f32 %v2581
        %v2630 = vcvt.s32.f32 %v2582
        %v2631 = vcvt.s32.f32 %v2583
        %v2632 = vcvt.s32.f32 %v2584
        %v2633 = vcvt.s32.f32 %v2585
        %v2634 = vcvt.s32.f32 %v2586
        %v2635 = vcvt.s32.f32 %v2587
        %v2636 = vcvt.s32.f32 %v2588
        %v2637 = vcvt.s32.f32 %v2589
        %v2638 = vcvt.s32.f32 %v2590
        %v2639 = vcvt.s32.f32 %v2591
        %v2640 = vcvt.s32.f32 %v2592
        %v2641 = vcvt.s32.f32 %v2593
        %v2642 = vcvt.s32.f32 %v2594
        %v2643 = vcvt.s32.f32 %v2595
        %v2644 = vcvt.s32.f32 %v2596
        %v2645 = vcvt.s32.f32 %v2597
        %v2646 = vcvt.s32.f32 %v2598
        %v2647 = vcvt.s32.f32 %v2599
        %v2648 = vcvt.s32.f32 %v2600
        %v2649 = vcvt.s32.f32 %v2601
        %v2650 = vcvt.s32.f32 %v2602
        %v2651 = vcvt.s32.f32 %v2603
        %v2652 = vcvt.s32.f32 %v2604
        %v2653 = vcvt.s32.f32 %v2605
        %v2654 = vcvt.s32.f32 %v2606
        %v2655 = vcvt.s32.f32 %v2607
        %v2656 = vcvt.s32.f32 %v2608
        %v2657 = vcvt.s32.f32 %v2609
        %v2658 = vcvt.s32.f32 %v2610
        %v2659 = vcvt.s32.f32 %v2611
        %v2660 = vcvt.s32.f32 %v2612
        %v2661 = vcvt.s32.f32 %v2613
        %v2662 = vlaneseq
        %v2663 = vshrl.u32 %v2662, 7
        %v2664 = vsub.s32 0, %v2663
        %v2665 = vrot.slane %v2513, %v2664
        %vm2666 = vcmp.eq.s32.totalorder %v278, %v2665
        %vm2667 = vcmp.eq.s32.totalorder %v279, %v2665
        %vm2668 = vcmp.eq.s32.totalorder %v280, %v2665
        %vm2669 = vcmp.eq.s32.totalorder %v281, %v2665
        %vm2670 = vcmp.eq.s32.totalorder %v282, %v2665
        %vm2671 = vcmp.eq.s32.totalorder %v283, %v2665
        %vm2672 = vcmp.eq.s32.totalorder %v284, %v2665
        %vm2673 = vcmp.eq.s32.totalorder %v285, %v2665
        %vm2674 = vcmp.eq.s32.totalorder %v286, %v2665
        %vm2675 = vcmp.eq.s32.totalorder %v287, %v2665
        %vm2676 = vcmp.eq.s32.totalorder %v288, %v2665
        %vm2677 = vcmp.eq.s32.totalorder %v289, %v2665
        %vm2678 = vcmp.eq.s32.totalorder %v290, %v2665
        %vm2679 = vcmp.eq.s32.totalorder %v291, %v2665
        %vm2680 = vcmp.eq.s32.totalorder %v292, %v2665
        %vm2681 = vcmp.eq.s32.totalorder %v293, %v2665
        %vm2682 = vcmp.eq.s32.totalorder %v294, %v2665
        %vm2683 = vcmp.eq.s32.totalorder %v295, %v2665
        %vm2684 = vcmp.eq.s32.totalorder %v296, %v2665
        %vm2685 = vcmp.eq.s32.totalorder %v297, %v2665
        %vm2686 = vcmp.eq.s32.totalorder %v298, %v2665
        %vm2687 = vcmp.eq.s32.totalorder %v299, %v2665
        %vm2688 = vcmp.eq.s32.totalorder %v300, %v2665
        %vm2689 = vcmp.eq.s32.totalorder %v301, %v2665
        %vm2690 = vcmp.eq.s32.totalorder %v302, %v2665
        %vm2691 = vcmp.eq.s32.totalorder %v303, %v2665
        %vm2692 = vcmp.eq.s32.totalorder %v304, %v2665
        %vm2693 = vcmp.eq.s32.totalorder %v305, %v2665
        %vm2694 = vcmp.eq.s32.totalorder %v306, %v2665
        %vm2695 = vcmp.eq.s32.totalorder %v307, %v2665
        %vm2696 = vcmp.eq.s32.totalorder %v308, %v2665
        %vm2697 = vcmp.eq.s32.totalorder %v309, %v2665
        %vm2698 = vcmp.eq.s32.totalorder %v310, %v2665
        %vm2699 = vcmp.eq.s32.totalorder %v311, %v2665
        %vm2700 = vcmp.eq.s32.totalorder %v312, %v2665
        %vm2701 = vcmp.eq.s32.totalorder %v313, %v2665
        %vm2702 = vcmp.eq.s32.totalorder %v314, %v2665
        %vm2703 = vcmp.eq.s32.totalorder %v315, %v2665
        %vm2704 = vcmp.eq.s32.totalorder %v316, %v2665
        %vm2705 = vcmp.eq.s32.totalorder %v317, %v2665
        %vm2706 = vcmp.eq.s32.totalorder %v318, %v2665
        %vm2707 = vcmp.eq.s32.totalorder %v319, %v2665
        %vm2708 = vcmp.eq.s32.totalorder %v320, %v2665
        %vm2709 = vcmp.eq.s32.totalorder %v321, %v2665
        %vm2710 = vcmp.eq.s32.totalorder %v322, %v2665
        %vm2711 = vcmp.eq.s32.totalorder %v323, %v2665
        %vm2712 = vcmp.eq.s32.totalorder %v324, %v2665
        %vm2713 = vcmp.eq.s32.totalorder %v325, %v2665
        %vm2714 = vcmp.eq.s32.totalorder %v474, %v2665
        %vm2715 = vcmp.eq.s32.totalorder %v475, %v2665
        %vm2716 = vcmp.eq.s32.totalorder %v476, %v2665
        %vm2717 = vcmp.eq.s32.totalorder %v477, %v2665
        %vm2718 = vcmp.eq.s32.totalorder %v478, %v2665
        %vm2719 = vcmp.eq.s32.totalorder %v479, %v2665
        %vm2720 = vcmp.eq.s32.totalorder %v480, %v2665
        %vm2721 = vcmp.eq.s32.totalorder %v481, %v2665
        %vm2722 = vcmp.eq.s32.totalorder %v482, %v2665
        %vm2723 = vcmp.eq.s32.totalorder %v483, %v2665
        %vm2724 = vcmp.eq.s32.totalorder %v484, %v2665
        %vm2725 = vcmp.eq.s32.totalorder %v485, %v2665
        %vm2726 = vcmp.eq.s32.totalorder %v486, %v2665
        %vm2727 = vcmp.eq.s32.totalorder %v487, %v2665
        %vm2728 = vcmp.eq.s32.totalorder %v488, %v2665
        %vm2729 = vcmp.eq.s32.totalorder %v489, %v2665
        %v2730 = vsel %vm2666, 1, 0
        %v2731 = vsel %vm2667, 1, 0
        %v2732 = vsel %vm2668, 1, 0
        %v2733 = vsel %vm2669, 1, 0
        %v2734 = vsel %vm2670, 1, 0
        %v2735 = vsel %vm2671, 1, 0
        %v2736 = vsel %vm2672, 1, 0
        %v2737 = vsel %vm2673, 1, 0
        %v2738 = vsel %vm2674, 1, 0
        %v2739 = vsel %vm2675, 1, 0
        %v2740 = vsel %vm2676, 1, 0
        %v2741 = vsel %vm2677, 1, 0
        %v2742 = vsel %vm2678, 1, 0
        %v2743 = vsel %vm2679, 1, 0
        %v2744 = vsel %vm2680, 1, 0
        %v2745 = vsel %vm2681, 1, 0
        %v2746 = vsel %vm2682, 1, 0
        %v2747 = vsel %vm2683, 1, 0
        %v2748 = vsel %vm2684, 1, 0
        %v2749 = vsel %vm2685, 1, 0
        %v2750 = vsel %vm2686, 1, 0
        %v2751 = vsel %vm2687, 1, 0
        %v2752 = vsel %vm2688, 1, 0
        %v2753 = vsel %vm2689, 1, 0
        %v2754 = vsel %vm2690, 1, 0
        %v2755 = vsel %vm2691, 1, 0
        %v2756 = vsel %vm2692, 1, 0
        %v2757 = vsel %vm2693, 1, 0
        %v2758 = vsel %vm2694, 1, 0
        %v2759 = vsel %vm2695, 1, 0
        %v2760 = vsel %vm2696, 1, 0
        %v2761 = vsel %vm2697, 1, 0
        %v2762 = vsel %vm2698, 1, 0
        %v2763 = vsel %vm2699, 1, 0
        %v2764 = vsel %vm2700, 1, 0
        %v2765 = vsel %vm2701, 1, 0
        %v2766 = vsel %vm2702, 1, 0
        %v2767 = vsel %vm2703, 1, 0
        %v2768 = vsel %vm2704, 1, 0
        %v2769 = vsel %vm2705, 1, 0
        %v2770 = vsel %vm2706, 1, 0
        %v2771 = vsel %vm2707, 1, 0
        %v2772 = vsel %vm2708, 1, 0
        %v2773 = vsel %vm2709, 1, 0
        %v2774 = vsel %vm2710, 1, 0
        %v2775 = vsel %vm2711, 1, 0
        %v2776 = vsel %vm2712, 1, 0
        %v2777 = vsel %vm2713, 1, 0
        %v2778 = vsel %vm2714, 1, 0
        %v2779 = vsel %vm2715, 1, 0
        %v2780 = vsel %vm2716, 1, 0
        %v2781 = vsel %vm2717, 1, 0
        %v2782 = vsel %vm2718, 1, 0
        %v2783 = vsel %vm2719, 1, 0
        %v2784 = vsel %vm2720, 1, 0
        %v2785 = vsel %vm2721, 1, 0
        %v2786 = vsel %vm2722, 1, 0
        %v2787 = vsel %vm2723, 1, 0
        %v2788 = vsel %vm2724, 1, 0
        %v2789 = vsel %vm2725, 1, 0
        %v2790 = vsel %vm2726, 1, 0
        %v2791 = vsel %vm2727, 1, 0
        %v2792 = vsel %vm2728, 1, 0
        %v2793 = vsel %vm2729, 1, 0
        %v2794 = vcvt.s32.f32 %v2730
        %v2795 = vcvt.s32.f32 %v2731
        %v2796 = vcvt.s32.f32 %v2732
        %v2797 = vcvt.s32.f32 %v2733
        %v2798 = vcvt.s32.f32 %v2734
        %v2799 = vcvt.s32.f32 %v2735
        %v2800 = vcvt.s32.f32 %v2736
        %v2801 = vcvt.s32.f32 %v2737
        %v2802 = vcvt.s32.f32 %v2738
        %v2803 = vcvt.s32.f32 %v2739
        %v2804 = vcvt.s32.f32 %v2740
        %v2805 = vcvt.s32.f32 %v2741
        %v2806 = vcvt.s32.f32 %v2742
        %v2807 = vcvt.s32.f32 %v2743
        %v2808 = vcvt.s32.f32 %v2744
        %v2809 = vcvt.s32.f32 %v2745
        %v2810 = vcvt.s32.f32 %v2746
        %v2811 = vcvt.s32.f32 %v2747
        %v2812 = vcvt.s32.f32 %v2748
        %v2813 = vcvt.s32.f32 %v2749
        %v2814 = vcvt.s32.f32 %v2750
        %v2815 = vcvt.s32.f32 %v2751
        %v2816 = vcvt.s32.f32 %v2752
        %v2817 = vcvt.s32.f32 %v2753
        %v2818 = vcvt.s32.f32 %v2754
        %v2819 = vcvt.s32.f32 %v2755
        %v2820 = vcvt.s32.f32 %v2756
        %v2821 = vcvt.s32.f32 %v2757
        %v2822 = vcvt.s32.f32 %v2758
        %v2823 = vcvt.s32.f32 %v2759
        %v2824 = vcvt.s32.f32 %v2760
        %v2825 = vcvt.s32.f32 %v2761
        %v2826 = vcvt.s32.f32 %v2762
        %v2827 = vcvt.s32.f32 %v2763
        %v2828 = vcvt.s32.f32 %v2764
        %v2829 = vcvt.s32.f32 %v2765
        %v2830 = vcvt.s32.f32 %v2766
        %v2831 = vcvt.s32.f32 %v2767
        %v2832 = vcvt.s32.f32 %v2768
        %v2833 = vcvt.s32.f32 %v2769
        %v2834 = vcvt.s32.f32 %v2770
        %v2835 = vcvt.s32.f32 %v2771
        %v2836 = vcvt.s32.f32 %v2772
        %v2837 = vcvt.s32.f32 %v2773
        %v2838 = vcvt.s32.f32 %v2774
        %v2839 = vcvt.s32.f32 %v2775
        %v2840 = vcvt.s32.f32 %v2776
        %v2841 = vcvt.s32.f32 %v2777
        %v2842 = vcvt.s32.f32 %v2778
        %v2843 = vcvt.s32.f32 %v2779
        %v2844 = vcvt.s32.f32 %v2780
        %v2845 = vcvt.s32.f32 %v2781
        %v2846 = vcvt.s32.f32 %v2782
        %v2847 = vcvt.s32.f32 %v2783
        %v2848 = vcvt.s32.f32 %v2784
        %v2849 = vcvt.s32.f32 %v2785
        %v2850 = vcvt.s32.f32 %v2786
        %v2851 = vcvt.s32.f32 %v2787
        %v2852 = vcvt.s32.f32 %v2788
        %v2853 = vcvt.s32.f32 %v2789
        %v2854 = vcvt.s32.f32 %v2790
        %v2855 = vcvt.s32.f32 %v2791
        %v2856 = vcvt.s32.f32 %v2792
        %v2857 = vcvt.s32.f32 %v2793
        %2858 = vmatprep.subr.mxu0 0.0
        %2859 = vmatpush1.msra.mxu0 %v2614
        %2860 = vmatprep.subr.mxu0 0.0
        %2861 = vmatpush1.msra.mxu0 %v2615
        %2862 = vmatprep.subr.mxu0 0.0
        %2863 = vmatpush1.msra.mxu0 %v2616
        %2864 = vmatprep.subr.mxu0 0.0
        %2865 = vmatpush1.msra.mxu0 %v2617
        %2866 = vmatprep.subr.mxu0 0.0
        %2867 = vmatpush1.msra.mxu0 %v2618
        %2868 = vmatprep.subr.mxu0 0.0
        %2869 = vmatpush1.msra.mxu0 %v2619
        %2870 = vmatprep.subr.mxu0 0.0
        %2871 = vmatpush1.msra.mxu0 %v2620
        %2872 = vmatprep.subr.mxu0 0.0
        %2873 = vmatpush1.msra.mxu0 %v2621
        %2874 = vmatprep.subr.mxu0 0.0
        %2875 = vmatpush1.msra.mxu0 %v2622
        %2876 = vmatprep.subr.mxu0 0.0
        %2877 = vmatpush1.msra.mxu0 %v2623
        %2878 = vmatprep.subr.mxu0 0.0
        %2879 = vmatpush1.msra.mxu0 %v2624
        %2880 = vmatprep.subr.mxu0 0.0
        %2881 = vmatpush1.msra.mxu0 %v2625
        %2882 = vmatprep.subr.mxu0 0.0
        %2883 = vmatpush1.msra.mxu0 %v2626
        %2884 = vmatprep.subr.mxu0 0.0
        %2885 = vmatpush1.msra.mxu0 %v2627
        %2886 = vmatprep.subr.mxu0 0.0
        %2887 = vmatpush1.msra.mxu0 %v2628
        %2888 = vmatprep.subr.mxu0 0.0
        %2889 = vmatpush1.msra.mxu0 %v2629
        %2890 = vmatprep.subr.mxu0 0.0
        %2891 = vmatpush1.msra.mxu0 %v2630
        %2892 = vmatprep.subr.mxu0 0.0
        %2893 = vmatpush1.msra.mxu0 %v2631
        %2894 = vmatprep.subr.mxu0 0.0
        %2895 = vmatpush1.msra.mxu0 %v2632
        %2896 = vmatprep.subr.mxu0 0.0
        %2897 = vmatpush1.msra.mxu0 %v2633
        %2898 = vmatprep.subr.mxu0 0.0
        %2899 = vmatpush1.msra.mxu0 %v2634
        %2900 = vmatprep.subr.mxu0 0.0
        %2901 = vmatpush1.msra.mxu0 %v2635
        %2902 = vmatprep.subr.mxu0 0.0
        %2903 = vmatpush1.msra.mxu0 %v2636
        %2904 = vmatprep.subr.mxu0 0.0
        %2905 = vmatpush1.msra.mxu0 %v2637
        %2906 = vmatprep.subr.mxu0 0.0
        %2907 = vmatpush1.msra.mxu0 %v2638
        %2908 = vmatprep.subr.mxu0 0.0
        %2909 = vmatpush1.msra.mxu0 %v2639
        %2910 = vmatprep.subr.mxu0 0.0
        %2911 = vmatpush1.msra.mxu0 %v2640
        %2912 = vmatprep.subr.mxu0 0.0
        %2913 = vmatpush1.msra.mxu0 %v2641
        %2914 = vmatprep.subr.mxu0 0.0
        %2915 = vmatpush1.msra.mxu0 %v2642
        %2916 = vmatprep.subr.mxu0 0.0
        %2917 = vmatpush1.msra.mxu0 %v2643
        %2918 = vmatprep.subr.mxu0 0.0
        %2919 = vmatpush1.msra.mxu0 %v2644
        %2920 = vmatprep.subr.mxu0 0.0
        %2921 = vmatpush1.msra.mxu0 %v2645
        %2922 = vmatprep.mubr.f32.mxu0 %v241
        %2923 = vmatmul.mubr.f32.gmra.mrb[0].mxu0 %v240
        %v2924 = vpop.f32.mrb[0].mxu0
        %v2925 = vadd.f32 0.0, %v2924
        %v2926 = vpop.f32.mrb[0].mxu0
        %2927 = vmatprep.mubr.f32.mxu0 %v244
        %2928 = vmatmul.mubr.f32.gmra.mrb[0].mxu0 %v243
        %v2929 = vpop.f32.mrb[0].mxu0
        %v2930 = vadd.f32 0.0, %v2929
        %v2931 = vpop.f32.mrb[0].mxu0
        %2932 = vmatprep.mubr.f32.mxu0 %v247
        %2933 = vmatmul.mubr.f32.gmra.mrb[0].mxu0 %v246
        %v2934 = vpop.f32.mrb[0].mxu0
        %v2935 = vadd.f32 0.0, %v2934
        %v2936 = vpop.f32.mrb[0].mxu0
        %2937 = vmatprep.mubr.f32.mxu0 %v250
        %2938 = vmatmul.mubr.f32.gmra.mrb[0].mxu0 %v249
        %v2939 = vpop.f32.mrb[0].mxu0
        %v2940 = vadd.f32 0.0, %v2939
        %v2941 = vpop.f32.mrb[0].mxu0
        %2942 = vmatprep.mubr.f32.mxu0 %v253
        %2943 = vmatmul.mubr.f32.gmra.mrb[0].mxu0 %v252
        %v2944 = vpop.f32.mrb[0].mxu0
        %v2945 = vadd.f32 0.0, %v2944
        %v2946 = vpop.f32.mrb[0].mxu0
        %2947 = vdwg.mxu0
        %2948 = vmatprep.subr.mxu0 0.0
        %2949 = vmatpush1.msra.mxu0 %v2646
        %2950 = vmatprep.subr.mxu0 0.0
        %2951 = vmatpush1.msra.mxu0 %v2647
        %2952 = vmatprep.subr.mxu0 0.0
        %2953 = vmatpush1.msra.mxu0 %v2648
        %2954 = vmatprep.subr.mxu0 0.0
        %2955 = vmatpush1.msra.mxu0 %v2649
        %2956 = vmatprep.subr.mxu0 0.0
        %2957 = vmatpush1.msra.mxu0 %v2650
        %2958 = vmatprep.subr.mxu0 0.0
        %2959 = vmatpush1.msra.mxu0 %v2651
        %2960 = vmatprep.subr.mxu0 0.0
        %2961 = vmatpush1.msra.mxu0 %v2652
        %2962 = vmatprep.subr.mxu0 0.0
        %2963 = vmatpush1.msra.mxu0 %v2653
        %2964 = vmatprep.subr.mxu0 0.0
        %2965 = vmatpush1.msra.mxu0 %v2654
        %2966 = vmatprep.subr.mxu0 0.0
        %2967 = vmatpush1.msra.mxu0 %v2655
        %2968 = vmatprep.subr.mxu0 0.0
        %2969 = vmatpush1.msra.mxu0 %v2656
        %2970 = vmatprep.subr.mxu0 0.0
        %2971 = vmatpush1.msra.mxu0 %v2657
        %2972 = vmatprep.subr.mxu0 0.0
        %2973 = vmatpush1.msra.mxu0 %v2658
        %2974 = vmatprep.subr.mxu0 0.0
        %2975 = vmatpush1.msra.mxu0 %v2659
        %2976 = vmatprep.subr.mxu0 0.0
        %2977 = vmatpush1.msra.mxu0 %v2660
        %2978 = vmatprep.subr.mxu0 0.0
        %2979 = vmatpush1.msra.mxu0 %v2661
        %2980 = vmatprep.subr.mxu0 0.0
        %2981 = vmatpush1.msra.mxu0 0.0
        %2982 = vmatprep.subr.mxu0 0.0
        %2983 = vmatpush1.msra.mxu0 0.0
        %2984 = vmatprep.subr.mxu0 0.0
        %2985 = vmatpush1.msra.mxu0 0.0
        %2986 = vmatprep.subr.mxu0 0.0
        %2987 = vmatpush1.msra.mxu0 0.0
        %2988 = vmatprep.subr.mxu0 0.0
        %2989 = vmatpush1.msra.mxu0 0.0
        %2990 = vmatprep.subr.mxu0 0.0
        %2991 = vmatpush1.msra.mxu0 0.0
        %2992 = vmatprep.subr.mxu0 0.0
        %2993 = vmatpush1.msra.mxu0 0.0
        %2994 = vmatprep.subr.mxu0 0.0
        %2995 = vmatpush1.msra.mxu0 0.0
        %2996 = vmatprep.subr.mxu0 0.0
        %2997 = vmatpush1.msra.mxu0 0.0
        %2998 = vmatprep.subr.mxu0 0.0
        %2999 = vmatpush1.msra.mxu0 0.0
        %3000 = vmatprep.subr.mxu0 0.0
        %3001 = vmatpush1.msra.mxu0 0.0
        %3002 = vmatprep.subr.mxu0 0.0
        %3003 = vmatpush1.msra.mxu0 0.0
        %3004 = vmatprep.subr.mxu0 0.0
        %3005 = vmatpush1.msra.mxu0 0.0
        %3006 = vmatprep.subr.mxu0 0.0
        %3007 = vmatpush1.msra.mxu0 0.0
        %3008 = vmatprep.subr.mxu0 0.0
        %3009 = vmatpush1.msra.mxu0 0.0
        %3010 = vmatprep.subr.mxu0 0.0
        %3011 = vmatpush1.msra.mxu0 0.0
        %3012 = vmatprep.mubr.f32.mxu0 0.0
        %3013 = vmatmul.mubr.f32.gmra.mrb[0].mxu0 %v242
        %v3014 = vpop.f32.mrb[0].mxu0
        %v3015 = vadd.f32 %v2925, %v3014
        %v3016 = vpop.f32.mrb[0].mxu0
        %3017 = vmatprep.mubr.f32.mxu0 0.0
        %3018 = vmatmul.mubr.f32.gmra.mrb[0].mxu0 %v245
        %v3019 = vpop.f32.mrb[0].mxu0
        %v3020 = vadd.f32 %v2930, %v3019
        %v3021 = vpop.f32.mrb[0].mxu0
        %3022 = vmatprep.mubr.f32.mxu0 0.0
        %3023 = vmatmul.mubr.f32.gmra.mrb[0].mxu0 %v248
        %v3024 = vpop.f32.mrb[0].mxu0
        %v3025 = vadd.f32 %v2935, %v3024
        %v3026 = vpop.f32.mrb[0].mxu0
        %3027 = vmatprep.mubr.f32.mxu0 0.0
        %3028 = vmatmul.mubr.f32.gmra.mrb[0].mxu0 %v251
        %v3029 = vpop.f32.mrb[0].mxu0
        %v3030 = vadd.f32 %v2940, %v3029
        %v3031 = vpop.f32.mrb[0].mxu0
        %3032 = vmatprep.mubr.f32.mxu0 0.0
        %3033 = vmatmul.mubr.f32.gmra.mrb[0].mxu0 %v254
        %v3034 = vpop.f32.mrb[0].mxu0
        %v3035 = vadd.f32 %v2945, %v3034
        %v3036 = vpop.f32.mrb[0].mxu0
        %3037 = vdwg.mxu0
        %3038 = vmatprep.subr.mxu0 0.0
        %3039 = vmatpush1.msra.mxu0 %v2794
        %3040 = vmatprep.subr.mxu0 0.0
        %3041 = vmatpush1.msra.mxu0 %v2795
        %3042 = vmatprep.subr.mxu0 0.0
        %3043 = vmatpush1.msra.mxu0 %v2796
        %3044 = vmatprep.subr.mxu0 0.0
        %3045 = vmatpush1.msra.mxu0 %v2797
        %3046 = vmatprep.subr.mxu0 0.0
        %3047 = vmatpush1.msra.mxu0 %v2798
        %3048 = vmatprep.subr.mxu0 0.0
        %3049 = vmatpush1.msra.mxu0 %v2799
        %3050 = vmatprep.subr.mxu0 0.0
        %3051 = vmatpush1.msra.mxu0 %v2800
        %3052 = vmatprep.subr.mxu0 0.0
        %3053 = vmatpush1.msra.mxu0 %v2801
        %3054 = vmatprep.subr.mxu0 0.0
        %3055 = vmatpush1.msra.mxu0 %v2802
        %3056 = vmatprep.subr.mxu0 0.0
        %3057 = vmatpush1.msra.mxu0 %v2803
        %3058 = vmatprep.subr.mxu0 0.0
        %3059 = vmatpush1.msra.mxu0 %v2804
        %3060 = vmatprep.subr.mxu0 0.0
        %3061 = vmatpush1.msra.mxu0 %v2805
        %3062 = vmatprep.subr.mxu0 0.0
        %3063 = vmatpush1.msra.mxu0 %v2806
        %3064 = vmatprep.subr.mxu0 0.0
        %3065 = vmatpush1.msra.mxu0 %v2807
        %3066 = vmatprep.subr.mxu0 0.0
        %3067 = vmatpush1.msra.mxu0 %v2808
        %3068 = vmatprep.subr.mxu0 0.0
        %3069 = vmatpush1.msra.mxu0 %v2809
        %3070 = vmatprep.subr.mxu0 0.0
        %3071 = vmatpush1.msra.mxu0 %v2810
        %3072 = vmatprep.subr.mxu0 0.0
        %3073 = vmatpush1.msra.mxu0 %v2811
        %3074 = vmatprep.subr.mxu0 0.0
        %3075 = vmatpush1.msra.mxu0 %v2812
        %3076 = vmatprep.subr.mxu0 0.0
        %3077 = vmatpush1.msra.mxu0 %v2813
        %3078 = vmatprep.subr.mxu0 0.0
        %3079 = vmatpush1.msra.mxu0 %v2814
        %3080 = vmatprep.subr.mxu0 0.0
        %3081 = vmatpush1.msra.mxu0 %v2815
        %3082 = vmatprep.subr.mxu0 0.0
        %3083 = vmatpush1.msra.mxu0 %v2816
        %3084 = vmatprep.subr.mxu0 0.0
        %3085 = vmatpush1.msra.mxu0 %v2817
        %3086 = vmatprep.subr.mxu0 0.0
        %3087 = vmatpush1.msra.mxu0 %v2818
        %3088 = vmatprep.subr.mxu0 0.0
        %3089 = vmatpush1.msra.mxu0 %v2819
        %3090 = vmatprep.subr.mxu0 0.0
        %3091 = vmatpush1.msra.mxu0 %v2820
        %3092 = vmatprep.subr.mxu0 0.0
        %3093 = vmatpush1.msra.mxu0 %v2821
        %3094 = vmatprep.subr.mxu0 0.0
        %3095 = vmatpush1.msra.mxu0 %v2822
        %3096 = vmatprep.subr.mxu0 0.0
        %3097 = vmatpush1.msra.mxu0 %v2823
        %3098 = vmatprep.subr.mxu0 0.0
        %3099 = vmatpush1.msra.mxu0 %v2824
        %3100 = vmatprep.subr.mxu0 0.0
        %3101 = vmatpush1.msra.mxu0 %v2825
        %3102 = vmatprep.mubr.f32.mxu0 %v256
        %3103 = vmatmul.mubr.f32.gmra.mrb[0].mxu0 %v255
        %v3104 = vpop.f32.mrb[0].mxu0
        %v3105 = vadd.f32 0.0, %v3104
        %v3106 = vpop.f32.mrb[0].mxu0
        %3107 = vmatprep.mubr.f32.mxu0 %v260
        %3108 = vmatmul.mubr.f32.gmra.mrb[0].mxu0 %v259
        %v3109 = vpop.f32.mrb[0].mxu0
        %v3110 = vadd.f32 0.0, %v3109
        %v3111 = vpop.f32.mrb[0].mxu0
        %3112 = vmatprep.mubr.f32.mxu0 %v264
        %3113 = vmatmul.mubr.f32.gmra.mrb[0].mxu0 %v263
        %v3114 = vpop.f32.mrb[0].mxu0
        %v3115 = vadd.f32 0.0, %v3114
        %v3116 = vpop.f32.mrb[0].mxu0
        %3117 = vmatprep.mubr.f32.mxu0 %v268
        %3118 = vmatmul.mubr.f32.gmra.mrb[0].mxu0 %v267
        %v3119 = vpop.f32.mrb[0].mxu0
        %v3120 = vadd.f32 0.0, %v3119
        %v3121 = vpop.f32.mrb[0].mxu0
        %3122 = vmatprep.mubr.f32.mxu0 %v272
        %3123 = vmatmul.mubr.f32.gmra.mrb[0].mxu0 %v271
        %v3124 = vpop.f32.mrb[0].mxu0
        %v3125 = vadd.f32 0.0, %v3124
        %v3126 = vpop.f32.mrb[0].mxu0
        %3127 = vdwg.mxu0
        %3128 = vmatprep.subr.mxu0 0.0
        %3129 = vmatpush1.msra.mxu0 %v2826
        %3130 = vmatprep.subr.mxu0 0.0
        %3131 = vmatpush1.msra.mxu0 %v2827
        %3132 = vmatprep.subr.mxu0 0.0
        %3133 = vmatpush1.msra.mxu0 %v2828
        %3134 = vmatprep.subr.mxu0 0.0
        %3135 = vmatpush1.msra.mxu0 %v2829
        %3136 = vmatprep.subr.mxu0 0.0
        %3137 = vmatpush1.msra.mxu0 %v2830
        %3138 = vmatprep.subr.mxu0 0.0
        %3139 = vmatpush1.msra.mxu0 %v2831
        %3140 = vmatprep.subr.mxu0 0.0
        %3141 = vmatpush1.msra.mxu0 %v2832
        %3142 = vmatprep.subr.mxu0 0.0
        %3143 = vmatpush1.msra.mxu0 %v2833
        %3144 = vmatprep.subr.mxu0 0.0
        %3145 = vmatpush1.msra.mxu0 %v2834
        %3146 = vmatprep.subr.mxu0 0.0
        %3147 = vmatpush1.msra.mxu0 %v2835
        %3148 = vmatprep.subr.mxu0 0.0
        %3149 = vmatpush1.msra.mxu0 %v2836
        %3150 = vmatprep.subr.mxu0 0.0
        %3151 = vmatpush1.msra.mxu0 %v2837
        %3152 = vmatprep.subr.mxu0 0.0
        %3153 = vmatpush1.msra.mxu0 %v2838
        %3154 = vmatprep.subr.mxu0 0.0
        %3155 = vmatpush1.msra.mxu0 %v2839
        %3156 = vmatprep.subr.mxu0 0.0
        %3157 = vmatpush1.msra.mxu0 %v2840
        %3158 = vmatprep.subr.mxu0 0.0
        %3159 = vmatpush1.msra.mxu0 %v2841
        %3160 = vmatprep.subr.mxu0 0.0
        %3161 = vmatpush1.msra.mxu0 %v2842
        %3162 = vmatprep.subr.mxu0 0.0
        %3163 = vmatpush1.msra.mxu0 %v2843
        %3164 = vmatprep.subr.mxu0 0.0
        %3165 = vmatpush1.msra.mxu0 %v2844
        %3166 = vmatprep.subr.mxu0 0.0
        %3167 = vmatpush1.msra.mxu0 %v2845
        %3168 = vmatprep.subr.mxu0 0.0
        %3169 = vmatpush1.msra.mxu0 %v2846
        %3170 = vmatprep.subr.mxu0 0.0
        %3171 = vmatpush1.msra.mxu0 %v2847
        %3172 = vmatprep.subr.mxu0 0.0
        %3173 = vmatpush1.msra.mxu0 %v2848
        %3174 = vmatprep.subr.mxu0 0.0
        %3175 = vmatpush1.msra.mxu0 %v2849
        %3176 = vmatprep.subr.mxu0 0.0
        %3177 = vmatpush1.msra.mxu0 %v2850
        %3178 = vmatprep.subr.mxu0 0.0
        %3179 = vmatpush1.msra.mxu0 %v2851
        %3180 = vmatprep.subr.mxu0 0.0
        %3181 = vmatpush1.msra.mxu0 %v2852
        %3182 = vmatprep.subr.mxu0 0.0
        %3183 = vmatpush1.msra.mxu0 %v2853
        %3184 = vmatprep.subr.mxu0 0.0
        %3185 = vmatpush1.msra.mxu0 %v2854
        %3186 = vmatprep.subr.mxu0 0.0
        %3187 = vmatpush1.msra.mxu0 %v2855
        %3188 = vmatprep.subr.mxu0 0.0
        %3189 = vmatpush1.msra.mxu0 %v2856
        %3190 = vmatprep.subr.mxu0 0.0
        %3191 = vmatpush1.msra.mxu0 %v2857
        %3192 = vmatprep.mubr.f32.mxu0 %v258
        %3193 = vmatmul.mubr.f32.gmra.mrb[0].mxu0 %v257
        %v3194 = vpop.f32.mrb[0].mxu0
        %v3195 = vadd.f32 %v3105, %v3194
        %v3196 = vpop.f32.mrb[0].mxu0
        %3197 = vmatprep.mubr.f32.mxu0 %v262
        %3198 = vmatmul.mubr.f32.gmra.mrb[0].mxu0 %v261
        %v3199 = vpop.f32.mrb[0].mxu0
        %v3200 = vadd.f32 %v3110, %v3199
        %v3201 = vpop.f32.mrb[0].mxu0
        %3202 = vmatprep.mubr.f32.mxu0 %v266
        %3203 = vmatmul.mubr.f32.gmra.mrb[0].mxu0 %v265
        %v3204 = vpop.f32.mrb[0].mxu0
        %v3205 = vadd.f32 %v3115, %v3204
        %v3206 = vpop.f32.mrb[0].mxu0
        %3207 = vmatprep.mubr.f32.mxu0 %v270
        %3208 = vmatmul.mubr.f32.gmra.mrb[0].mxu0 %v269
        %v3209 = vpop.f32.mrb[0].mxu0
        %v3210 = vadd.f32 %v3120, %v3209
        %v3211 = vpop.f32.mrb[0].mxu0
        %3212 = vmatprep.mubr.f32.mxu0 %v274
        %3213 = vmatmul.mubr.f32.gmra.mrb[0].mxu0 %v273
        %v3214 = vpop.f32.mrb[0].mxu0
        %v3215 = vadd.f32 %v3125, %v3214
        %v3216 = vpop.f32.mrb[0].mxu0
        %3217 = vdwg.mxu0
        %v3218 = vmul.f32 %v3015, %v3195
        %v3219 = vmul.f32 %v3020, %v3200
        %v3220 = vmul.f32 %v3025, %v3205
        %v3221 = vmul.f32 %v3030, %v3210
        %v3222 = vmul.f32 %v3035, %v3215
        %v3223 = vadd.f32 %v3218, %v3219
        %v3224 = vadd.f32 %v3223, %v3220
        %v3225 = vadd.f32 %v3224, %v3221
        %v3226 = vadd.f32 %v3225, %v3222
        %v3227 = vrot.slane %v3226, 4
        %v3228 = vadd.f32 %v3226, %v3227
        %v3229 = vrot.slane %v3228, 2
        %v3230 = vadd.f32 %v3228, %v3229
        %v3231 = vrot.slane %v3230, 1
        %v3232 = vadd.f32 %v3230, %v3231
        %v3233 = vmax.f32 %v3232, 0.0
        %v3234 = vmin.f32 %v3233, 5.0
        %3235 = vst [vmem:[%s239 + $0x3] sm:$0x1] %v3234
        %v3236 = vld [vmem:[%s231 + $0x4] sm:$0x1]
        %v3237 = vld [vmem:[%s235 + $0x4] sm:$0x1]
        %v3238 = vlaneseq
        %v3239 = vshrl.u32 %v3238, 7
        %v3240 = vsub.s32 0, %v3239
        %v3241 = vrot.slane %v3236, %v3240
        %vm3242 = vcmp.eq.s32.totalorder %v278, %v3241
        %vm3243 = vcmp.eq.s32.totalorder %v279, %v3241
        %vm3244 = vcmp.eq.s32.totalorder %v280, %v3241
        %vm3245 = vcmp.eq.s32.totalorder %v281, %v3241
        %vm3246 = vcmp.eq.s32.totalorder %v282, %v3241
        %vm3247 = vcmp.eq.s32.totalorder %v283, %v3241
        %vm3248 = vcmp.eq.s32.totalorder %v284, %v3241
        %vm3249 = vcmp.eq.s32.totalorder %v285, %v3241
        %vm3250 = vcmp.eq.s32.totalorder %v286, %v3241
        %vm3251 = vcmp.eq.s32.totalorder %v287, %v3241
        %vm3252 = vcmp.eq.s32.totalorder %v288, %v3241
        %vm3253 = vcmp.eq.s32.totalorder %v289, %v3241
        %vm3254 = vcmp.eq.s32.totalorder %v290, %v3241
        %vm3255 = vcmp.eq.s32.totalorder %v291, %v3241
        %vm3256 = vcmp.eq.s32.totalorder %v292, %v3241
        %vm3257 = vcmp.eq.s32.totalorder %v293, %v3241
        %vm3258 = vcmp.eq.s32.totalorder %v294, %v3241
        %vm3259 = vcmp.eq.s32.totalorder %v295, %v3241
        %vm3260 = vcmp.eq.s32.totalorder %v296, %v3241
        %vm3261 = vcmp.eq.s32.totalorder %v297, %v3241
        %vm3262 = vcmp.eq.s32.totalorder %v298, %v3241
        %vm3263 = vcmp.eq.s32.totalorder %v299, %v3241
        %vm3264 = vcmp.eq.s32.totalorder %v300, %v3241
        %vm3265 = vcmp.eq.s32.totalorder %v301, %v3241
        %vm3266 = vcmp.eq.s32.totalorder %v302, %v3241
        %vm3267 = vcmp.eq.s32.totalorder %v303, %v3241
        %vm3268 = vcmp.eq.s32.totalorder %v304, %v3241
        %vm3269 = vcmp.eq.s32.totalorder %v305, %v3241
        %vm3270 = vcmp.eq.s32.totalorder %v306, %v3241
        %vm3271 = vcmp.eq.s32.totalorder %v307, %v3241
        %vm3272 = vcmp.eq.s32.totalorder %v308, %v3241
        %vm3273 = vcmp.eq.s32.totalorder %v309, %v3241
        %vm3274 = vcmp.eq.s32.totalorder %v310, %v3241
        %vm3275 = vcmp.eq.s32.totalorder %v311, %v3241
        %vm3276 = vcmp.eq.s32.totalorder %v312, %v3241
        %vm3277 = vcmp.eq.s32.totalorder %v313, %v3241
        %vm3278 = vcmp.eq.s32.totalorder %v314, %v3241
        %vm3279 = vcmp.eq.s32.totalorder %v315, %v3241
        %vm3280 = vcmp.eq.s32.totalorder %v316, %v3241
        %vm3281 = vcmp.eq.s32.totalorder %v317, %v3241
        %vm3282 = vcmp.eq.s32.totalorder %v318, %v3241
        %vm3283 = vcmp.eq.s32.totalorder %v319, %v3241
        %vm3284 = vcmp.eq.s32.totalorder %v320, %v3241
        %vm3285 = vcmp.eq.s32.totalorder %v321, %v3241
        %vm3286 = vcmp.eq.s32.totalorder %v322, %v3241
        %vm3287 = vcmp.eq.s32.totalorder %v323, %v3241
        %vm3288 = vcmp.eq.s32.totalorder %v324, %v3241
        %vm3289 = vcmp.eq.s32.totalorder %v325, %v3241
        %v3290 = vsel %vm3242, 1, 0
        %v3291 = vsel %vm3243, 1, 0
        %v3292 = vsel %vm3244, 1, 0
        %v3293 = vsel %vm3245, 1, 0
        %v3294 = vsel %vm3246, 1, 0
        %v3295 = vsel %vm3247, 1, 0
        %v3296 = vsel %vm3248, 1, 0
        %v3297 = vsel %vm3249, 1, 0
        %v3298 = vsel %vm3250, 1, 0
        %v3299 = vsel %vm3251, 1, 0
        %v3300 = vsel %vm3252, 1, 0
        %v3301 = vsel %vm3253, 1, 0
        %v3302 = vsel %vm3254, 1, 0
        %v3303 = vsel %vm3255, 1, 0
        %v3304 = vsel %vm3256, 1, 0
        %v3305 = vsel %vm3257, 1, 0
        %v3306 = vsel %vm3258, 1, 0
        %v3307 = vsel %vm3259, 1, 0
        %v3308 = vsel %vm3260, 1, 0
        %v3309 = vsel %vm3261, 1, 0
        %v3310 = vsel %vm3262, 1, 0
        %v3311 = vsel %vm3263, 1, 0
        %v3312 = vsel %vm3264, 1, 0
        %v3313 = vsel %vm3265, 1, 0
        %v3314 = vsel %vm3266, 1, 0
        %v3315 = vsel %vm3267, 1, 0
        %v3316 = vsel %vm3268, 1, 0
        %v3317 = vsel %vm3269, 1, 0
        %v3318 = vsel %vm3270, 1, 0
        %v3319 = vsel %vm3271, 1, 0
        %v3320 = vsel %vm3272, 1, 0
        %v3321 = vsel %vm3273, 1, 0
        %v3322 = vsel %vm3274, 1, 0
        %v3323 = vsel %vm3275, 1, 0
        %v3324 = vsel %vm3276, 1, 0
        %v3325 = vsel %vm3277, 1, 0
        %v3326 = vsel %vm3278, 1, 0
        %v3327 = vsel %vm3279, 1, 0
        %v3328 = vsel %vm3280, 1, 0
        %v3329 = vsel %vm3281, 1, 0
        %v3330 = vsel %vm3282, 1, 0
        %v3331 = vsel %vm3283, 1, 0
        %v3332 = vsel %vm3284, 1, 0
        %v3333 = vsel %vm3285, 1, 0
        %v3334 = vsel %vm3286, 1, 0
        %v3335 = vsel %vm3287, 1, 0
        %v3336 = vsel %vm3288, 1, 0
        %v3337 = vsel %vm3289, 1, 0
        %v3338 = vcvt.s32.f32 %v3290
        %v3339 = vcvt.s32.f32 %v3291
        %v3340 = vcvt.s32.f32 %v3292
        %v3341 = vcvt.s32.f32 %v3293
        %v3342 = vcvt.s32.f32 %v3294
        %v3343 = vcvt.s32.f32 %v3295
        %v3344 = vcvt.s32.f32 %v3296
        %v3345 = vcvt.s32.f32 %v3297
        %v3346 = vcvt.s32.f32 %v3298
        %v3347 = vcvt.s32.f32 %v3299
        %v3348 = vcvt.s32.f32 %v3300
        %v3349 = vcvt.s32.f32 %v3301
        %v3350 = vcvt.s32.f32 %v3302
        %v3351 = vcvt.s32.f32 %v3303
        %v3352 = vcvt.s32.f32 %v3304
        %v3353 = vcvt.s32.f32 %v3305
        %v3354 = vcvt.s32.f32 %v3306
        %v3355 = vcvt.s32.f32 %v3307
        %v3356 = vcvt.s32.f32 %v3308
        %v3357 = vcvt.s32.f32 %v3309
        %v3358 = vcvt.s32.f32 %v3310
        %v3359 = vcvt.s32.f32 %v3311
        %v3360 = vcvt.s32.f32 %v3312
        %v3361 = vcvt.s32.f32 %v3313
        %v3362 = vcvt.s32.f32 %v3314
        %v3363 = vcvt.s32.f32 %v3315
        %v3364 = vcvt.s32.f32 %v3316
        %v3365 = vcvt.s32.f32 %v3317
        %v3366 = vcvt.s32.f32 %v3318
        %v3367 = vcvt.s32.f32 %v3319
        %v3368 = vcvt.s32.f32 %v3320
        %v3369 = vcvt.s32.f32 %v3321
        %v3370 = vcvt.s32.f32 %v3322
        %v3371 = vcvt.s32.f32 %v3323
        %v3372 = vcvt.s32.f32 %v3324
        %v3373 = vcvt.s32.f32 %v3325
        %v3374 = vcvt.s32.f32 %v3326
        %v3375 = vcvt.s32.f32 %v3327
        %v3376 = vcvt.s32.f32 %v3328
        %v3377 = vcvt.s32.f32 %v3329
        %v3378 = vcvt.s32.f32 %v3330
        %v3379 = vcvt.s32.f32 %v3331
        %v3380 = vcvt.s32.f32 %v3332
        %v3381 = vcvt.s32.f32 %v3333
        %v3382 = vcvt.s32.f32 %v3334
        %v3383 = vcvt.s32.f32 %v3335
        %v3384 = vcvt.s32.f32 %v3336
        %v3385 = vcvt.s32.f32 %v3337
        %v3386 = vlaneseq
        %v3387 = vshrl.u32 %v3386, 7
        %v3388 = vsub.s32 0, %v3387
        %v3389 = vrot.slane %v3237, %v3388
        %vm3390 = vcmp.eq.s32.totalorder %v278, %v3389
        %vm3391 = vcmp.eq.s32.totalorder %v279, %v3389
        %vm3392 = vcmp.eq.s32.totalorder %v280, %v3389
        %vm3393 = vcmp.eq.s32.totalorder %v281, %v3389
        %vm3394 = vcmp.eq.s32.totalorder %v282, %v3389
        %vm3395 = vcmp.eq.s32.totalorder %v283, %v3389
        %vm3396 = vcmp.eq.s32.totalorder %v284, %v3389
        %vm3397 = vcmp.eq.s32.totalorder %v285, %v3389
        %vm3398 = vcmp.eq.s32.totalorder %v286, %v3389
        %vm3399 = vcmp.eq.s32.totalorder %v287, %v3389
        %vm3400 = vcmp.eq.s32.totalorder %v288, %v3389
        %vm3401 = vcmp.eq.s32.totalorder %v289, %v3389
        %vm3402 = vcmp.eq.s32.totalorder %v290, %v3389
        %vm3403 = vcmp.eq.s32.totalorder %v291, %v3389
        %vm3404 = vcmp.eq.s32.totalorder %v292, %v3389
        %vm3405 = vcmp.eq.s32.totalorder %v293, %v3389
        %vm3406 = vcmp.eq.s32.totalorder %v294, %v3389
        %vm3407 = vcmp.eq.s32.totalorder %v295, %v3389
        %vm3408 = vcmp.eq.s32.totalorder %v296, %v3389
        %vm3409 = vcmp.eq.s32.totalorder %v297, %v3389
        %vm3410 = vcmp.eq.s32.totalorder %v298, %v3389
        %vm3411 = vcmp.eq.s32.totalorder %v299, %v3389
        %vm3412 = vcmp.eq.s32.totalorder %v300, %v3389
        %vm3413 = vcmp.eq.s32.totalorder %v301, %v3389
        %vm3414 = vcmp.eq.s32.totalorder %v302, %v3389
        %vm3415 = vcmp.eq.s32.totalorder %v303, %v3389
        %vm3416 = vcmp.eq.s32.totalorder %v304, %v3389
        %vm3417 = vcmp.eq.s32.totalorder %v305, %v3389
        %vm3418 = vcmp.eq.s32.totalorder %v306, %v3389
        %vm3419 = vcmp.eq.s32.totalorder %v307, %v3389
        %vm3420 = vcmp.eq.s32.totalorder %v308, %v3389
        %vm3421 = vcmp.eq.s32.totalorder %v309, %v3389
        %vm3422 = vcmp.eq.s32.totalorder %v310, %v3389
        %vm3423 = vcmp.eq.s32.totalorder %v311, %v3389
        %vm3424 = vcmp.eq.s32.totalorder %v312, %v3389
        %vm3425 = vcmp.eq.s32.totalorder %v313, %v3389
        %vm3426 = vcmp.eq.s32.totalorder %v314, %v3389
        %vm3427 = vcmp.eq.s32.totalorder %v315, %v3389
        %vm3428 = vcmp.eq.s32.totalorder %v316, %v3389
        %vm3429 = vcmp.eq.s32.totalorder %v317, %v3389
        %vm3430 = vcmp.eq.s32.totalorder %v318, %v3389
        %vm3431 = vcmp.eq.s32.totalorder %v319, %v3389
        %vm3432 = vcmp.eq.s32.totalorder %v320, %v3389
        %vm3433 = vcmp.eq.s32.totalorder %v321, %v3389
        %vm3434 = vcmp.eq.s32.totalorder %v322, %v3389
        %vm3435 = vcmp.eq.s32.totalorder %v323, %v3389
        %vm3436 = vcmp.eq.s32.totalorder %v324, %v3389
        %vm3437 = vcmp.eq.s32.totalorder %v325, %v3389
        %vm3438 = vcmp.eq.s32.totalorder %v474, %v3389
        %vm3439 = vcmp.eq.s32.totalorder %v475, %v3389
        %vm3440 = vcmp.eq.s32.totalorder %v476, %v3389
        %vm3441 = vcmp.eq.s32.totalorder %v477, %v3389
        %vm3442 = vcmp.eq.s32.totalorder %v478, %v3389
        %vm3443 = vcmp.eq.s32.totalorder %v479, %v3389
        %vm3444 = vcmp.eq.s32.totalorder %v480, %v3389
        %vm3445 = vcmp.eq.s32.totalorder %v481, %v3389
        %vm3446 = vcmp.eq.s32.totalorder %v482, %v3389
        %vm3447 = vcmp.eq.s32.totalorder %v483, %v3389
        %vm3448 = vcmp.eq.s32.totalorder %v484, %v3389
        %vm3449 = vcmp.eq.s32.totalorder %v485, %v3389
        %vm3450 = vcmp.eq.s32.totalorder %v486, %v3389
        %vm3451 = vcmp.eq.s32.totalorder %v487, %v3389
        %vm3452 = vcmp.eq.s32.totalorder %v488, %v3389
        %vm3453 = vcmp.eq.s32.totalorder %v489, %v3389
        %v3454 = vsel %vm3390, 1, 0
        %v3455 = vsel %vm3391, 1, 0
        %v3456 = vsel %vm3392, 1, 0
        %v3457 = vsel %vm3393, 1, 0
        %v3458 = vsel %vm3394, 1, 0
        %v3459 = vsel %vm3395, 1, 0
        %v3460 = vsel %vm3396, 1, 0
        %v3461 = vsel %vm3397, 1, 0
        %v3462 = vsel %vm3398, 1, 0
        %v3463 = vsel %vm3399, 1, 0
        %v3464 = vsel %vm3400, 1, 0
        %v3465 = vsel %vm3401, 1, 0
        %v3466 = vsel %vm3402, 1, 0
        %v3467 = vsel %vm3403, 1, 0
        %v3468 = vsel %vm3404, 1, 0
        %v3469 = vsel %vm3405, 1, 0
        %v3470 = vsel %vm3406, 1, 0
        %v3471 = vsel %vm3407, 1, 0
        %v3472 = vsel %vm3408, 1, 0
        %v3473 = vsel %vm3409, 1, 0
        %v3474 = vsel %vm3410, 1, 0
        %v3475 = vsel %vm3411, 1, 0
        %v3476 = vsel %vm3412, 1, 0
        %v3477 = vsel %vm3413, 1, 0
        %v3478 = vsel %vm3414, 1, 0
        %v3479 = vsel %vm3415, 1, 0
        %v3480 = vsel %vm3416, 1, 0
        %v3481 = vsel %vm3417, 1, 0
        %v3482 = vsel %vm3418, 1, 0
        %v3483 = vsel %vm3419, 1, 0
        %v3484 = vsel %vm3420, 1, 0
        %v3485 = vsel %vm3421, 1, 0
        %v3486 = vsel %vm3422, 1, 0
        %v3487 = vsel %vm3423, 1, 0
        %v3488 = vsel %vm3424, 1, 0
        %v3489 = vsel %vm3425, 1, 0
        %v3490 = vsel %vm3426, 1, 0
        %v3491 = vsel %vm3427, 1, 0
        %v3492 = vsel %vm3428, 1, 0
        %v3493 = vsel %vm3429, 1, 0
        %v3494 = vsel %vm3430, 1, 0
        %v3495 = vsel %vm3431, 1, 0
        %v3496 = vsel %vm3432, 1, 0
        %v3497 = vsel %vm3433, 1, 0
        %v3498 = vsel %vm3434, 1, 0
        %v3499 = vsel %vm3435, 1, 0
        %v3500 = vsel %vm3436, 1, 0
        %v3501 = vsel %vm3437, 1, 0
        %v3502 = vsel %vm3438, 1, 0
        %v3503 = vsel %vm3439, 1, 0
        %v3504 = vsel %vm3440, 1, 0
        %v3505 = vsel %vm3441, 1, 0
        %v3506 = vsel %vm3442, 1, 0
        %v3507 = vsel %vm3443, 1, 0
        %v3508 = vsel %vm3444, 1, 0
        %v3509 = vsel %vm3445, 1, 0
        %v3510 = vsel %vm3446, 1, 0
        %v3511 = vsel %vm3447, 1, 0
        %v3512 = vsel %vm3448, 1, 0
        %v3513 = vsel %vm3449, 1, 0
        %v3514 = vsel %vm3450, 1, 0
        %v3515 = vsel %vm3451, 1, 0
        %v3516 = vsel %vm3452, 1, 0
        %v3517 = vsel %vm3453, 1, 0
        %v3518 = vcvt.s32.f32 %v3454
        %v3519 = vcvt.s32.f32 %v3455
        %v3520 = vcvt.s32.f32 %v3456
        %v3521 = vcvt.s32.f32 %v3457
        %v3522 = vcvt.s32.f32 %v3458
        %v3523 = vcvt.s32.f32 %v3459
        %v3524 = vcvt.s32.f32 %v3460
        %v3525 = vcvt.s32.f32 %v3461
        %v3526 = vcvt.s32.f32 %v3462
        %v3527 = vcvt.s32.f32 %v3463
        %v3528 = vcvt.s32.f32 %v3464
        %v3529 = vcvt.s32.f32 %v3465
        %v3530 = vcvt.s32.f32 %v3466
        %v3531 = vcvt.s32.f32 %v3467
        %v3532 = vcvt.s32.f32 %v3468
        %v3533 = vcvt.s32.f32 %v3469
        %v3534 = vcvt.s32.f32 %v3470
        %v3535 = vcvt.s32.f32 %v3471
        %v3536 = vcvt.s32.f32 %v3472
        %v3537 = vcvt.s32.f32 %v3473
        %v3538 = vcvt.s32.f32 %v3474
        %v3539 = vcvt.s32.f32 %v3475
        %v3540 = vcvt.s32.f32 %v3476
        %v3541 = vcvt.s32.f32 %v3477
        %v3542 = vcvt.s32.f32 %v3478
        %v3543 = vcvt.s32.f32 %v3479
        %v3544 = vcvt.s32.f32 %v3480
        %v3545 = vcvt.s32.f32 %v3481
        %v3546 = vcvt.s32.f32 %v3482
        %v3547 = vcvt.s32.f32 %v3483
        %v3548 = vcvt.s32.f32 %v3484
        %v3549 = vcvt.s32.f32 %v3485
        %v3550 = vcvt.s32.f32 %v3486
        %v3551 = vcvt.s32.f32 %v3487
        %v3552 = vcvt.s32.f32 %v3488
        %v3553 = vcvt.s32.f32 %v3489
        %v3554 = vcvt.s32.f32 %v3490
        %v3555 = vcvt.s32.f32 %v3491
        %v3556 = vcvt.s32.f32 %v3492
        %v3557 = vcvt.s32.f32 %v3493
        %v3558 = vcvt.s32.f32 %v3494
        %v3559 = vcvt.s32.f32 %v3495
        %v3560 = vcvt.s32.f32 %v3496
        %v3561 = vcvt.s32.f32 %v3497
        %v3562 = vcvt.s32.f32 %v3498
        %v3563 = vcvt.s32.f32 %v3499
        %v3564 = vcvt.s32.f32 %v3500
        %v3565 = vcvt.s32.f32 %v3501
        %v3566 = vcvt.s32.f32 %v3502
        %v3567 = vcvt.s32.f32 %v3503
        %v3568 = vcvt.s32.f32 %v3504
        %v3569 = vcvt.s32.f32 %v3505
        %v3570 = vcvt.s32.f32 %v3506
        %v3571 = vcvt.s32.f32 %v3507
        %v3572 = vcvt.s32.f32 %v3508
        %v3573 = vcvt.s32.f32 %v3509
        %v3574 = vcvt.s32.f32 %v3510
        %v3575 = vcvt.s32.f32 %v3511
        %v3576 = vcvt.s32.f32 %v3512
        %v3577 = vcvt.s32.f32 %v3513
        %v3578 = vcvt.s32.f32 %v3514
        %v3579 = vcvt.s32.f32 %v3515
        %v3580 = vcvt.s32.f32 %v3516
        %v3581 = vcvt.s32.f32 %v3517
        %3582 = vmatprep.subr.mxu0 0.0
        %3583 = vmatpush1.msra.mxu0 %v3338
        %3584 = vmatprep.subr.mxu0 0.0
        %3585 = vmatpush1.msra.mxu0 %v3339
        %3586 = vmatprep.subr.mxu0 0.0
        %3587 = vmatpush1.msra.mxu0 %v3340
        %3588 = vmatprep.subr.mxu0 0.0
        %3589 = vmatpush1.msra.mxu0 %v3341
        %3590 = vmatprep.subr.mxu0 0.0
        %3591 = vmatpush1.msra.mxu0 %v3342
        %3592 = vmatprep.subr.mxu0 0.0
        %3593 = vmatpush1.msra.mxu0 %v3343
        %3594 = vmatprep.subr.mxu0 0.0
        %3595 = vmatpush1.msra.mxu0 %v3344
        %3596 = vmatprep.subr.mxu0 0.0
        %3597 = vmatpush1.msra.mxu0 %v3345
        %3598 = vmatprep.subr.mxu0 0.0
        %3599 = vmatpush1.msra.mxu0 %v3346
        %3600 = vmatprep.subr.mxu0 0.0
        %3601 = vmatpush1.msra.mxu0 %v3347
        %3602 = vmatprep.subr.mxu0 0.0
        %3603 = vmatpush1.msra.mxu0 %v3348
        %3604 = vmatprep.subr.mxu0 0.0
        %3605 = vmatpush1.msra.mxu0 %v3349
        %3606 = vmatprep.subr.mxu0 0.0
        %3607 = vmatpush1.msra.mxu0 %v3350
        %3608 = vmatprep.subr.mxu0 0.0
        %3609 = vmatpush1.msra.mxu0 %v3351
        %3610 = vmatprep.subr.mxu0 0.0
        %3611 = vmatpush1.msra.mxu0 %v3352
        %3612 = vmatprep.subr.mxu0 0.0
        %3613 = vmatpush1.msra.mxu0 %v3353
        %3614 = vmatprep.subr.mxu0 0.0
        %3615 = vmatpush1.msra.mxu0 %v3354
        %3616 = vmatprep.subr.mxu0 0.0
        %3617 = vmatpush1.msra.mxu0 %v3355
        %3618 = vmatprep.subr.mxu0 0.0
        %3619 = vmatpush1.msra.mxu0 %v3356
        %3620 = vmatprep.subr.mxu0 0.0
        %3621 = vmatpush1.msra.mxu0 %v3357
        %3622 = vmatprep.subr.mxu0 0.0
        %3623 = vmatpush1.msra.mxu0 %v3358
        %3624 = vmatprep.subr.mxu0 0.0
        %3625 = vmatpush1.msra.mxu0 %v3359
        %3626 = vmatprep.subr.mxu0 0.0
        %3627 = vmatpush1.msra.mxu0 %v3360
        %3628 = vmatprep.subr.mxu0 0.0
        %3629 = vmatpush1.msra.mxu0 %v3361
        %3630 = vmatprep.subr.mxu0 0.0
        %3631 = vmatpush1.msra.mxu0 %v3362
        %3632 = vmatprep.subr.mxu0 0.0
        %3633 = vmatpush1.msra.mxu0 %v3363
        %3634 = vmatprep.subr.mxu0 0.0
        %3635 = vmatpush1.msra.mxu0 %v3364
        %3636 = vmatprep.subr.mxu0 0.0
        %3637 = vmatpush1.msra.mxu0 %v3365
        %3638 = vmatprep.subr.mxu0 0.0
        %3639 = vmatpush1.msra.mxu0 %v3366
        %3640 = vmatprep.subr.mxu0 0.0
        %3641 = vmatpush1.msra.mxu0 %v3367
        %3642 = vmatprep.subr.mxu0 0.0
        %3643 = vmatpush1.msra.mxu0 %v3368
        %3644 = vmatprep.subr.mxu0 0.0
        %3645 = vmatpush1.msra.mxu0 %v3369
        %3646 = vmatprep.mubr.f32.mxu0 %v241
        %3647 = vmatmul.mubr.f32.gmra.mrb[0].mxu0 %v240
        %v3648 = vpop.f32.mrb[0].mxu0
        %v3649 = vadd.f32 0.0, %v3648
        %v3650 = vpop.f32.mrb[0].mxu0
        %3651 = vmatprep.mubr.f32.mxu0 %v244
        %3652 = vmatmul.mubr.f32.gmra.mrb[0].mxu0 %v243
        %v3653 = vpop.f32.mrb[0].mxu0
        %v3654 = vadd.f32 0.0, %v3653
        %v3655 = vpop.f32.mrb[0].mxu0
        %3656 = vmatprep.mubr.f32.mxu0 %v247
        %3657 = vmatmul.mubr.f32.gmra.mrb[0].mxu0 %v246
        %v3658 = vpop.f32.mrb[0].mxu0
        %v3659 = vadd.f32 0.0, %v3658
        %v3660 = vpop.f32.mrb[0].mxu0
        %3661 = vmatprep.mubr.f32.mxu0 %v250
        %3662 = vmatmul.mubr.f32.gmra.mrb[0].mxu0 %v249
        %v3663 = vpop.f32.mrb[0].mxu0
        %v3664 = vadd.f32 0.0, %v3663
        %v3665 = vpop.f32.mrb[0].mxu0
        %3666 = vmatprep.mubr.f32.mxu0 %v253
        %3667 = vmatmul.mubr.f32.gmra.mrb[0].mxu0 %v252
        %v3668 = vpop.f32.mrb[0].mxu0
        %v3669 = vadd.f32 0.0, %v3668
        %v3670 = vpop.f32.mrb[0].mxu0
        %3671 = vdwg.mxu0
        %3672 = vmatprep.subr.mxu0 0.0
        %3673 = vmatpush1.msra.mxu0 %v3370
        %3674 = vmatprep.subr.mxu0 0.0
        %3675 = vmatpush1.msra.mxu0 %v3371
        %3676 = vmatprep.subr.mxu0 0.0
        %3677 = vmatpush1.msra.mxu0 %v3372
        %3678 = vmatprep.subr.mxu0 0.0
        %3679 = vmatpush1.msra.mxu0 %v3373
        %3680 = vmatprep.subr.mxu0 0.0
        %3681 = vmatpush1.msra.mxu0 %v3374
        %3682 = vmatprep.subr.mxu0 0.0
        %3683 = vmatpush1.msra.mxu0 %v3375
        %3684 = vmatprep.subr.mxu0 0.0
        %3685 = vmatpush1.msra.mxu0 %v3376
        %3686 = vmatprep.subr.mxu0 0.0
        %3687 = vmatpush1.msra.mxu0 %v3377
        %3688 = vmatprep.subr.mxu0 0.0
        %3689 = vmatpush1.msra.mxu0 %v3378
        %3690 = vmatprep.subr.mxu0 0.0
        %3691 = vmatpush1.msra.mxu0 %v3379
        %3692 = vmatprep.subr.mxu0 0.0
        %3693 = vmatpush1.msra.mxu0 %v3380
        %3694 = vmatprep.subr.mxu0 0.0
        %3695 = vmatpush1.msra.mxu0 %v3381
        %3696 = vmatprep.subr.mxu0 0.0
        %3697 = vmatpush1.msra.mxu0 %v3382
        %3698 = vmatprep.subr.mxu0 0.0
        %3699 = vmatpush1.msra.mxu0 %v3383
        %3700 = vmatprep.subr.mxu0 0.0
        %3701 = vmatpush1.msra.mxu0 %v3384
        %3702 = vmatprep.subr.mxu0 0.0
        %3703 = vmatpush1.msra.mxu0 %v3385
        %3704 = vmatprep.subr.mxu0 0.0
        %3705 = vmatpush1.msra.mxu0 0.0
        %3706 = vmatprep.subr.mxu0 0.0
        %3707 = vmatpush1.msra.mxu0 0.0
        %3708 = vmatprep.subr.mxu0 0.0
        %3709 = vmatpush1.msra.mxu0 0.0
        %3710 = vmatprep.subr.mxu0 0.0
        %3711 = vmatpush1.msra.mxu0 0.0
        %3712 = vmatprep.subr.mxu0 0.0
        %3713 = vmatpush1.msra.mxu0 0.0
        %3714 = vmatprep.subr.mxu0 0.0
        %3715 = vmatpush1.msra.mxu0 0.0
        %3716 = vmatprep.subr.mxu0 0.0
        %3717 = vmatpush1.msra.mxu0 0.0
        %3718 = vmatprep.subr.mxu0 0.0
        %3719 = vmatpush1.msra.mxu0 0.0
        %3720 = vmatprep.subr.mxu0 0.0
        %3721 = vmatpush1.msra.mxu0 0.0
        %3722 = vmatprep.subr.mxu0 0.0
        %3723 = vmatpush1.msra.mxu0 0.0
        %3724 = vmatprep.subr.mxu0 0.0
        %3725 = vmatpush1.msra.mxu0 0.0
        %3726 = vmatprep.subr.mxu0 0.0
        %3727 = vmatpush1.msra.mxu0 0.0
        %3728 = vmatprep.subr.mxu0 0.0
        %3729 = vmatpush1.msra.mxu0 0.0
        %3730 = vmatprep.subr.mxu0 0.0
        %3731 = vmatpush1.msra.mxu0 0.0
        %3732 = vmatprep.subr.mxu0 0.0
        %3733 = vmatpush1.msra.mxu0 0.0
        %3734 = vmatprep.subr.mxu0 0.0
        %3735 = vmatpush1.msra.mxu0 0.0
        %3736 = vmatprep.mubr.f32.mxu0 0.0
        %3737 = vmatmul.mubr.f32.gmra.mrb[0].mxu0 %v242
        %v3738 = vpop.f32.mrb[0].mxu0
        %v3739 = vadd.f32 %v3649, %v3738
        %v3740 = vpop.f32.mrb[0].mxu0
        %3741 = vmatprep.mubr.f32.mxu0 0.0
        %3742 = vmatmul.mubr.f32.gmra.mrb[0].mxu0 %v245
        %v3743 = vpop.f32.mrb[0].mxu0
        %v3744 = vadd.f32 %v3654, %v3743
        %v3745 = vpop.f32.mrb[0].mxu0
        %3746 = vmatprep.mubr.f32.mxu0 0.0
        %3747 = vmatmul.mubr.f32.gmra.mrb[0].mxu0 %v248
        %v3748 = vpop.f32.mrb[0].mxu0
        %v3749 = vadd.f32 %v3659, %v3748
        %v3750 = vpop.f32.mrb[0].mxu0
        %3751 = vmatprep.mubr.f32.mxu0 0.0
        %3752 = vmatmul.mubr.f32.gmra.mrb[0].mxu0 %v251
        %v3753 = vpop.f32.mrb[0].mxu0
        %v3754 = vadd.f32 %v3664, %v3753
        %v3755 = vpop.f32.mrb[0].mxu0
        %3756 = vmatprep.mubr.f32.mxu0 0.0
        %3757 = vmatmul.mubr.f32.gmra.mrb[0].mxu0 %v254
        %v3758 = vpop.f32.mrb[0].mxu0
        %v3759 = vadd.f32 %v3669, %v3758
        %v3760 = vpop.f32.mrb[0].mxu0
        %3761 = vdwg.mxu0
        %3762 = vmatprep.subr.mxu0 0.0
        %3763 = vmatpush1.msra.mxu0 %v3518
        %3764 = vmatprep.subr.mxu0 0.0
        %3765 = vmatpush1.msra.mxu0 %v3519
        %3766 = vmatprep.subr.mxu0 0.0
        %3767 = vmatpush1.msra.mxu0 %v3520
        %3768 = vmatprep.subr.mxu0 0.0
        %3769 = vmatpush1.msra.mxu0 %v3521
        %3770 = vmatprep.subr.mxu0 0.0
        %3771 = vmatpush1.msra.mxu0 %v3522
        %3772 = vmatprep.subr.mxu0 0.0
        %3773 = vmatpush1.msra.mxu0 %v3523
        %3774 = vmatprep.subr.mxu0 0.0
        %3775 = vmatpush1.msra.mxu0 %v3524
        %3776 = vmatprep.subr.mxu0 0.0
        %3777 = vmatpush1.msra.mxu0 %v3525
        %3778 = vmatprep.subr.mxu0 0.0
        %3779 = vmatpush1.msra.mxu0 %v3526
        %3780 = vmatprep.subr.mxu0 0.0
        %3781 = vmatpush1.msra.mxu0 %v3527
        %3782 = vmatprep.subr.mxu0 0.0
        %3783 = vmatpush1.msra.mxu0 %v3528
        %3784 = vmatprep.subr.mxu0 0.0
        %3785 = vmatpush1.msra.mxu0 %v3529
        %3786 = vmatprep.subr.mxu0 0.0
        %3787 = vmatpush1.msra.mxu0 %v3530
        %3788 = vmatprep.subr.mxu0 0.0
        %3789 = vmatpush1.msra.mxu0 %v3531
        %3790 = vmatprep.subr.mxu0 0.0
        %3791 = vmatpush1.msra.mxu0 %v3532
        %3792 = vmatprep.subr.mxu0 0.0
        %3793 = vmatpush1.msra.mxu0 %v3533
        %3794 = vmatprep.subr.mxu0 0.0
        %3795 = vmatpush1.msra.mxu0 %v3534
        %3796 = vmatprep.subr.mxu0 0.0
        %3797 = vmatpush1.msra.mxu0 %v3535
        %3798 = vmatprep.subr.mxu0 0.0
        %3799 = vmatpush1.msra.mxu0 %v3536
        %3800 = vmatprep.subr.mxu0 0.0
        %3801 = vmatpush1.msra.mxu0 %v3537
        %3802 = vmatprep.subr.mxu0 0.0
        %3803 = vmatpush1.msra.mxu0 %v3538
        %3804 = vmatprep.subr.mxu0 0.0
        %3805 = vmatpush1.msra.mxu0 %v3539
        %3806 = vmatprep.subr.mxu0 0.0
        %3807 = vmatpush1.msra.mxu0 %v3540
        %3808 = vmatprep.subr.mxu0 0.0
        %3809 = vmatpush1.msra.mxu0 %v3541
        %3810 = vmatprep.subr.mxu0 0.0
        %3811 = vmatpush1.msra.mxu0 %v3542
        %3812 = vmatprep.subr.mxu0 0.0
        %3813 = vmatpush1.msra.mxu0 %v3543
        %3814 = vmatprep.subr.mxu0 0.0
        %3815 = vmatpush1.msra.mxu0 %v3544
        %3816 = vmatprep.subr.mxu0 0.0
        %3817 = vmatpush1.msra.mxu0 %v3545
        %3818 = vmatprep.subr.mxu0 0.0
        %3819 = vmatpush1.msra.mxu0 %v3546
        %3820 = vmatprep.subr.mxu0 0.0
        %3821 = vmatpush1.msra.mxu0 %v3547
        %3822 = vmatprep.subr.mxu0 0.0
        %3823 = vmatpush1.msra.mxu0 %v3548
        %3824 = vmatprep.subr.mxu0 0.0
        %3825 = vmatpush1.msra.mxu0 %v3549
        %3826 = vmatprep.mubr.f32.mxu0 %v256
        %3827 = vmatmul.mubr.f32.gmra.mrb[0].mxu0 %v255
        %v3828 = vpop.f32.mrb[0].mxu0
        %v3829 = vadd.f32 0.0, %v3828
        %v3830 = vpop.f32.mrb[0].mxu0
        %3831 = vmatprep.mubr.f32.mxu0 %v260
        %3832 = vmatmul.mubr.f32.gmra.mrb[0].mxu0 %v259
        %v3833 = vpop.f32.mrb[0].mxu0
        %v3834 = vadd.f32 0.0, %v3833
        %v3835 = vpop.f32.mrb[0].mxu0
        %3836 = vmatprep.mubr.f32.mxu0 %v264
        %3837 = vmatmul.mubr.f32.gmra.mrb[0].mxu0 %v263
        %v3838 = vpop.f32.mrb[0].mxu0
        %v3839 = vadd.f32 0.0, %v3838
        %v3840 = vpop.f32.mrb[0].mxu0
        %3841 = vmatprep.mubr.f32.mxu0 %v268
        %3842 = vmatmul.mubr.f32.gmra.mrb[0].mxu0 %v267
        %v3843 = vpop.f32.mrb[0].mxu0
        %v3844 = vadd.f32 0.0, %v3843
        %v3845 = vpop.f32.mrb[0].mxu0
        %3846 = vmatprep.mubr.f32.mxu0 %v272
        %3847 = vmatmul.mubr.f32.gmra.mrb[0].mxu0 %v271
        %v3848 = vpop.f32.mrb[0].mxu0
        %v3849 = vadd.f32 0.0, %v3848
        %v3850 = vpop.f32.mrb[0].mxu0
        %3851 = vdwg.mxu0
        %3852 = vmatprep.subr.mxu0 0.0
        %3853 = vmatpush1.msra.mxu0 %v3550
        %3854 = vmatprep.subr.mxu0 0.0
        %3855 = vmatpush1.msra.mxu0 %v3551
        %3856 = vmatprep.subr.mxu0 0.0
        %3857 = vmatpush1.msra.mxu0 %v3552
        %3858 = vmatprep.subr.mxu0 0.0
        %3859 = vmatpush1.msra.mxu0 %v3553
        %3860 = vmatprep.subr.mxu0 0.0
        %3861 = vmatpush1.msra.mxu0 %v3554
        %3862 = vmatprep.subr.mxu0 0.0
        %3863 = vmatpush1.msra.mxu0 %v3555
        %3864 = vmatprep.subr.mxu0 0.0
        %3865 = vmatpush1.msra.mxu0 %v3556
        %3866 = vmatprep.subr.mxu0 0.0
        %3867 = vmatpush1.msra.mxu0 %v3557
        %3868 = vmatprep.subr.mxu0 0.0
        %3869 = vmatpush1.msra.mxu0 %v3558
        %3870 = vmatprep.subr.mxu0 0.0
        %3871 = vmatpush1.msra.mxu0 %v3559
        %3872 = vmatprep.subr.mxu0 0.0
        %3873 = vmatpush1.msra.mxu0 %v3560
        %3874 = vmatprep.subr.mxu0 0.0
        %3875 = vmatpush1.msra.mxu0 %v3561
        %3876 = vmatprep.subr.mxu0 0.0
        %3877 = vmatpush1.msra.mxu0 %v3562
        %3878 = vmatprep.subr.mxu0 0.0
        %3879 = vmatpush1.msra.mxu0 %v3563
        %3880 = vmatprep.subr.mxu0 0.0
        %3881 = vmatpush1.msra.mxu0 %v3564
        %3882 = vmatprep.subr.mxu0 0.0
        %3883 = vmatpush1.msra.mxu0 %v3565
        %3884 = vmatprep.subr.mxu0 0.0
        %3885 = vmatpush1.msra.mxu0 %v3566
        %3886 = vmatprep.subr.mxu0 0.0
        %3887 = vmatpush1.msra.mxu0 %v3567
        %3888 = vmatprep.subr.mxu0 0.0
        %3889 = vmatpush1.msra.mxu0 %v3568
        %3890 = vmatprep.subr.mxu0 0.0
        %3891 = vmatpush1.msra.mxu0 %v3569
        %3892 = vmatprep.subr.mxu0 0.0
        %3893 = vmatpush1.msra.mxu0 %v3570
        %3894 = vmatprep.subr.mxu0 0.0
        %3895 = vmatpush1.msra.mxu0 %v3571
        %3896 = vmatprep.subr.mxu0 0.0
        %3897 = vmatpush1.msra.mxu0 %v3572
        %3898 = vmatprep.subr.mxu0 0.0
        %3899 = vmatpush1.msra.mxu0 %v3573
        %3900 = vmatprep.subr.mxu0 0.0
        %3901 = vmatpush1.msra.mxu0 %v3574
        %3902 = vmatprep.subr.mxu0 0.0
        %3903 = vmatpush1.msra.mxu0 %v3575
        %3904 = vmatprep.subr.mxu0 0.0
        %3905 = vmatpush1.msra.mxu0 %v3576
        %3906 = vmatprep.subr.mxu0 0.0
        %3907 = vmatpush1.msra.mxu0 %v3577
        %3908 = vmatprep.subr.mxu0 0.0
        %3909 = vmatpush1.msra.mxu0 %v3578
        %3910 = vmatprep.subr.mxu0 0.0
        %3911 = vmatpush1.msra.mxu0 %v3579
        %3912 = vmatprep.subr.mxu0 0.0
        %3913 = vmatpush1.msra.mxu0 %v3580
        %3914 = vmatprep.subr.mxu0 0.0
        %3915 = vmatpush1.msra.mxu0 %v3581
        %3916 = vmatprep.mubr.f32.mxu0 %v258
        %3917 = vmatmul.mubr.f32.gmra.mrb[0].mxu0 %v257
        %v3918 = vpop.f32.mrb[0].mxu0
        %v3919 = vadd.f32 %v3829, %v3918
        %v3920 = vpop.f32.mrb[0].mxu0
        %3921 = vmatprep.mubr.f32.mxu0 %v262
        %3922 = vmatmul.mubr.f32.gmra.mrb[0].mxu0 %v261
        %v3923 = vpop.f32.mrb[0].mxu0
        %v3924 = vadd.f32 %v3834, %v3923
        %v3925 = vpop.f32.mrb[0].mxu0
        %3926 = vmatprep.mubr.f32.mxu0 %v266
        %3927 = vmatmul.mubr.f32.gmra.mrb[0].mxu0 %v265
        %v3928 = vpop.f32.mrb[0].mxu0
        %v3929 = vadd.f32 %v3839, %v3928
        %v3930 = vpop.f32.mrb[0].mxu0
        %3931 = vmatprep.mubr.f32.mxu0 %v270
        %3932 = vmatmul.mubr.f32.gmra.mrb[0].mxu0 %v269
        %v3933 = vpop.f32.mrb[0].mxu0
        %v3934 = vadd.f32 %v3844, %v3933
        %v3935 = vpop.f32.mrb[0].mxu0
        %3936 = vmatprep.mubr.f32.mxu0 %v274
        %3937 = vmatmul.mubr.f32.gmra.mrb[0].mxu0 %v273
        %v3938 = vpop.f32.mrb[0].mxu0
        %v3939 = vadd.f32 %v3849, %v3938
        %v3940 = vpop.f32.mrb[0].mxu0
        %3941 = vdwg.mxu0
        %v3942 = vmul.f32 %v3739, %v3919
        %v3943 = vmul.f32 %v3744, %v3924
        %v3944 = vmul.f32 %v3749, %v3929
        %v3945 = vmul.f32 %v3754, %v3934
        %v3946 = vmul.f32 %v3759, %v3939
        %v3947 = vadd.f32 %v3942, %v3943
        %v3948 = vadd.f32 %v3947, %v3944
        %v3949 = vadd.f32 %v3948, %v3945
        %v3950 = vadd.f32 %v3949, %v3946
        %v3951 = vrot.slane %v3950, 4
        %v3952 = vadd.f32 %v3950, %v3951
        %v3953 = vrot.slane %v3952, 2
        %v3954 = vadd.f32 %v3952, %v3953
        %v3955 = vrot.slane %v3954, 1
        %v3956 = vadd.f32 %v3954, %v3955
        %v3957 = vmax.f32 %v3956, 0.0
        %v3958 = vmin.f32 %v3957, 5.0
        %3959 = vst [vmem:[%s239 + $0x4] sm:$0x1] %v3958
        %p3960 = scmp.lt.s32.totalorder %s17, 1
        %s3961 = scalar_select %p3960, %s17, 1
        %s3962 = smul.addr %s3961, 8
        %s3963 = scalar_lea.vmem %s4, %s3962
        // Predicated region
        $region45: #{tpu_custom_call.1} parent=35 // pred_check
          %p3964 = pneg %p129
        $region46: #{tpu_custom_call.1} parent=35 // pred_check_branch
          %3966 = sbr.rel (%p3964) target = $region48
        $region47: #{tpu_custom_call.1} parent=35 // pred_region
          _
        $region48: #{tpu_custom_call.1} parent=35 // pred_fallthru
          _
      $region36: #{tpu_custom_call.1} parent=5 // pred_fallthru
        _
      %p3967 = scmp.le.s32.totalorder 2, %s12
      // Predicated region
      $region49: #{tpu_custom_call.1} parent=5 // pred_check
        %p3968 = pneg %p3967
      $region50: #{tpu_custom_call.1} parent=5 // pred_check_branch
        %3970 = sbr.rel (%p3968) target = $region52
      $region51: #{tpu_custom_call.1} parent=5 // pred_region
        %s3971 = ssub.s32 %s12, 2
        // Predicated region
        $region53: #{tpu_custom_call.1} parent=51 // pred_check
          %p3972 = pneg %p135
        $region54: #{tpu_custom_call.1} parent=51 // pred_check_branch
          %3974 = sbr.rel (%p3972) target = $region56
        $region55: #{tpu_custom_call.1} parent=51 // pred_region
          %p3975 = scmp.lt.s32.totalorder %s18, 1
          %s3976 = scalar_select %p3975, %s18, 1
          %s3977 = smul.addr %s3976, 8
          %s3978 = scalar_lea.vmem %s4, %s3977
        $region56: #{tpu_custom_call.1} parent=51 // pred_fallthru
          _
      $region52: #{tpu_custom_call.1} parent=5 // pred_fallthru
        _
    $region6: #{tpu_custom_call.1} parent=1 // loop_footer
      %s16 = sadd.s32 1, %s12
    $region7: #{tpu_custom_call.1} parent=1 // loop_footer_branch
      %11 = sbr.rel target = $region3
    $region8: #{tpu_custom_call.1} parent=1 // loop_exit
      _
    %3979 = vsyncpa [#allocation3], 1
    %s3980 = scalar_lea.sflag [#allocation3], 1
    %3981 = vsyncpa %s3980, 1
    %3982 = vsyncpa [#allocation5], 1

</llo_original>
